<compile_context>
chip_gen: v5e
topology: v5e:2x2
jax: 0.10.0
libtpu: 0.0.40
codegen_flags: <defaults>
</compile_context>

<pallas_src>
import functools
import math

import jax
import jax.numpy as jnp
from jax import lax
from jax.experimental import pallas as pl
from jax.experimental.pallas import tpu as pltpu


# ---------------------------------------------------------------------------
# Tiling / VMEM budgeting helpers
# ---------------------------------------------------------------------------
def _round_up(a, m):
    return ((a + m - 1) // m) * m


def _physical_vmem_bytes():
    try:
        return int(pltpu.get_tpu_info().vmem_capacity_bytes)
    except Exception:
        return 64 << 20  # conservative default (v7x per-TensorCore VMEM)


def _vmem_footprint(TB, TC, T_pad, D, H, L, C):
    """Approximate per-tile VMEM bytes (lane/sublane padded, 2x buffering)."""
    lp = lambda n: _round_up(n, 128)   # lane padding
    sp = lambda n: _round_up(n, 8)     # sublane padding
    by = 0
    by += 2 * sp(T_pad * TB) * lp(D) * 2                      # x block (bf16)
    by += 2 * sp(TB) * lp(1) * 4                              # mask sums
    by += 2 * sp(D) * lp(4 * H) * 2                           # W_ih layer 0
    by += 2 * max(L - 1, 1) * sp(H) * lp(4 * H) * 2           # W_ih layers 1..
    by += 2 * L * sp(H) * lp(4 * H) * 2                       # W_hh
    by += 2 * L * sp(1) * lp(4 * H) * 4                       # biases
    by += 2 * sp(H) * lp(C) * 4 + 2 * sp(1) * lp(C) * 4       # linear
    by += 2 * sp(TB) * lp(C) * 4                              # out block
    by += sp(T_pad * TB) * lp(H) * 2                          # seq scratch
    by += sp(TC * TB) * lp(4 * H) * 4                         # gates scratch
    return by


def _choose_tiling(B, T, D, H, L, C, batch_tile, time_chunk, vmem_budget):
    """Pick (batch_tile TB, time_chunk TC, padded T) under the VMEM budget."""
    B8 = _round_up(max(B, 1), 8)
    if batch_tile is not None:
        TB = _round_up(batch_tile, 8)
    else:
        cap = min(256, B8)          # 256 fills the v6e/v7x MXU M dimension;
        nb = -(-B8 // cap)          # v5e's 128-wide MXU just takes 2 passes.
        if nb == 1 and B8 >= 16:
            nb = 2                  # keep >=2 grid tiles so the ("parallel",)
                                    # axis can use both v7x TensorCores.
        TB = _round_up(-(-B8 // nb), 8)

    def pick_tc(tb):
        if time_chunk is not None:
            tc = time_chunk
        else:
            # Chunk so the f32 gates scratch (TC*TB*4H*4 bytes) stays ~4 MiB.
            tc = max(8, (4 << 20) // max(1, tb * 16 * H))
        tc = min(T, tc)
        if tc >= 8:
            tc = (tc // 8) * 8      # keep the inner unroll factor exact
        return max(1, tc)

    while True:
        TC = pick_tc(TB)
        T_pad = _round_up(T, TC)
        fp = _vmem_footprint(TB, TC, T_pad, D, H, L, C)
        if fp <= vmem_budget or TB <= 8 or batch_tile is not None:
            return TB, TC, T_pad, fp
        TB = max(8, _round_up(TB // 2, 8))


# ---------------------------------------------------------------------------
# Pallas kernel: whole forward pass (LSTM recurrence + masked mean + linear)
# ---------------------------------------------------------------------------
def _skeleton_kernel(x_ref, msum_ref, w_ih0_ref, w_ih_rest_ref, w_hh_ref,
                     b_ref, wlin_ref, blin_ref, out_ref, seq_ref, gates_ref,
                     *, TB, H, L, TC, n_chunks, unroll):
    """Per batch tile (TB samples; rows time-major within the tile):
       x_ref:         (T_pad*TB, D)  bf16   row r = t*TB + tb
       msum_ref:      (TB, 1)        f32    per-sample mask.sum(dim=1)
       w_ih0_ref:     (D, 4H)        bf16
       w_ih_rest_ref: (max(L-1,1), H, 4H) bf16
       w_hh_ref:      (L, H, 4H)     bf16
       b_ref:         (L, 1, 4H)     f32    (b_ih + b_hh)
       wlin_ref:      (H, C) f32     blin_ref: (1, C) f32
       out_ref:       (TB, C) f32
       seq_ref:       (T_pad*TB, H)  bf16 scratch (layer l -> l+1 activations)
       gates_ref:     (TC*TB, 4H)    f32 scratch (chunked input projection)
    """

    def split_gates(gates):
        if H % 128 == 0:
            # Tile-aligned slices: cheap, per-gate transcendentals.
            i = jax.nn.sigmoid(gates[:, 0 * H:1 * H])
            f = jax.nn.sigmoid(gates[:, 1 * H:2 * H])
            g = jnp.tanh(gates[:, 2 * H:3 * H])
            o = jax.nn.sigmoid(gates[:, 3 * H:4 * H])
        else:
            # One full-width sigmoid + tanh on the g-quarter only:
            # 5H EUP elems/row instead of 8H (tanh+sigmoid both full width),
            # so EUP does not become the binding unit at large TB.
            sig = jax.nn.sigmoid(gates)
            g = jnp.tanh(gates[:, 2 * H:3 * H])
            i = sig[:, 0 * H:1 * H]
            f = sig[:, 1 * H:2 * H]
            o = sig[:, 3 * H:4 * H]
        return i, f, g, o

    lengths = msum_ref[...]                                   # (TB, 1) f32

    acc_final = None
    for l in range(L):
        last = (l == L - 1)
        w_hh = w_hh_ref[l]                                    # (H, 4H) bf16
        bias = b_ref[l]                                       # (1, 4H) f32
        w_ih = w_ih0_ref[...] if l == 0 else w_ih_rest_ref[l - 1]

        def chunk_body(kc, carry):
            # ---- Hoisted input projection for TC timesteps: one MXU matmul
            # into a bounded f32 scratch (bias folded in). --------------------
            row0 = pl.multiple_of(kc * (TC * TB), TB)
            if l == 0:
                xin = x_ref[pl.ds(row0, TC * TB), :]          # (TC*TB, D)
            else:
                xin = seq_ref[pl.ds(row0, TC * TB), :]        # (TC*TB, H)
            gates_ref[...] = (
                jnp.dot(xin, w_ih, preferred_element_type=jnp.float32) + bias)

            # ---- Serial recurrence: only h @ W_hh on the critical path. -----
            # TODO(synk): hold W_hh in the MXU across the loop via
            # pltpu.matmul_push_rhs / matmul_acc_lhs / matmul_pop, and
            # interleave two independent batch half-tiles to hide the
            # MXU-pop / EUP latency of the serial h->h chain.
            def step(ti, carry):
                row = pl.multiple_of(ti * TB, TB)
                h, c = carry[0], carry[1]
                gates = gates_ref[pl.ds(row, TB), :] + jnp.dot(
                    h.astype(jnp.bfloat16), w_hh,
                    preferred_element_type=jnp.float32)       # (TB, 4H) f32
                i, f, g, o = split_gates(gates)
                c_new = f * c + i * g
                h_new = o * jnp.tanh(c_new)
                if last:
                    # Fused masked temporal mean: mask rebuilt in-kernel as
                    # (t < mask_sum); off the h->h critical chain.
                    t_f = (kc * TC + ti).astype(jnp.float32)
                    m = (lengths > t_f).astype(jnp.float32)   # (TB, 1)
                    return (h_new, c_new, carry[2] + m * h_new)
                grow = pl.multiple_of(kc * (TC * TB) + ti * TB, TB)
                seq_ref[pl.ds(grow, TB), :] = h_new.astype(seq_ref.dtype)
                return (h_new, c_new)

            return lax.fori_loop(0, TC, step, carry, unroll=unroll)

        zeros = jnp.zeros((TB, H), jnp.float32)
        init = (zeros, zeros, zeros) if last else (zeros, zeros)
        carry = lax.fori_loop(0, n_chunks, chunk_body, init)
        if last:
            acc_final = carry[2]

    # Dropout layer: module default dropout=0 -> identity at inference.
    # TODO(synk): stochastic dropout (p>0, training mode) not implemented.

    # ---- Masked mean finalize + final linear. ------------------------------
    denom = jnp.where(lengths > 0.0, lengths, 1.0)            # guard padded rows
    avg = acc_final / denom                                   # (TB, H) f32
    out = (jnp.dot(avg, wlin_ref[...], preferred_element_type=jnp.float32)
           + blin_ref[...])                                   # (TB, C)
    # NOTE: C=5 gives lane-sparse output stores; pad C to 128 if num_class or
    # call frequency grows.
    out_ref[...] = out.astype(out_ref.dtype)


# ---------------------------------------------------------------------------
# Wrapper
# ---------------------------------------------------------------------------
def skeleton_action_avg_h(x, mask, params, *, hidden_size, num_layers,
                          batch_tile=None, time_chunk=None):
    """x: (B, T, D), mask: (B, T, 1) -> (B, num_class) float32.

    The kernel rebuilds the temporal mask from per-sample mask sums, i.e. it
    assumes the usual prefix / valid-length padding mask.
    TODO(synk): fully arbitrary per-step masks would need a dense (T, TB)
    mask block instead of the per-sample sums.
    """
    B, T, D = x.shape
    H = hidden_size
    L = num_layers
    C = params["w_lin"].shape[0]

    # ---- Generation-aware tiling / VMEM budgeting. -------------------------
    phys_vmem = _physical_vmem_bytes()
    budget = max(16 << 20, int(phys_vmem * 0.4))
    TB, TC, T_pad, footprint = _choose_tiling(
        B, T, D, H, L, C, batch_tile, time_chunk, budget)
    B_pad = _round_up(B, TB)
    nb = B_pad // TB
    n_chunks = T_pad // TC
    vmem_limit = int(min(phys_vmem * 0.85, max(32 << 20, 2 * footprint)))

    # ---- Data prep: batch padded to TB, time padded to TC multiple. --------
    pad_b = B_pad - B
    pad_t = T_pad - T
    x_p = jnp.pad(x.astype(jnp.float32), ((0, pad_b), (0, pad_t), (0, 0)))
    # Batch-tile-major, time-major-within-tile 2-D layout:
    # global row = b*T_pad*TB + t*TB + tb  ->  sample b*TB+tb at time t.
    x_k = (x_p.reshape(nb, TB, T_pad, D).transpose(0, 2, 1, 3)
               .reshape(nb * T_pad * TB, D).astype(jnp.bfloat16))
    # Per-sample mask sums (valid lengths); padded rows get 0.
    msum = jnp.pad(mask.astype(jnp.float32).sum(axis=1), ((0, pad_b), (0, 0)))

    # Pre-transposed weights for x @ W^T style matmuls; MXU operands in bf16,
    # carries / gate sums / accumulators stay f32.
    w_ih0 = params["w_ih"][0].T.astype(jnp.bfloat16)            # (D, 4H)
    if L > 1:
        w_ih_rest = jnp.stack([params["w_ih"][l].T
                               for l in range(1, L)]).astype(jnp.bfloat16)
    else:
        w_ih_rest = jnp.zeros((1, H, 4 * H), jnp.bfloat16)      # dummy, unused
    w_hh = jnp.stack([params["w_hh"][l].T
                      for l in range(L)]).astype(jnp.bfloat16)  # (L, H, 4H)
    b = jnp.stack([(params["b_ih"][l] + params["b_hh"][l])[None, :]
                   for l in range(L)]).astype(jnp.float32)      # (L, 1, 4H)
    w_lin = params["w_lin"].T.astype(jnp.float32)               # (H, C)
    b_lin = params["b_lin"][None, :].astype(jnp.float32)        # (1, C)

    unroll = True if TC <= 16 else 8
    kernel = functools.partial(_skeleton_kernel, TB=TB, H=H, L=L, TC=TC,
                               n_chunks=n_chunks, unroll=unroll)

    grid_spec = pltpu.PrefetchScalarGridSpec(
        num_scalar_prefetch=0,
        grid=(nb,),
        in_specs=[
            pl.BlockSpec((T_pad * TB, D), lambda bi: (bi, 0)),      # x
            pl.BlockSpec((TB, 1), lambda bi: (bi, 0)),              # mask sums
            # Loop-invariant weights: constant index maps -> fetched once.
            # TODO(synk): pipeline_mode=pl.Buffered(1) would also single-buffer
            # their VMEM allocation (extra headroom for TB at H>=256).
            pl.BlockSpec((D, 4 * H), lambda bi: (0, 0)),            # W_ih l=0
            pl.BlockSpec((max(L - 1, 1), H, 4 * H),
                         lambda bi: (0, 0, 0)),                     # W_ih rest
            pl.BlockSpec((L, H, 4 * H), lambda bi: (0, 0, 0)),      # W_hh
            pl.BlockSpec((L, 1, 4 * H), lambda bi: (0, 0, 0)),      # biases
            pl.BlockSpec((H, C), lambda bi: (0, 0)),                # W_lin
            pl.BlockSpec((1, C), lambda bi: (0, 0)),                # b_lin
        ],
        out_specs=pl.BlockSpec((TB, C), lambda bi: (bi, 0)),
        scratch_shapes=[
            pltpu.VMEM((T_pad * TB, H) if L > 1 else (TB, H),
                       jnp.bfloat16),                   # layer-to-layer hidden
            pltpu.VMEM((TC * TB, 4 * H), jnp.float32),  # chunked input gates
        ],
    )

    out = pl.pallas_call(
        kernel,
        out_shape=jax.ShapeDtypeStruct((B_pad, C), jnp.float32),
        grid_spec=grid_spec,
        compiler_params=pltpu.CompilerParams(
            dimension_semantics=("parallel",),
            vmem_limit_bytes=vmem_limit),
    )(x_k, msum, w_ih0, w_ih_rest, w_hh, b, w_lin, b_lin)
    return out[:B]


# ---------------------------------------------------------------------------
# Deterministic parameter init (PyTorch-style uniform(-1/sqrt(H), 1/sqrt(H)))
# ---------------------------------------------------------------------------
def init_params(key, input_size, hidden_size, num_class, num_layers):
    H = hidden_size
    k = 1.0 / math.sqrt(H)
    params = {"w_ih": [], "w_hh": [], "b_ih": [], "b_hh": []}
    for l in range(num_layers):
        din = input_size if l == 0 else H
        key, k1, k2, k3, k4 = jax.random.split(key, 5)
        params["w_ih"].append(jax.random.uniform(k1, (4 * H, din), jnp.float32, -k, k))
        params["w_hh"].append(jax.random.uniform(k2, (4 * H, H), jnp.float32, -k, k))
        params["b_ih"].append(jax.random.uniform(k3, (4 * H,), jnp.float32, -k, k))
        params["b_hh"].append(jax.random.uniform(k4, (4 * H,), jnp.float32, -k, k))
    key, k5 = jax.random.split(key)
    params["w_lin"] = jax.random.uniform(k5, (num_class, H), jnp.float32, -0.1, 0.1)
    params["b_lin"] = jnp.zeros((num_class,), jnp.float32)
    return params


# ---------------------------------------------------------------------------
# Pure-JAX f32 reference for correctness check
# ---------------------------------------------------------------------------
def reference(x, mask, params, *, hidden_size, num_layers):
    B, T, D = x.shape
    H = hidden_size
    seq = x
    for l in range(num_layers):
        w_ih_T = params["w_ih"][l].T
        w_hh_T = params["w_hh"][l].T
        b = params["b_ih"][l] + params["b_hh"][l]
        h = jnp.zeros((B, H), jnp.float32)
        c = jnp.zeros((B, H), jnp.float32)
        outs = []
        for t in range(T):
            gates = seq[:, t, :] @ w_ih_T + h @ w_hh_T + b
            i = jax.nn.sigmoid(gates[:, 0 * H:1 * H])
            f = jax.nn.sigmoid(gates[:, 1 * H:2 * H])
            g = jnp.tanh(gates[:, 2 * H:3 * H])
            o = jax.nn.sigmoid(gates[:, 3 * H:4 * H])
            c = f * c + i * g
            h = o * jnp.tanh(c)
            outs.append(h)
        seq = jnp.stack(outs, axis=1)
    avg = (seq * mask).sum(axis=1) / mask.sum(axis=1)
    return avg @ params["w_lin"].T + params["b_lin"]


if __name__ == "__main__":
    B, T, D, H, C, L = 2, 8, 4, 32, 5, 3

    key = jax.random.PRNGKey(0)
    kx, kp = jax.random.split(key)
    x = jax.random.normal(kx, (B, T, D), jnp.float32)
    # Valid-length style mask: sample 0 keeps all 8 steps, sample 1 keeps 5.
    lengths = jnp.array([8, 5])
    mask = (jnp.arange(T)[None, :] < lengths[:, None]).astype(jnp.float32)[..., None]

    params = init_params(kp, D, H, C, L)

    out = skeleton_action_avg_h(x, mask, params, hidden_size=H, num_layers=L)
    out = jax.block_until_ready(out)

    ref = reference(x, mask, params, hidden_size=H, num_layers=L)
    assert out.shape == (B, C)
    # bf16 MXU operands (f32 carries/accumulators) -> slightly loosened tol.
    assert jnp.allclose(out, ref, rtol=2e-2, atol=2e-2), (out, ref)

    print("KERNEL_OK")
</pallas_src>

<mosaic_0001>
module attributes {stable_mosaic.version = 11 : i64} {
  func.func @_skeleton_kernel(%arg0: i32, %arg1: memref<64x4xbf16, #tpu.memory_space<vmem>>, %arg2: memref<8x1xf32, #tpu.memory_space<vmem>>, %arg3: memref<4x128xbf16, #tpu.memory_space<vmem>>, %arg4: memref<2x32x128xbf16, #tpu.memory_space<vmem>>, %arg5: memref<3x32x128xbf16, #tpu.memory_space<vmem>>, %arg6: memref<3x1x128xf32, #tpu.memory_space<vmem>>, %arg7: memref<32x5xf32, #tpu.memory_space<vmem>>, %arg8: memref<1x5xf32, #tpu.memory_space<vmem>>, %arg9: memref<8x5xf32, #tpu.memory_space<vmem>>, %arg10: memref<64x32xbf16, #tpu.memory_space<vmem>>, %arg11: memref<64x128xf32, #tpu.memory_space<vmem>>) attributes {dimension_semantics = [#tpu.dimension_semantics<parallel>], iteration_bounds = array<i64: 1>, scalar_prefetch = 0 : i64, scratch_operands = 2 : i64, tpu.core_type = #tpu.core_type<tc>, window_params = [{transform_indices = @transform_0, window_bounds = array<i64: 64, 4>}, {transform_indices = @transform_1, window_bounds = array<i64: 8, 1>}, {pipeline_mode = #tpu.pipeline_mode<synchronous>, transform_indices = @transform_2, window_bounds = array<i64: 4, 128>}, {pipeline_mode = #tpu.pipeline_mode<synchronous>, transform_indices = @transform_3, window_bounds = array<i64: 2, 32, 128>}, {pipeline_mode = #tpu.pipeline_mode<synchronous>, transform_indices = @transform_4, window_bounds = array<i64: 3, 32, 128>}, {pipeline_mode = #tpu.pipeline_mode<synchronous>, transform_indices = @transform_5, window_bounds = array<i64: 3, 1, 128>}, {pipeline_mode = #tpu.pipeline_mode<synchronous>, transform_indices = @transform_6, window_bounds = array<i64: 32, 5>}, {pipeline_mode = #tpu.pipeline_mode<synchronous>, transform_indices = @transform_7, window_bounds = array<i64: 1, 5>}, {transform_indices = @transform_8, window_bounds = array<i64: 8, 5>}]} {
    %c0 = arith.constant 0 : index
    %c0_0 = arith.constant 0 : index
    %0 = vector.load %arg2[%c0, %c0_0] : memref<8x1xf32, #tpu.memory_space<vmem>>, vector<8x1xf32>
    %c0_1 = arith.constant 0 : index
    %c0_2 = arith.constant 0 : index
    %c0_3 = arith.constant 0 : index
    %1 = vector.load %arg5[%c0_1, %c0_2, %c0_3] : memref<3x32x128xbf16, #tpu.memory_space<vmem>>, vector<1x32x128xbf16>
    %2 = vector.shape_cast %1 : vector<1x32x128xbf16> to vector<32x128xbf16>
    %c0_4 = arith.constant 0 : index
    %c0_5 = arith.constant 0 : index
    %c0_6 = arith.constant 0 : index
    %3 = vector.load %arg6[%c0_4, %c0_5, %c0_6] : memref<3x1x128xf32, #tpu.memory_space<vmem>>, vector<1x1x128xf32>
    %4 = vector.shape_cast %3 : vector<1x1x128xf32> to vector<1x128xf32>
    %c0_7 = arith.constant 0 : index
    %c0_8 = arith.constant 0 : index
    %5 = vector.load %arg3[%c0_7, %c0_8] : memref<4x128xbf16, #tpu.memory_space<vmem>>, vector<4x128xbf16>
    %cst = arith.constant 0.000000e+00 : f32
    %6 = vector.broadcast %cst : f32 to vector<8x32xf32>
    %c0_i32 = arith.constant 0 : i32
    %c64_i32 = arith.constant 64 : i32
    %7 = arith.muli %c0_i32, %c64_i32 : i32
    %8 = tpu.assume_multiple %7, 8 : i32
    %9 = arith.index_cast %8 : i32 to index
    %c0_9 = arith.constant 0 : index
    %10 = vector.load %arg1[%9, %c0_9] : memref<64x4xbf16, #tpu.memory_space<vmem>>, vector<64x4xbf16>
    %cst_10 = arith.constant dense<0.000000e+00> : vector<64x128xf32>
    %11 = tpu.matmul %10, %5, %cst_10 {dimension_numbers = #tpu.dot_dimension_numbers<[1], [0], [0], [1], [0, 0, 1, 1], [], []>} : vector<64x4xbf16>, vector<4x128xbf16>, vector<64x128xf32> -> vector<64x128xf32>
    %12 = vector.broadcast %4 : vector<1x128xf32> to vector<64x128xf32>
    %13 = arith.addf %11, %12 : vector<64x128xf32>
    %c0_11 = arith.constant 0 : index
    %c0_12 = arith.constant 0 : index
    %14 = vector.load %arg11[%c0_11, %c0_12] : memref<64x128xf32, #tpu.memory_space<vmem>>, vector<64x128xf32>
    tpu.vector_store %arg11[%c0_11, %c0_12], %13 {strides = array<i32>} : memref<64x128xf32, #tpu.memory_space<vmem>>, vector<64x128xf32>,
    %c0_i32_13 = arith.constant 0 : i32
    %c8_i32 = arith.constant 8 : i32
    %15 = arith.muli %c0_i32_13, %c8_i32 : i32
    %16 = tpu.assume_multiple %15, 8 : i32
    %17 = arith.index_cast %16 : i32 to index
    %c0_14 = arith.constant 0 : index
    %18 = vector.load %arg11[%17, %c0_14] : memref<64x128xf32, #tpu.memory_space<vmem>>, vector<8x128xf32>
    %19 = arith.truncf %6 : vector<8x32xf32> to vector<8x32xbf16>
    %cst_15 = arith.constant dense<0.000000e+00> : vector<8x128xf32>
    %20 = tpu.matmul %19, %2, %cst_15 {dimension_numbers = #tpu.dot_dimension_numbers<[1], [0], [0], [1], [0, 0, 1, 1], [], []>} : vector<8x32xbf16>, vector<32x128xbf16>, vector<8x128xf32> -> vector<8x128xf32>
    %21 = arith.addf %18, %20 : vector<8x128xf32>
    %22 = arith.negf %21 : vector<8x128xf32>
    %23 = math.exp %22 : vector<8x128xf32>
    %cst_16 = arith.constant 1.000000e+00 : f32
    %24 = vector.broadcast %cst_16 : f32 to vector<8x128xf32>
    %25 = arith.addf %24, %23 : vector<8x128xf32>
    %26 = arith.divf %24, %25 : vector<8x128xf32>
    %27 = vector.extract_strided_slice %21 {offsets = [0, 64], sizes = [8, 32], strides = [1, 1]} : vector<8x128xf32> to vector<8x32xf32>
    %28 = math.tanh %27 : vector<8x32xf32>
    %29 = vector.extract_strided_slice %26 {offsets = [0, 0], sizes = [8, 32], strides = [1, 1]} : vector<8x128xf32> to vector<8x32xf32>
    %30 = vector.extract_strided_slice %26 {offsets = [0, 32], sizes = [8, 32], strides = [1, 1]} : vector<8x128xf32> to vector<8x32xf32>
    %31 = vector.extract_strided_slice %26 {offsets = [0, 96], sizes = [8, 32], strides = [1, 1]} : vector<8x128xf32> to vector<8x32xf32>
    %32 = arith.mulf %30, %6 : vector<8x32xf32>
    %33 = arith.mulf %29, %28 : vector<8x32xf32>
    %34 = arith.addf %32, %33 : vector<8x32xf32>
    %35 = math.tanh %34 : vector<8x32xf32>
    %36 = arith.mulf %31, %35 : vector<8x32xf32>
    %c64_i32_17 = arith.constant 64 : i32
    %37 = arith.muli %c0_i32, %c64_i32_17 : i32
    %c8_i32_18 = arith.constant 8 : i32
    %38 = arith.muli %c0_i32_13, %c8_i32_18 : i32
    %39 = arith.addi %37, %38 : i32
    %40 = tpu.assume_multiple %39, 8 : i32
    %41 = arith.truncf %36 : vector<8x32xf32> to vector<8x32xbf16>
    %42 = arith.index_cast %40 : i32 to index
    %c0_19 = arith.constant 0 : index
    %43 = vector.load %arg10[%42, %c0_19] : memref<64x32xbf16, #tpu.memory_space<vmem>>, vector<8x32xbf16>
    tpu.vector_store %arg10[%42, %c0_19], %41 {strides = array<i32>} : memref<64x32xbf16, #tpu.memory_space<vmem>>, vector<8x32xbf16>,
    %c1_i32 = arith.constant 1 : i32
    %c8_i32_20 = arith.constant 8 : i32
    %44 = arith.muli %c1_i32, %c8_i32_20 : i32
    %45 = tpu.assume_multiple %44, 8 : i32
    %46 = arith.index_cast %45 : i32 to index
    %c0_21 = arith.constant 0 : index
    %47 = vector.load %arg11[%46, %c0_21] : memref<64x128xf32, #tpu.memory_space<vmem>>, vector<8x128xf32>
    %48 = arith.truncf %36 : vector<8x32xf32> to vector<8x32xbf16>
    %cst_22 = arith.constant dense<0.000000e+00> : vector<8x128xf32>
    %49 = tpu.matmul %48, %2, %cst_22 {dimension_numbers = #tpu.dot_dimension_numbers<[1], [0], [0], [1], [0, 0, 1, 1], [], []>} : vector<8x32xbf16>, vector<32x128xbf16>, vector<8x128xf32> -> vector<8x128xf32>
    %50 = arith.addf %47, %49 : vector<8x128xf32>
    %51 = arith.negf %50 : vector<8x128xf32>
    %52 = math.exp %51 : vector<8x128xf32>
    %cst_23 = arith.constant 1.000000e+00 : f32
    %53 = vector.broadcast %cst_23 : f32 to vector<8x128xf32>
    %54 = arith.addf %53, %52 : vector<8x128xf32>
    %55 = arith.divf %53, %54 : vector<8x128xf32>
    %56 = vector.extract_strided_slice %50 {offsets = [0, 64], sizes = [8, 32], strides = [1, 1]} : vector<8x128xf32> to vector<8x32xf32>
    %57 = math.tanh %56 : vector<8x32xf32>
    %58 = vector.extract_strided_slice %55 {offsets = [0, 0], sizes = [8, 32], strides = [1, 1]} : vector<8x128xf32> to vector<8x32xf32>
    %59 = vector.extract_strided_slice %55 {offsets = [0, 32], sizes = [8, 32], strides = [1, 1]} : vector<8x128xf32> to vector<8x32xf32>
    %60 = vector.extract_strided_slice %55 {offsets = [0, 96], sizes = [8, 32], strides = [1, 1]} : vector<8x128xf32> to vector<8x32xf32>
    %61 = arith.mulf %59, %34 : vector<8x32xf32>
    %62 = arith.mulf %58, %57 : vector<8x32xf32>
    %63 = arith.addf %61, %62 : vector<8x32xf32>
    %64 = math.tanh %63 : vector<8x32xf32>
    %65 = arith.mulf %60, %64 : vector<8x32xf32>
    %c64_i32_24 = arith.constant 64 : i32
    %66 = arith.muli %c0_i32, %c64_i32_24 : i32
    %c8_i32_25 = arith.constant 8 : i32
    %67 = arith.muli %c1_i32, %c8_i32_25 : i32
    %68 = arith.addi %66, %67 : i32
    %69 = tpu.assume_multiple %68, 8 : i32
    %70 = arith.truncf %65 : vector<8x32xf32> to vector<8x32xbf16>
    %71 = arith.index_cast %69 : i32 to index
    %c0_26 = arith.constant 0 : index
    %72 = vector.load %arg10[%71, %c0_26] : memref<64x32xbf16, #tpu.memory_space<vmem>>, vector<8x32xbf16>
    tpu.vector_store %arg10[%71, %c0_26], %70 {strides = array<i32>} : memref<64x32xbf16, #tpu.memory_space<vmem>>, vector<8x32xbf16>,
    %c2_i32 = arith.constant 2 : i32
    %c8_i32_27 = arith.constant 8 : i32
    %73 = arith.muli %c2_i32, %c8_i32_27 : i32
    %74 = tpu.assume_multiple %73, 8 : i32
    %75 = arith.index_cast %74 : i32 to index
    %c0_28 = arith.constant 0 : index
    %76 = vector.load %arg11[%75, %c0_28] : memref<64x128xf32, #tpu.memory_space<vmem>>, vector<8x128xf32>
    %77 = arith.truncf %65 : vector<8x32xf32> to vector<8x32xbf16>
    %cst_29 = arith.constant dense<0.000000e+00> : vector<8x128xf32>
    %78 = tpu.matmul %77, %2, %cst_29 {dimension_numbers = #tpu.dot_dimension_numbers<[1], [0], [0], [1], [0, 0, 1, 1], [], []>} : vector<8x32xbf16>, vector<32x128xbf16>, vector<8x128xf32> -> vector<8x128xf32>
    %79 = arith.addf %76, %78 : vector<8x128xf32>
    %80 = arith.negf %79 : vector<8x128xf32>
    %81 = math.exp %80 : vector<8x128xf32>
    %cst_30 = arith.constant 1.000000e+00 : f32
    %82 = vector.broadcast %cst_30 : f32 to vector<8x128xf32>
    %83 = arith.addf %82, %81 : vector<8x128xf32>
    %84 = arith.divf %82, %83 : vector<8x128xf32>
    %85 = vector.extract_strided_slice %79 {offsets = [0, 64], sizes = [8, 32], strides = [1, 1]} : vector<8x128xf32> to vector<8x32xf32>
    %86 = math.tanh %85 : vector<8x32xf32>
    %87 = vector.extract_strided_slice %84 {offsets = [0, 0], sizes = [8, 32], strides = [1, 1]} : vector<8x128xf32> to vector<8x32xf32>
    %88 = vector.extract_strided_slice %84 {offsets = [0, 32], sizes = [8, 32], strides = [1, 1]} : vector<8x128xf32> to vector<8x32xf32>
    %89 = vector.extract_strided_slice %84 {offsets = [0, 96], sizes = [8, 32], strides = [1, 1]} : vector<8x128xf32> to vector<8x32xf32>
    %90 = arith.mulf %88, %63 : vector<8x32xf32>
    %91 = arith.mulf %87, %86 : vector<8x32xf32>
    %92 = arith.addf %90, %91 : vector<8x32xf32>
    %93 = math.tanh %92 : vector<8x32xf32>
    %94 = arith.mulf %89, %93 : vector<8x32xf32>
    %c64_i32_31 = arith.constant 64 : i32
    %95 = arith.muli %c0_i32, %c64_i32_31 : i32
    %c8_i32_32 = arith.constant 8 : i32
    %96 = arith.muli %c2_i32, %c8_i32_32 : i32
    %97 = arith.addi %95, %96 : i32
    %98 = tpu.assume_multiple %97, 8 : i32
    %99 = arith.truncf %94 : vector<8x32xf32> to vector<8x32xbf16>
    %100 = arith.index_cast %98 : i32 to index
    %c0_33 = arith.constant 0 : index
    %101 = vector.load %arg10[%100, %c0_33] : memref<64x32xbf16, #tpu.memory_space<vmem>>, vector<8x32xbf16>
    tpu.vector_store %arg10[%100, %c0_33], %99 {strides = array<i32>} : memref<64x32xbf16, #tpu.memory_space<vmem>>, vector<8x32xbf16>,
    %c3_i32 = arith.constant 3 : i32
    %c8_i32_34 = arith.constant 8 : i32
    %102 = arith.muli %c3_i32, %c8_i32_34 : i32
    %103 = tpu.assume_multiple %102, 8 : i32
    %104 = arith.index_cast %103 : i32 to index
    %c0_35 = arith.constant 0 : index
    %105 = vector.load %arg11[%104, %c0_35] : memref<64x128xf32, #tpu.memory_space<vmem>>, vector<8x128xf32>
    %106 = arith.truncf %94 : vector<8x32xf32> to vector<8x32xbf16>
    %cst_36 = arith.constant dense<0.000000e+00> : vector<8x128xf32>
    %107 = tpu.matmul %106, %2, %cst_36 {dimension_numbers = #tpu.dot_dimension_numbers<[1], [0], [0], [1], [0, 0, 1, 1], [], []>} : vector<8x32xbf16>, vector<32x128xbf16>, vector<8x128xf32> -> vector<8x128xf32>
    %108 = arith.addf %105, %107 : vector<8x128xf32>
    %109 = arith.negf %108 : vector<8x128xf32>
    %110 = math.exp %109 : vector<8x128xf32>
    %cst_37 = arith.constant 1.000000e+00 : f32
    %111 = vector.broadcast %cst_37 : f32 to vector<8x128xf32>
    %112 = arith.addf %111, %110 : vector<8x128xf32>
    %113 = arith.divf %111, %112 : vector<8x128xf32>
    %114 = vector.extract_strided_slice %108 {offsets = [0, 64], sizes = [8, 32], strides = [1, 1]} : vector<8x128xf32> to vector<8x32xf32>
    %115 = math.tanh %114 : vector<8x32xf32>
    %116 = vector.extract_strided_slice %113 {offsets = [0, 0], sizes = [8, 32], strides = [1, 1]} : vector<8x128xf32> to vector<8x32xf32>
    %117 = vector.extract_strided_slice %113 {offsets = [0, 32], sizes = [8, 32], strides = [1, 1]} : vector<8x128xf32> to vector<8x32xf32>
    %118 = vector.extract_strided_slice %113 {offsets = [0, 96], sizes = [8, 32], strides = [1, 1]} : vector<8x128xf32> to vector<8x32xf32>
    %119 = arith.mulf %117, %92 : vector<8x32xf32>
    %120 = arith.mulf %116, %115 : vector<8x32xf32>
    %121 = arith.addf %119, %120 : vector<8x32xf32>
    %122 = math.tanh %121 : vector<8x32xf32>
    %123 = arith.mulf %118, %122 : vector<8x32xf32>
    %c64_i32_38 = arith.constant 64 : i32
    %124 = arith.muli %c0_i32, %c64_i32_38 : i32
    %c8_i32_39 = arith.constant 8 : i32
    %125 = arith.muli %c3_i32, %c8_i32_39 : i32
    %126 = arith.addi %124, %125 : i32
    %127 = tpu.assume_multiple %126, 8 : i32
    %128 = arith.truncf %123 : vector<8x32xf32> to vector<8x32xbf16>
    %129 = arith.index_cast %127 : i32 to index
    %c0_40 = arith.constant 0 : index
    %130 = vector.load %arg10[%129, %c0_40] : memref<64x32xbf16, #tpu.memory_space<vmem>>, vector<8x32xbf16>
    tpu.vector_store %arg10[%129, %c0_40], %128 {strides = array<i32>} : memref<64x32xbf16, #tpu.memory_space<vmem>>, vector<8x32xbf16>,
    %c4_i32 = arith.constant 4 : i32
    %c8_i32_41 = arith.constant 8 : i32
    %131 = arith.muli %c4_i32, %c8_i32_41 : i32
    %132 = tpu.assume_multiple %131, 8 : i32
    %133 = arith.index_cast %132 : i32 to index
    %c0_42 = arith.constant 0 : index
    %134 = vector.load %arg11[%133, %c0_42] : memref<64x128xf32, #tpu.memory_space<vmem>>, vector<8x128xf32>
    %135 = arith.truncf %123 : vector<8x32xf32> to vector<8x32xbf16>
    %cst_43 = arith.constant dense<0.000000e+00> : vector<8x128xf32>
    %136 = tpu.matmul %135, %2, %cst_43 {dimension_numbers = #tpu.dot_dimension_numbers<[1], [0], [0], [1], [0, 0, 1, 1], [], []>} : vector<8x32xbf16>, vector<32x128xbf16>, vector<8x128xf32> -> vector<8x128xf32>
    %137 = arith.addf %134, %136 : vector<8x128xf32>
    %138 = arith.negf %137 : vector<8x128xf32>
    %139 = math.exp %138 : vector<8x128xf32>
    %cst_44 = arith.constant 1.000000e+00 : f32
    %140 = vector.broadcast %cst_44 : f32 to vector<8x128xf32>
    %141 = arith.addf %140, %139 : vector<8x128xf32>
    %142 = arith.divf %140, %141 : vector<8x128xf32>
    %143 = vector.extract_strided_slice %137 {offsets = [0, 64], sizes = [8, 32], strides = [1, 1]} : vector<8x128xf32> to vector<8x32xf32>
    %144 = math.tanh %143 : vector<8x32xf32>
    %145 = vector.extract_strided_slice %142 {offsets = [0, 0], sizes = [8, 32], strides = [1, 1]} : vector<8x128xf32> to vector<8x32xf32>
    %146 = vector.extract_strided_slice %142 {offsets = [0, 32], sizes = [8, 32], strides = [1, 1]} : vector<8x128xf32> to vector<8x32xf32>
    %147 = vector.extract_strided_slice %142 {offsets = [0, 96], sizes = [8, 32], strides = [1, 1]} : vector<8x128xf32> to vector<8x32xf32>
    %148 = arith.mulf %146, %121 : vector<8x32xf32>
    %149 = arith.mulf %145, %144 : vector<8x32xf32>
    %150 = arith.addf %148, %149 : vector<8x32xf32>
    %151 = math.tanh %150 : vector<8x32xf32>
    %152 = arith.mulf %147, %151 : vector<8x32xf32>
    %c64_i32_45 = arith.constant 64 : i32
    %153 = arith.muli %c0_i32, %c64_i32_45 : i32
    %c8_i32_46 = arith.constant 8 : i32
    %154 = arith.muli %c4_i32, %c8_i32_46 : i32
    %155 = arith.addi %153, %154 : i32
    %156 = tpu.assume_multiple %155, 8 : i32
    %157 = arith.truncf %152 : vector<8x32xf32> to vector<8x32xbf16>
    %158 = arith.index_cast %156 : i32 to index
    %c0_47 = arith.constant 0 : index
    %159 = vector.load %arg10[%158, %c0_47] : memref<64x32xbf16, #tpu.memory_space<vmem>>, vector<8x32xbf16>
    tpu.vector_store %arg10[%158, %c0_47], %157 {strides = array<i32>} : memref<64x32xbf16, #tpu.memory_space<vmem>>, vector<8x32xbf16>,
    %c5_i32 = arith.constant 5 : i32
    %c8_i32_48 = arith.constant 8 : i32
    %160 = arith.muli %c5_i32, %c8_i32_48 : i32
    %161 = tpu.assume_multiple %160, 8 : i32
    %162 = arith.index_cast %161 : i32 to index
    %c0_49 = arith.constant 0 : index
    %163 = vector.load %arg11[%162, %c0_49] : memref<64x128xf32, #tpu.memory_space<vmem>>, vector<8x128xf32>
    %164 = arith.truncf %152 : vector<8x32xf32> to vector<8x32xbf16>
    %cst_50 = arith.constant dense<0.000000e+00> : vector<8x128xf32>
    %165 = tpu.matmul %164, %2, %cst_50 {dimension_numbers = #tpu.dot_dimension_numbers<[1], [0], [0], [1], [0, 0, 1, 1], [], []>} : vector<8x32xbf16>, vector<32x128xbf16>, vector<8x128xf32> -> vector<8x128xf32>
    %166 = arith.addf %163, %165 : vector<8x128xf32>
    %167 = arith.negf %166 : vector<8x128xf32>
    %168 = math.exp %167 : vector<8x128xf32>
    %cst_51 = arith.constant 1.000000e+00 : f32
    %169 = vector.broadcast %cst_51 : f32 to vector<8x128xf32>
    %170 = arith.addf %169, %168 : vector<8x128xf32>
    %171 = arith.divf %169, %170 : vector<8x128xf32>
    %172 = vector.extract_strided_slice %166 {offsets = [0, 64], sizes = [8, 32], strides = [1, 1]} : vector<8x128xf32> to vector<8x32xf32>
    %173 = math.tanh %172 : vector<8x32xf32>
    %174 = vector.extract_strided_slice %171 {offsets = [0, 0], sizes = [8, 32], strides = [1, 1]} : vector<8x128xf32> to vector<8x32xf32>
    %175 = vector.extract_strided_slice %171 {offsets = [0, 32], sizes = [8, 32], strides = [1, 1]} : vector<8x128xf32> to vector<8x32xf32>
    %176 = vector.extract_strided_slice %171 {offsets = [0, 96], sizes = [8, 32], strides = [1, 1]} : vector<8x128xf32> to vector<8x32xf32>
    %177 = arith.mulf %175, %150 : vector<8x32xf32>
    %178 = arith.mulf %174, %173 : vector<8x32xf32>
    %179 = arith.addf %177, %178 : vector<8x32xf32>
    %180 = math.tanh %179 : vector<8x32xf32>
    %181 = arith.mulf %176, %180 : vector<8x32xf32>
    %c64_i32_52 = arith.constant 64 : i32
    %182 = arith.muli %c0_i32, %c64_i32_52 : i32
    %c8_i32_53 = arith.constant 8 : i32
    %183 = arith.muli %c5_i32, %c8_i32_53 : i32
    %184 = arith.addi %182, %183 : i32
    %185 = tpu.assume_multiple %184, 8 : i32
    %186 = arith.truncf %181 : vector<8x32xf32> to vector<8x32xbf16>
    %187 = arith.index_cast %185 : i32 to index
    %c0_54 = arith.constant 0 : index
    %188 = vector.load %arg10[%187, %c0_54] : memref<64x32xbf16, #tpu.memory_space<vmem>>, vector<8x32xbf16>
    tpu.vector_store %arg10[%187, %c0_54], %186 {strides = array<i32>} : memref<64x32xbf16, #tpu.memory_space<vmem>>, vector<8x32xbf16>,
    %c6_i32 = arith.constant 6 : i32
    %c8_i32_55 = arith.constant 8 : i32
    %189 = arith.muli %c6_i32, %c8_i32_55 : i32
    %190 = tpu.assume_multiple %189, 8 : i32
    %191 = arith.index_cast %190 : i32 to index
    %c0_56 = arith.constant 0 : index
    %192 = vector.load %arg11[%191, %c0_56] : memref<64x128xf32, #tpu.memory_space<vmem>>, vector<8x128xf32>
    %193 = arith.truncf %181 : vector<8x32xf32> to vector<8x32xbf16>
    %cst_57 = arith.constant dense<0.000000e+00> : vector<8x128xf32>
    %194 = tpu.matmul %193, %2, %cst_57 {dimension_numbers = #tpu.dot_dimension_numbers<[1], [0], [0], [1], [0, 0, 1, 1], [], []>} : vector<8x32xbf16>, vector<32x128xbf16>, vector<8x128xf32> -> vector<8x128xf32>
    %195 = arith.addf %192, %194 : vector<8x128xf32>
    %196 = arith.negf %195 : vector<8x128xf32>
    %197 = math.exp %196 : vector<8x128xf32>
    %cst_58 = arith.constant 1.000000e+00 : f32
    %198 = vector.broadcast %cst_58 : f32 to vector<8x128xf32>
    %199 = arith.addf %198, %197 : vector<8x128xf32>
    %200 = arith.divf %198, %199 : vector<8x128xf32>
    %201 = vector.extract_strided_slice %195 {offsets = [0, 64], sizes = [8, 32], strides = [1, 1]} : vector<8x128xf32> to vector<8x32xf32>
    %202 = math.tanh %201 : vector<8x32xf32>
    %203 = vector.extract_strided_slice %200 {offsets = [0, 0], sizes = [8, 32], strides = [1, 1]} : vector<8x128xf32> to vector<8x32xf32>
    %204 = vector.extract_strided_slice %200 {offsets = [0, 32], sizes = [8, 32], strides = [1, 1]} : vector<8x128xf32> to vector<8x32xf32>
    %205 = vector.extract_strided_slice %200 {offsets = [0, 96], sizes = [8, 32], strides = [1, 1]} : vector<8x128xf32> to vector<8x32xf32>
    %206 = arith.mulf %204, %179 : vector<8x32xf32>
    %207 = arith.mulf %203, %202 : vector<8x32xf32>
    %208 = arith.addf %206, %207 : vector<8x32xf32>
    %209 = math.tanh %208 : vector<8x32xf32>
    %210 = arith.mulf %205, %209 : vector<8x32xf32>
    %c64_i32_59 = arith.constant 64 : i32
    %211 = arith.muli %c0_i32, %c64_i32_59 : i32
    %c8_i32_60 = arith.constant 8 : i32
    %212 = arith.muli %c6_i32, %c8_i32_60 : i32
    %213 = arith.addi %211, %212 : i32
    %214 = tpu.assume_multiple %213, 8 : i32
    %215 = arith.truncf %210 : vector<8x32xf32> to vector<8x32xbf16>
    %216 = arith.index_cast %214 : i32 to index
    %c0_61 = arith.constant 0 : index
    %217 = vector.load %arg10[%216, %c0_61] : memref<64x32xbf16, #tpu.memory_space<vmem>>, vector<8x32xbf16>
    tpu.vector_store %arg10[%216, %c0_61], %215 {strides = array<i32>} : memref<64x32xbf16, #tpu.memory_space<vmem>>, vector<8x32xbf16>,
    %c7_i32 = arith.constant 7 : i32
    %c8_i32_62 = arith.constant 8 : i32
    %218 = arith.muli %c7_i32, %c8_i32_62 : i32
    %219 = tpu.assume_multiple %218, 8 : i32
    %220 = arith.index_cast %219 : i32 to index
    %c0_63 = arith.constant 0 : index
    %221 = vector.load %arg11[%220, %c0_63] : memref<64x128xf32, #tpu.memory_space<vmem>>, vector<8x128xf32>
    %222 = arith.truncf %210 : vector<8x32xf32> to vector<8x32xbf16>
    %cst_64 = arith.constant dense<0.000000e+00> : vector<8x128xf32>
    %223 = tpu.matmul %222, %2, %cst_64 {dimension_numbers = #tpu.dot_dimension_numbers<[1], [0], [0], [1], [0, 0, 1, 1], [], []>} : vector<8x32xbf16>, vector<32x128xbf16>, vector<8x128xf32> -> vector<8x128xf32>
    %224 = arith.addf %221, %223 : vector<8x128xf32>
    %225 = arith.negf %224 : vector<8x128xf32>
    %226 = math.exp %225 : vector<8x128xf32>
    %cst_65 = arith.constant 1.000000e+00 : f32
    %227 = vector.broadcast %cst_65 : f32 to vector<8x128xf32>
    %228 = arith.addf %227, %226 : vector<8x128xf32>
    %229 = arith.divf %227, %228 : vector<8x128xf32>
    %230 = vector.extract_strided_slice %224 {offsets = [0, 64], sizes = [8, 32], strides = [1, 1]} : vector<8x128xf32> to vector<8x32xf32>
    %231 = math.tanh %230 : vector<8x32xf32>
    %232 = vector.extract_strided_slice %229 {offsets = [0, 0], sizes = [8, 32], strides = [1, 1]} : vector<8x128xf32> to vector<8x32xf32>
    %233 = vector.extract_strided_slice %229 {offsets = [0, 32], sizes = [8, 32], strides = [1, 1]} : vector<8x128xf32> to vector<8x32xf32>
    %234 = vector.extract_strided_slice %229 {offsets = [0, 96], sizes = [8, 32], strides = [1, 1]} : vector<8x128xf32> to vector<8x32xf32>
    %235 = arith.mulf %233, %208 : vector<8x32xf32>
    %236 = arith.mulf %232, %231 : vector<8x32xf32>
    %237 = arith.addf %235, %236 : vector<8x32xf32>
    %238 = math.tanh %237 : vector<8x32xf32>
    %239 = arith.mulf %234, %238 : vector<8x32xf32>
    %c64_i32_66 = arith.constant 64 : i32
    %240 = arith.muli %c0_i32, %c64_i32_66 : i32
    %c8_i32_67 = arith.constant 8 : i32
    %241 = arith.muli %c7_i32, %c8_i32_67 : i32
    %242 = arith.addi %240, %241 : i32
    %243 = tpu.assume_multiple %242, 8 : i32
    %244 = arith.truncf %239 : vector<8x32xf32> to vector<8x32xbf16>
    %245 = arith.index_cast %243 : i32 to index
    %c0_68 = arith.constant 0 : index
    %246 = vector.load %arg10[%245, %c0_68] : memref<64x32xbf16, #tpu.memory_space<vmem>>, vector<8x32xbf16>
    tpu.vector_store %arg10[%245, %c0_68], %244 {strides = array<i32>} : memref<64x32xbf16, #tpu.memory_space<vmem>>, vector<8x32xbf16>,
    %c8_i32_69 = arith.constant 8 : i32
    %c1_i32_70 = arith.constant 1 : i32
    %c1 = arith.constant 1 : index
    %c0_71 = arith.constant 0 : index
    %c0_72 = arith.constant 0 : index
    %247 = vector.load %arg5[%c1, %c0_71, %c0_72] : memref<3x32x128xbf16, #tpu.memory_space<vmem>>, vector<1x32x128xbf16>
    %248 = vector.shape_cast %247 : vector<1x32x128xbf16> to vector<32x128xbf16>
    %c1_73 = arith.constant 1 : index
    %c0_74 = arith.constant 0 : index
    %c0_75 = arith.constant 0 : index
    %249 = vector.load %arg6[%c1_73, %c0_74, %c0_75] : memref<3x1x128xf32, #tpu.memory_space<vmem>>, vector<1x1x128xf32>
    %250 = vector.shape_cast %249 : vector<1x1x128xf32> to vector<1x128xf32>
    %c0_76 = arith.constant 0 : index
    %c0_77 = arith.constant 0 : index
    %c0_78 = arith.constant 0 : index
    %251 = vector.load %arg4[%c0_76, %c0_77, %c0_78] : memref<2x32x128xbf16, #tpu.memory_space<vmem>>, vector<1x32x128xbf16>
    %252 = vector.shape_cast %251 : vector<1x32x128xbf16> to vector<32x128xbf16>
    %cst_79 = arith.constant 0.000000e+00 : f32
    %253 = vector.broadcast %cst_79 : f32 to vector<8x32xf32>
    %c0_i32_80 = arith.constant 0 : i32
    %c64_i32_81 = arith.constant 64 : i32
    %254 = arith.muli %c0_i32_80, %c64_i32_81 : i32
    %255 = tpu.assume_multiple %254, 8 : i32
    %256 = arith.index_cast %255 : i32 to index
    %c0_82 = arith.constant 0 : index
    %257 = vector.load %arg10[%256, %c0_82] : memref<64x32xbf16, #tpu.memory_space<vmem>>, vector<64x32xbf16>
    %cst_83 = arith.constant dense<0.000000e+00> : vector<64x128xf32>
    %258 = tpu.matmul %257, %252, %cst_83 {dimension_numbers = #tpu.dot_dimension_numbers<[1], [0], [0], [1], [0, 0, 1, 1], [], []>} : vector<64x32xbf16>, vector<32x128xbf16>, vector<64x128xf32> -> vector<64x128xf32>
    %259 = vector.broadcast %250 : vector<1x128xf32> to vector<64x128xf32>
    %260 = arith.addf %258, %259 : vector<64x128xf32>
    %c0_84 = arith.constant 0 : index
    %c0_85 = arith.constant 0 : index
    %261 = vector.load %arg11[%c0_84, %c0_85] : memref<64x128xf32, #tpu.memory_space<vmem>>, vector<64x128xf32>
    tpu.vector_store %arg11[%c0_84, %c0_85], %260 {strides = array<i32>} : memref<64x128xf32, #tpu.memory_space<vmem>>, vector<64x128xf32>,
    %c0_i32_86 = arith.constant 0 : i32
    %c8_i32_87 = arith.constant 8 : i32
    %262 = arith.muli %c0_i32_86, %c8_i32_87 : i32
    %263 = tpu.assume_multiple %262, 8 : i32
    %264 = arith.index_cast %263 : i32 to index
    %c0_88 = arith.constant 0 : index
    %265 = vector.load %arg11[%264, %c0_88] : memref<64x128xf32, #tpu.memory_space<vmem>>, vector<8x128xf32>
    %266 = arith.truncf %253 : vector<8x32xf32> to vector<8x32xbf16>
    %cst_89 = arith.constant dense<0.000000e+00> : vector<8x128xf32>
    %267 = tpu.matmul %266, %248, %cst_89 {dimension_numbers = #tpu.dot_dimension_numbers<[1], [0], [0], [1], [0, 0, 1, 1], [], []>} : vector<8x32xbf16>, vector<32x128xbf16>, vector<8x128xf32> -> vector<8x128xf32>
    %268 = arith.addf %265, %267 : vector<8x128xf32>
    %269 = arith.negf %268 : vector<8x128xf32>
    %270 = math.exp %269 : vector<8x128xf32>
    %cst_90 = arith.constant 1.000000e+00 : f32
    %271 = vector.broadcast %cst_90 : f32 to vector<8x128xf32>
    %272 = arith.addf %271, %270 : vector<8x128xf32>
    %273 = arith.divf %271, %272 : vector<8x128xf32>
    %274 = vector.extract_strided_slice %268 {offsets = [0, 64], sizes = [8, 32], strides = [1, 1]} : vector<8x128xf32> to vector<8x32xf32>
    %275 = math.tanh %274 : vector<8x32xf32>
    %276 = vector.extract_strided_slice %273 {offsets = [0, 0], sizes = [8, 32], strides = [1, 1]} : vector<8x128xf32> to vector<8x32xf32>
    %277 = vector.extract_strided_slice %273 {offsets = [0, 32], sizes = [8, 32], strides = [1, 1]} : vector<8x128xf32> to vector<8x32xf32>
    %278 = vector.extract_strided_slice %273 {offsets = [0, 96], sizes = [8, 32], strides = [1, 1]} : vector<8x128xf32> to vector<8x32xf32>
    %279 = arith.mulf %277, %253 : vector<8x32xf32>
    %280 = arith.mulf %276, %275 : vector<8x32xf32>
    %281 = arith.addf %279, %280 : vector<8x32xf32>
    %282 = math.tanh %281 : vector<8x32xf32>
    %283 = arith.mulf %278, %282 : vector<8x32xf32>
    %c64_i32_91 = arith.constant 64 : i32
    %284 = arith.muli %c0_i32_80, %c64_i32_91 : i32
    %c8_i32_92 = arith.constant 8 : i32
    %285 = arith.muli %c0_i32_86, %c8_i32_92 : i32
    %286 = arith.addi %284, %285 : i32
    %287 = tpu.assume_multiple %286, 8 : i32
    %288 = arith.truncf %283 : vector<8x32xf32> to vector<8x32xbf16>
    %289 = arith.index_cast %287 : i32 to index
    %c0_93 = arith.constant 0 : index
    %290 = vector.load %arg10[%289, %c0_93] : memref<64x32xbf16, #tpu.memory_space<vmem>>, vector<8x32xbf16>
    tpu.vector_store %arg10[%289, %c0_93], %288 {strides = array<i32>} : memref<64x32xbf16, #tpu.memory_space<vmem>>, vector<8x32xbf16>,
    %c1_i32_94 = arith.constant 1 : i32
    %c8_i32_95 = arith.constant 8 : i32
    %291 = arith.muli %c1_i32_94, %c8_i32_95 : i32
    %292 = tpu.assume_multiple %291, 8 : i32
    %293 = arith.index_cast %292 : i32 to index
    %c0_96 = arith.constant 0 : index
    %294 = vector.load %arg11[%293, %c0_96] : memref<64x128xf32, #tpu.memory_space<vmem>>, vector<8x128xf32>
    %295 = arith.truncf %283 : vector<8x32xf32> to vector<8x32xbf16>
    %cst_97 = arith.constant dense<0.000000e+00> : vector<8x128xf32>
    %296 = tpu.matmul %295, %248, %cst_97 {dimension_numbers = #tpu.dot_dimension_numbers<[1], [0], [0], [1], [0, 0, 1, 1], [], []>} : vector<8x32xbf16>, vector<32x128xbf16>, vector<8x128xf32> -> vector<8x128xf32>
    %297 = arith.addf %294, %296 : vector<8x128xf32>
    %298 = arith.negf %297 : vector<8x128xf32>
    %299 = math.exp %298 : vector<8x128xf32>
    %cst_98 = arith.constant 1.000000e+00 : f32
    %300 = vector.broadcast %cst_98 : f32 to vector<8x128xf32>
    %301 = arith.addf %300, %299 : vector<8x128xf32>
    %302 = arith.divf %300, %301 : vector<8x128xf32>
    %303 = vector.extract_strided_slice %297 {offsets = [0, 64], sizes = [8, 32], strides = [1, 1]} : vector<8x128xf32> to vector<8x32xf32>
    %304 = math.tanh %303 : vector<8x32xf32>
    %305 = vector.extract_strided_slice %302 {offsets = [0, 0], sizes = [8, 32], strides = [1, 1]} : vector<8x128xf32> to vector<8x32xf32>
    %306 = vector.extract_strided_slice %302 {offsets = [0, 32], sizes = [8, 32], strides = [1, 1]} : vector<8x128xf32> to vector<8x32xf32>
    %307 = vector.extract_strided_slice %302 {offsets = [0, 96], sizes = [8, 32], strides = [1, 1]} : vector<8x128xf32> to vector<8x32xf32>
    %308 = arith.mulf %306, %281 : vector<8x32xf32>
    %309 = arith.mulf %305, %304 : vector<8x32xf32>
    %310 = arith.addf %308, %309 : vector<8x32xf32>
    %311 = math.tanh %310 : vector<8x32xf32>
    %312 = arith.mulf %307, %311 : vector<8x32xf32>
    %c64_i32_99 = arith.constant 64 : i32
    %313 = arith.muli %c0_i32_80, %c64_i32_99 : i32
    %c8_i32_100 = arith.constant 8 : i32
    %314 = arith.muli %c1_i32_94, %c8_i32_100 : i32
    %315 = arith.addi %313, %314 : i32
    %316 = tpu.assume_multiple %315, 8 : i32
    %317 = arith.truncf %312 : vector<8x32xf32> to vector<8x32xbf16>
    %318 = arith.index_cast %316 : i32 to index
    %c0_101 = arith.constant 0 : index
    %319 = vector.load %arg10[%318, %c0_101] : memref<64x32xbf16, #tpu.memory_space<vmem>>, vector<8x32xbf16>
    tpu.vector_store %arg10[%318, %c0_101], %317 {strides = array<i32>} : memref<64x32xbf16, #tpu.memory_space<vmem>>, vector<8x32xbf16>,
    %c2_i32_102 = arith.constant 2 : i32
    %c8_i32_103 = arith.constant 8 : i32
    %320 = arith.muli %c2_i32_102, %c8_i32_103 : i32
    %321 = tpu.assume_multiple %320, 8 : i32
    %322 = arith.index_cast %321 : i32 to index
    %c0_104 = arith.constant 0 : index
    %323 = vector.load %arg11[%322, %c0_104] : memref<64x128xf32, #tpu.memory_space<vmem>>, vector<8x128xf32>
    %324 = arith.truncf %312 : vector<8x32xf32> to vector<8x32xbf16>
    %cst_105 = arith.constant dense<0.000000e+00> : vector<8x128xf32>
    %325 = tpu.matmul %324, %248, %cst_105 {dimension_numbers = #tpu.dot_dimension_numbers<[1], [0], [0], [1], [0, 0, 1, 1], [], []>} : vector<8x32xbf16>, vector<32x128xbf16>, vector<8x128xf32> -> vector<8x128xf32>
    %326 = arith.addf %323, %325 : vector<8x128xf32>
    %327 = arith.negf %326 : vector<8x128xf32>
    %328 = math.exp %327 : vector<8x128xf32>
    %cst_106 = arith.constant 1.000000e+00 : f32
    %329 = vector.broadcast %cst_106 : f32 to vector<8x128xf32>
    %330 = arith.addf %329, %328 : vector<8x128xf32>
    %331 = arith.divf %329, %330 : vector<8x128xf32>
    %332 = vector.extract_strided_slice %326 {offsets = [0, 64], sizes = [8, 32], strides = [1, 1]} : vector<8x128xf32> to vector<8x32xf32>
    %333 = math.tanh %332 : vector<8x32xf32>
    %334 = vector.extract_strided_slice %331 {offsets = [0, 0], sizes = [8, 32], strides = [1, 1]} : vector<8x128xf32> to vector<8x32xf32>
    %335 = vector.extract_strided_slice %331 {offsets = [0, 32], sizes = [8, 32], strides = [1, 1]} : vector<8x128xf32> to vector<8x32xf32>
    %336 = vector.extract_strided_slice %331 {offsets = [0, 96], sizes = [8, 32], strides = [1, 1]} : vector<8x128xf32> to vector<8x32xf32>
    %337 = arith.mulf %335, %310 : vector<8x32xf32>
    %338 = arith.mulf %334, %333 : vector<8x32xf32>
    %339 = arith.addf %337, %338 : vector<8x32xf32>
    %340 = math.tanh %339 : vector<8x32xf32>
    %341 = arith.mulf %336, %340 : vector<8x32xf32>
    %c64_i32_107 = arith.constant 64 : i32
    %342 = arith.muli %c0_i32_80, %c64_i32_107 : i32
    %c8_i32_108 = arith.constant 8 : i32
    %343 = arith.muli %c2_i32_102, %c8_i32_108 : i32
    %344 = arith.addi %342, %343 : i32
    %345 = tpu.assume_multiple %344, 8 : i32
    %346 = arith.truncf %341 : vector<8x32xf32> to vector<8x32xbf16>
    %347 = arith.index_cast %345 : i32 to index
    %c0_109 = arith.constant 0 : index
    %348 = vector.load %arg10[%347, %c0_109] : memref<64x32xbf16, #tpu.memory_space<vmem>>, vector<8x32xbf16>
    tpu.vector_store %arg10[%347, %c0_109], %346 {strides = array<i32>} : memref<64x32xbf16, #tpu.memory_space<vmem>>, vector<8x32xbf16>,
    %c3_i32_110 = arith.constant 3 : i32
    %c8_i32_111 = arith.constant 8 : i32
    %349 = arith.muli %c3_i32_110, %c8_i32_111 : i32
    %350 = tpu.assume_multiple %349, 8 : i32
    %351 = arith.index_cast %350 : i32 to index
    %c0_112 = arith.constant 0 : index
    %352 = vector.load %arg11[%351, %c0_112] : memref<64x128xf32, #tpu.memory_space<vmem>>, vector<8x128xf32>
    %353 = arith.truncf %341 : vector<8x32xf32> to vector<8x32xbf16>
    %cst_113 = arith.constant dense<0.000000e+00> : vector<8x128xf32>
    %354 = tpu.matmul %353, %248, %cst_113 {dimension_numbers = #tpu.dot_dimension_numbers<[1], [0], [0], [1], [0, 0, 1, 1], [], []>} : vector<8x32xbf16>, vector<32x128xbf16>, vector<8x128xf32> -> vector<8x128xf32>
    %355 = arith.addf %352, %354 : vector<8x128xf32>
    %356 = arith.negf %355 : vector<8x128xf32>
    %357 = math.exp %356 : vector<8x128xf32>
    %cst_114 = arith.constant 1.000000e+00 : f32
    %358 = vector.broadcast %cst_114 : f32 to vector<8x128xf32>
    %359 = arith.addf %358, %357 : vector<8x128xf32>
    %360 = arith.divf %358, %359 : vector<8x128xf32>
    %361 = vector.extract_strided_slice %355 {offsets = [0, 64], sizes = [8, 32], strides = [1, 1]} : vector<8x128xf32> to vector<8x32xf32>
    %362 = math.tanh %361 : vector<8x32xf32>
    %363 = vector.extract_strided_slice %360 {offsets = [0, 0], sizes = [8, 32], strides = [1, 1]} : vector<8x128xf32> to vector<8x32xf32>
    %364 = vector.extract_strided_slice %360 {offsets = [0, 32], sizes = [8, 32], strides = [1, 1]} : vector<8x128xf32> to vector<8x32xf32>
    %365 = vector.extract_strided_slice %360 {offsets = [0, 96], sizes = [8, 32], strides = [1, 1]} : vector<8x128xf32> to vector<8x32xf32>
    %366 = arith.mulf %364, %339 : vector<8x32xf32>
    %367 = arith.mulf %363, %362 : vector<8x32xf32>
    %368 = arith.addf %366, %367 : vector<8x32xf32>
    %369 = math.tanh %368 : vector<8x32xf32>
    %370 = arith.mulf %365, %369 : vector<8x32xf32>
    %c64_i32_115 = arith.constant 64 : i32
    %371 = arith.muli %c0_i32_80, %c64_i32_115 : i32
    %c8_i32_116 = arith.constant 8 : i32
    %372 = arith.muli %c3_i32_110, %c8_i32_116 : i32
    %373 = arith.addi %371, %372 : i32
    %374 = tpu.assume_multiple %373, 8 : i32
    %375 = arith.truncf %370 : vector<8x32xf32> to vector<8x32xbf16>
    %376 = arith.index_cast %374 : i32 to index
    %c0_117 = arith.constant 0 : index
    %377 = vector.load %arg10[%376, %c0_117] : memref<64x32xbf16, #tpu.memory_space<vmem>>, vector<8x32xbf16>
    tpu.vector_store %arg10[%376, %c0_117], %375 {strides = array<i32>} : memref<64x32xbf16, #tpu.memory_space<vmem>>, vector<8x32xbf16>,
    %c4_i32_118 = arith.constant 4 : i32
    %c8_i32_119 = arith.constant 8 : i32
    %378 = arith.muli %c4_i32_118, %c8_i32_119 : i32
    %379 = tpu.assume_multiple %378, 8 : i32
    %380 = arith.index_cast %379 : i32 to index
    %c0_120 = arith.constant 0 : index
    %381 = vector.load %arg11[%380, %c0_120] : memref<64x128xf32, #tpu.memory_space<vmem>>, vector<8x128xf32>
    %382 = arith.truncf %370 : vector<8x32xf32> to vector<8x32xbf16>
    %cst_121 = arith.constant dense<0.000000e+00> : vector<8x128xf32>
    %383 = tpu.matmul %382, %248, %cst_121 {dimension_numbers = #tpu.dot_dimension_numbers<[1], [0], [0], [1], [0, 0, 1, 1], [], []>} : vector<8x32xbf16>, vector<32x128xbf16>, vector<8x128xf32> -> vector<8x128xf32>
    %384 = arith.addf %381, %383 : vector<8x128xf32>
    %385 = arith.negf %384 : vector<8x128xf32>
    %386 = math.exp %385 : vector<8x128xf32>
    %cst_122 = arith.constant 1.000000e+00 : f32
    %387 = vector.broadcast %cst_122 : f32 to vector<8x128xf32>
    %388 = arith.addf %387, %386 : vector<8x128xf32>
    %389 = arith.divf %387, %388 : vector<8x128xf32>
    %390 = vector.extract_strided_slice %384 {offsets = [0, 64], sizes = [8, 32], strides = [1, 1]} : vector<8x128xf32> to vector<8x32xf32>
    %391 = math.tanh %390 : vector<8x32xf32>
    %392 = vector.extract_strided_slice %389 {offsets = [0, 0], sizes = [8, 32], strides = [1, 1]} : vector<8x128xf32> to vector<8x32xf32>
    %393 = vector.extract_strided_slice %389 {offsets = [0, 32], sizes = [8, 32], strides = [1, 1]} : vector<8x128xf32> to vector<8x32xf32>
    %394 = vector.extract_strided_slice %389 {offsets = [0, 96], sizes = [8, 32], strides = [1, 1]} : vector<8x128xf32> to vector<8x32xf32>
    %395 = arith.mulf %393, %368 : vector<8x32xf32>
    %396 = arith.mulf %392, %391 : vector<8x32xf32>
    %397 = arith.addf %395, %396 : vector<8x32xf32>
    %398 = math.tanh %397 : vector<8x32xf32>
    %399 = arith.mulf %394, %398 : vector<8x32xf32>
    %c64_i32_123 = arith.constant 64 : i32
    %400 = arith.muli %c0_i32_80, %c64_i32_123 : i32
    %c8_i32_124 = arith.constant 8 : i32
    %401 = arith.muli %c4_i32_118, %c8_i32_124 : i32
    %402 = arith.addi %400, %401 : i32
    %403 = tpu.assume_multiple %402, 8 : i32
    %404 = arith.truncf %399 : vector<8x32xf32> to vector<8x32xbf16>
    %405 = arith.index_cast %403 : i32 to index
    %c0_125 = arith.constant 0 : index
    %406 = vector.load %arg10[%405, %c0_125] : memref<64x32xbf16, #tpu.memory_space<vmem>>, vector<8x32xbf16>
    tpu.vector_store %arg10[%405, %c0_125], %404 {strides = array<i32>} : memref<64x32xbf16, #tpu.memory_space<vmem>>, vector<8x32xbf16>,
    %c5_i32_126 = arith.constant 5 : i32
    %c8_i32_127 = arith.constant 8 : i32
    %407 = arith.muli %c5_i32_126, %c8_i32_127 : i32
    %408 = tpu.assume_multiple %407, 8 : i32
    %409 = arith.index_cast %408 : i32 to index
    %c0_128 = arith.constant 0 : index
    %410 = vector.load %arg11[%409, %c0_128] : memref<64x128xf32, #tpu.memory_space<vmem>>, vector<8x128xf32>
    %411 = arith.truncf %399 : vector<8x32xf32> to vector<8x32xbf16>
    %cst_129 = arith.constant dense<0.000000e+00> : vector<8x128xf32>
    %412 = tpu.matmul %411, %248, %cst_129 {dimension_numbers = #tpu.dot_dimension_numbers<[1], [0], [0], [1], [0, 0, 1, 1], [], []>} : vector<8x32xbf16>, vector<32x128xbf16>, vector<8x128xf32> -> vector<8x128xf32>
    %413 = arith.addf %410, %412 : vector<8x128xf32>
    %414 = arith.negf %413 : vector<8x128xf32>
    %415 = math.exp %414 : vector<8x128xf32>
    %cst_130 = arith.constant 1.000000e+00 : f32
    %416 = vector.broadcast %cst_130 : f32 to vector<8x128xf32>
    %417 = arith.addf %416, %415 : vector<8x128xf32>
    %418 = arith.divf %416, %417 : vector<8x128xf32>
    %419 = vector.extract_strided_slice %413 {offsets = [0, 64], sizes = [8, 32], strides = [1, 1]} : vector<8x128xf32> to vector<8x32xf32>
    %420 = math.tanh %419 : vector<8x32xf32>
    %421 = vector.extract_strided_slice %418 {offsets = [0, 0], sizes = [8, 32], strides = [1, 1]} : vector<8x128xf32> to vector<8x32xf32>
    %422 = vector.extract_strided_slice %418 {offsets = [0, 32], sizes = [8, 32], strides = [1, 1]} : vector<8x128xf32> to vector<8x32xf32>
    %423 = vector.extract_strided_slice %418 {offsets = [0, 96], sizes = [8, 32], strides = [1, 1]} : vector<8x128xf32> to vector<8x32xf32>
    %424 = arith.mulf %422, %397 : vector<8x32xf32>
    %425 = arith.mulf %421, %420 : vector<8x32xf32>
    %426 = arith.addf %424, %425 : vector<8x32xf32>
    %427 = math.tanh %426 : vector<8x32xf32>
    %428 = arith.mulf %423, %427 : vector<8x32xf32>
    %c64_i32_131 = arith.constant 64 : i32
    %429 = arith.muli %c0_i32_80, %c64_i32_131 : i32
    %c8_i32_132 = arith.constant 8 : i32
    %430 = arith.muli %c5_i32_126, %c8_i32_132 : i32
    %431 = arith.addi %429, %430 : i32
    %432 = tpu.assume_multiple %431, 8 : i32
    %433 = arith.truncf %428 : vector<8x32xf32> to vector<8x32xbf16>
    %434 = arith.index_cast %432 : i32 to index
    %c0_133 = arith.constant 0 : index
    %435 = vector.load %arg10[%434, %c0_133] : memref<64x32xbf16, #tpu.memory_space<vmem>>, vector<8x32xbf16>
    tpu.vector_store %arg10[%434, %c0_133], %433 {strides = array<i32>} : memref<64x32xbf16, #tpu.memory_space<vmem>>, vector<8x32xbf16>,
    %c6_i32_134 = arith.constant 6 : i32
    %c8_i32_135 = arith.constant 8 : i32
    %436 = arith.muli %c6_i32_134, %c8_i32_135 : i32
    %437 = tpu.assume_multiple %436, 8 : i32
    %438 = arith.index_cast %437 : i32 to index
    %c0_136 = arith.constant 0 : index
    %439 = vector.load %arg11[%438, %c0_136] : memref<64x128xf32, #tpu.memory_space<vmem>>, vector<8x128xf32>
    %440 = arith.truncf %428 : vector<8x32xf32> to vector<8x32xbf16>
    %cst_137 = arith.constant dense<0.000000e+00> : vector<8x128xf32>
    %441 = tpu.matmul %440, %248, %cst_137 {dimension_numbers = #tpu.dot_dimension_numbers<[1], [0], [0], [1], [0, 0, 1, 1], [], []>} : vector<8x32xbf16>, vector<32x128xbf16>, vector<8x128xf32> -> vector<8x128xf32>
    %442 = arith.addf %439, %441 : vector<8x128xf32>
    %443 = arith.negf %442 : vector<8x128xf32>
    %444 = math.exp %443 : vector<8x128xf32>
    %cst_138 = arith.constant 1.000000e+00 : f32
    %445 = vector.broadcast %cst_138 : f32 to vector<8x128xf32>
    %446 = arith.addf %445, %444 : vector<8x128xf32>
    %447 = arith.divf %445, %446 : vector<8x128xf32>
    %448 = vector.extract_strided_slice %442 {offsets = [0, 64], sizes = [8, 32], strides = [1, 1]} : vector<8x128xf32> to vector<8x32xf32>
    %449 = math.tanh %448 : vector<8x32xf32>
    %450 = vector.extract_strided_slice %447 {offsets = [0, 0], sizes = [8, 32], strides = [1, 1]} : vector<8x128xf32> to vector<8x32xf32>
    %451 = vector.extract_strided_slice %447 {offsets = [0, 32], sizes = [8, 32], strides = [1, 1]} : vector<8x128xf32> to vector<8x32xf32>
    %452 = vector.extract_strided_slice %447 {offsets = [0, 96], sizes = [8, 32], strides = [1, 1]} : vector<8x128xf32> to vector<8x32xf32>
    %453 = arith.mulf %451, %426 : vector<8x32xf32>
    %454 = arith.mulf %450, %449 : vector<8x32xf32>
    %455 = arith.addf %453, %454 : vector<8x32xf32>
    %456 = math.tanh %455 : vector<8x32xf32>
    %457 = arith.mulf %452, %456 : vector<8x32xf32>
    %c64_i32_139 = arith.constant 64 : i32
    %458 = arith.muli %c0_i32_80, %c64_i32_139 : i32
    %c8_i32_140 = arith.constant 8 : i32
    %459 = arith.muli %c6_i32_134, %c8_i32_140 : i32
    %460 = arith.addi %458, %459 : i32
    %461 = tpu.assume_multiple %460, 8 : i32
    %462 = arith.truncf %457 : vector<8x32xf32> to vector<8x32xbf16>
    %463 = arith.index_cast %461 : i32 to index
    %c0_141 = arith.constant 0 : index
    %464 = vector.load %arg10[%463, %c0_141] : memref<64x32xbf16, #tpu.memory_space<vmem>>, vector<8x32xbf16>
    tpu.vector_store %arg10[%463, %c0_141], %462 {strides = array<i32>} : memref<64x32xbf16, #tpu.memory_space<vmem>>, vector<8x32xbf16>,
    %c7_i32_142 = arith.constant 7 : i32
    %c8_i32_143 = arith.constant 8 : i32
    %465 = arith.muli %c7_i32_142, %c8_i32_143 : i32
    %466 = tpu.assume_multiple %465, 8 : i32
    %467 = arith.index_cast %466 : i32 to index
    %c0_144 = arith.constant 0 : index
    %468 = vector.load %arg11[%467, %c0_144] : memref<64x128xf32, #tpu.memory_space<vmem>>, vector<8x128xf32>
    %469 = arith.truncf %457 : vector<8x32xf32> to vector<8x32xbf16>
    %cst_145 = arith.constant dense<0.000000e+00> : vector<8x128xf32>
    %470 = tpu.matmul %469, %248, %cst_145 {dimension_numbers = #tpu.dot_dimension_numbers<[1], [0], [0], [1], [0, 0, 1, 1], [], []>} : vector<8x32xbf16>, vector<32x128xbf16>, vector<8x128xf32> -> vector<8x128xf32>
    %471 = arith.addf %468, %470 : vector<8x128xf32>
    %472 = arith.negf %471 : vector<8x128xf32>
    %473 = math.exp %472 : vector<8x128xf32>
    %cst_146 = arith.constant 1.000000e+00 : f32
    %474 = vector.broadcast %cst_146 : f32 to vector<8x128xf32>
    %475 = arith.addf %474, %473 : vector<8x128xf32>
    %476 = arith.divf %474, %475 : vector<8x128xf32>
    %477 = vector.extract_strided_slice %471 {offsets = [0, 64], sizes = [8, 32], strides = [1, 1]} : vector<8x128xf32> to vector<8x32xf32>
    %478 = math.tanh %477 : vector<8x32xf32>
    %479 = vector.extract_strided_slice %476 {offsets = [0, 0], sizes = [8, 32], strides = [1, 1]} : vector<8x128xf32> to vector<8x32xf32>
    %480 = vector.extract_strided_slice %476 {offsets = [0, 32], sizes = [8, 32], strides = [1, 1]} : vector<8x128xf32> to vector<8x32xf32>
    %481 = vector.extract_strided_slice %476 {offsets = [0, 96], sizes = [8, 32], strides = [1, 1]} : vector<8x128xf32> to vector<8x32xf32>
    %482 = arith.mulf %480, %455 : vector<8x32xf32>
    %483 = arith.mulf %479, %478 : vector<8x32xf32>
    %484 = arith.addf %482, %483 : vector<8x32xf32>
    %485 = math.tanh %484 : vector<8x32xf32>
    %486 = arith.mulf %481, %485 : vector<8x32xf32>
    %c64_i32_147 = arith.constant 64 : i32
    %487 = arith.muli %c0_i32_80, %c64_i32_147 : i32
    %c8_i32_148 = arith.constant 8 : i32
    %488 = arith.muli %c7_i32_142, %c8_i32_148 : i32
    %489 = arith.addi %487, %488 : i32
    %490 = tpu.assume_multiple %489, 8 : i32
    %491 = arith.truncf %486 : vector<8x32xf32> to vector<8x32xbf16>
    %492 = arith.index_cast %490 : i32 to index
    %c0_149 = arith.constant 0 : index
    %493 = vector.load %arg10[%492, %c0_149] : memref<64x32xbf16, #tpu.memory_space<vmem>>, vector<8x32xbf16>
    tpu.vector_store %arg10[%492, %c0_149], %491 {strides = array<i32>} : memref<64x32xbf16, #tpu.memory_space<vmem>>, vector<8x32xbf16>,
    %c8_i32_150 = arith.constant 8 : i32
    %c1_i32_151 = arith.constant 1 : i32
    %c2 = arith.constant 2 : index
    %c0_152 = arith.constant 0 : index
    %c0_153 = arith.constant 0 : index
    %494 = vector.load %arg5[%c2, %c0_152, %c0_153] : memref<3x32x128xbf16, #tpu.memory_space<vmem>>, vector<1x32x128xbf16>
    %495 = vector.shape_cast %494 : vector<1x32x128xbf16> to vector<32x128xbf16>
    %c2_154 = arith.constant 2 : index
    %c0_155 = arith.constant 0 : index
    %c0_156 = arith.constant 0 : index
    %496 = vector.load %arg6[%c2_154, %c0_155, %c0_156] : memref<3x1x128xf32, #tpu.memory_space<vmem>>, vector<1x1x128xf32>
    %497 = vector.shape_cast %496 : vector<1x1x128xf32> to vector<1x128xf32>
    %c1_157 = arith.constant 1 : index
    %c0_158 = arith.constant 0 : index
    %c0_159 = arith.constant 0 : index
    %498 = vector.load %arg4[%c1_157, %c0_158, %c0_159] : memref<2x32x128xbf16, #tpu.memory_space<vmem>>, vector<1x32x128xbf16>
    %499 = vector.shape_cast %498 : vector<1x32x128xbf16> to vector<32x128xbf16>
    %cst_160 = arith.constant 0.000000e+00 : f32
    %500 = vector.broadcast %cst_160 : f32 to vector<8x32xf32>
    %c0_i32_161 = arith.constant 0 : i32
    %c64_i32_162 = arith.constant 64 : i32
    %501 = arith.muli %c0_i32_161, %c64_i32_162 : i32
    %502 = tpu.assume_multiple %501, 8 : i32
    %503 = arith.index_cast %502 : i32 to index
    %c0_163 = arith.constant 0 : index
    %504 = vector.load %arg10[%503, %c0_163] : memref<64x32xbf16, #tpu.memory_space<vmem>>, vector<64x32xbf16>
    %cst_164 = arith.constant dense<0.000000e+00> : vector<64x128xf32>
    %505 = tpu.matmul %504, %499, %cst_164 {dimension_numbers = #tpu.dot_dimension_numbers<[1], [0], [0], [1], [0, 0, 1, 1], [], []>} : vector<64x32xbf16>, vector<32x128xbf16>, vector<64x128xf32> -> vector<64x128xf32>
    %506 = vector.broadcast %497 : vector<1x128xf32> to vector<64x128xf32>
    %507 = arith.addf %505, %506 : vector<64x128xf32>
    %c0_165 = arith.constant 0 : index
    %c0_166 = arith.constant 0 : index
    %508 = vector.load %arg11[%c0_165, %c0_166] : memref<64x128xf32, #tpu.memory_space<vmem>>, vector<64x128xf32>
    tpu.vector_store %arg11[%c0_165, %c0_166], %507 {strides = array<i32>} : memref<64x128xf32, #tpu.memory_space<vmem>>, vector<64x128xf32>,
    %c0_i32_167 = arith.constant 0 : i32
    %c8_i32_168 = arith.constant 8 : i32
    %509 = arith.muli %c0_i32_167, %c8_i32_168 : i32
    %510 = tpu.assume_multiple %509, 8 : i32
    %511 = arith.index_cast %510 : i32 to index
    %c0_169 = arith.constant 0 : index
    %512 = vector.load %arg11[%511, %c0_169] : memref<64x128xf32, #tpu.memory_space<vmem>>, vector<8x128xf32>
    %513 = arith.truncf %500 : vector<8x32xf32> to vector<8x32xbf16>
    %cst_170 = arith.constant dense<0.000000e+00> : vector<8x128xf32>
    %514 = tpu.matmul %513, %495, %cst_170 {dimension_numbers = #tpu.dot_dimension_numbers<[1], [0], [0], [1], [0, 0, 1, 1], [], []>} : vector<8x32xbf16>, vector<32x128xbf16>, vector<8x128xf32> -> vector<8x128xf32>
    %515 = arith.addf %512, %514 : vector<8x128xf32>
    %516 = arith.negf %515 : vector<8x128xf32>
    %517 = math.exp %516 : vector<8x128xf32>
    %cst_171 = arith.constant 1.000000e+00 : f32
    %518 = vector.broadcast %cst_171 : f32 to vector<8x128xf32>
    %519 = arith.addf %518, %517 : vector<8x128xf32>
    %520 = arith.divf %518, %519 : vector<8x128xf32>
    %521 = vector.extract_strided_slice %515 {offsets = [0, 64], sizes = [8, 32], strides = [1, 1]} : vector<8x128xf32> to vector<8x32xf32>
    %522 = math.tanh %521 : vector<8x32xf32>
    %523 = vector.extract_strided_slice %520 {offsets = [0, 0], sizes = [8, 32], strides = [1, 1]} : vector<8x128xf32> to vector<8x32xf32>
    %524 = vector.extract_strided_slice %520 {offsets = [0, 32], sizes = [8, 32], strides = [1, 1]} : vector<8x128xf32> to vector<8x32xf32>
    %525 = vector.extract_strided_slice %520 {offsets = [0, 96], sizes = [8, 32], strides = [1, 1]} : vector<8x128xf32> to vector<8x32xf32>
    %526 = arith.mulf %524, %500 : vector<8x32xf32>
    %527 = arith.mulf %523, %522 : vector<8x32xf32>
    %528 = arith.addf %526, %527 : vector<8x32xf32>
    %529 = math.tanh %528 : vector<8x32xf32>
    %530 = arith.mulf %525, %529 : vector<8x32xf32>
    %c8_i32_172 = arith.constant 8 : i32
    %531 = arith.muli %c0_i32_161, %c8_i32_172 : i32
    %532 = arith.addi %531, %c0_i32_167 : i32
    %533 = arith.sitofp %532 : i32 to f32
    %534 = vector.broadcast %533 : f32 to vector<8x1xf32>
    %535 = arith.cmpf ogt, %0, %534 : vector<8x1xf32>
    %536 = arith.extui %535 : vector<8x1xi1> to vector<8x1xi32>
    %537 = arith.sitofp %536 : vector<8x1xi32> to vector<8x1xf32>
    %538 = vector.broadcast %537 : vector<8x1xf32> to vector<8x32xf32>
    %539 = arith.mulf %538, %530 : vector<8x32xf32>
    %540 = arith.addf %500, %539 : vector<8x32xf32>
    %c1_i32_173 = arith.constant 1 : i32
    %c8_i32_174 = arith.constant 8 : i32
    %541 = arith.muli %c1_i32_173, %c8_i32_174 : i32
    %542 = tpu.assume_multiple %541, 8 : i32
    %543 = arith.index_cast %542 : i32 to index
    %c0_175 = arith.constant 0 : index
    %544 = vector.load %arg11[%543, %c0_175] : memref<64x128xf32, #tpu.memory_space<vmem>>, vector<8x128xf32>
    %545 = arith.truncf %530 : vector<8x32xf32> to vector<8x32xbf16>
    %cst_176 = arith.constant dense<0.000000e+00> : vector<8x128xf32>
    %546 = tpu.matmul %545, %495, %cst_176 {dimension_numbers = #tpu.dot_dimension_numbers<[1], [0], [0], [1], [0, 0, 1, 1], [], []>} : vector<8x32xbf16>, vector<32x128xbf16>, vector<8x128xf32> -> vector<8x128xf32>
    %547 = arith.addf %544, %546 : vector<8x128xf32>
    %548 = arith.negf %547 : vector<8x128xf32>
    %549 = math.exp %548 : vector<8x128xf32>
    %cst_177 = arith.constant 1.000000e+00 : f32
    %550 = vector.broadcast %cst_177 : f32 to vector<8x128xf32>
    %551 = arith.addf %550, %549 : vector<8x128xf32>
    %552 = arith.divf %550, %551 : vector<8x128xf32>
    %553 = vector.extract_strided_slice %547 {offsets = [0, 64], sizes = [8, 32], strides = [1, 1]} : vector<8x128xf32> to vector<8x32xf32>
    %554 = math.tanh %553 : vector<8x32xf32>
    %555 = vector.extract_strided_slice %552 {offsets = [0, 0], sizes = [8, 32], strides = [1, 1]} : vector<8x128xf32> to vector<8x32xf32>
    %556 = vector.extract_strided_slice %552 {offsets = [0, 32], sizes = [8, 32], strides = [1, 1]} : vector<8x128xf32> to vector<8x32xf32>
    %557 = vector.extract_strided_slice %552 {offsets = [0, 96], sizes = [8, 32], strides = [1, 1]} : vector<8x128xf32> to vector<8x32xf32>
    %558 = arith.mulf %556, %528 : vector<8x32xf32>
    %559 = arith.mulf %555, %554 : vector<8x32xf32>
    %560 = arith.addf %558, %559 : vector<8x32xf32>
    %561 = math.tanh %560 : vector<8x32xf32>
    %562 = arith.mulf %557, %561 : vector<8x32xf32>
    %c8_i32_178 = arith.constant 8 : i32
    %563 = arith.muli %c0_i32_161, %c8_i32_178 : i32
    %564 = arith.addi %563, %c1_i32_173 : i32
    %565 = arith.sitofp %564 : i32 to f32
    %566 = vector.broadcast %565 : f32 to vector<8x1xf32>
    %567 = arith.cmpf ogt, %0, %566 : vector<8x1xf32>
    %568 = arith.extui %567 : vector<8x1xi1> to vector<8x1xi32>
    %569 = arith.sitofp %568 : vector<8x1xi32> to vector<8x1xf32>
    %570 = vector.broadcast %569 : vector<8x1xf32> to vector<8x32xf32>
    %571 = arith.mulf %570, %562 : vector<8x32xf32>
    %572 = arith.addf %540, %571 : vector<8x32xf32>
    %c2_i32_179 = arith.constant 2 : i32
    %c8_i32_180 = arith.constant 8 : i32
    %573 = arith.muli %c2_i32_179, %c8_i32_180 : i32
    %574 = tpu.assume_multiple %573, 8 : i32
    %575 = arith.index_cast %574 : i32 to index
    %c0_181 = arith.constant 0 : index
    %576 = vector.load %arg11[%575, %c0_181] : memref<64x128xf32, #tpu.memory_space<vmem>>, vector<8x128xf32>
    %577 = arith.truncf %562 : vector<8x32xf32> to vector<8x32xbf16>
    %cst_182 = arith.constant dense<0.000000e+00> : vector<8x128xf32>
    %578 = tpu.matmul %577, %495, %cst_182 {dimension_numbers = #tpu.dot_dimension_numbers<[1], [0], [0], [1], [0, 0, 1, 1], [], []>} : vector<8x32xbf16>, vector<32x128xbf16>, vector<8x128xf32> -> vector<8x128xf32>
    %579 = arith.addf %576, %578 : vector<8x128xf32>
    %580 = arith.negf %579 : vector<8x128xf32>
    %581 = math.exp %580 : vector<8x128xf32>
    %cst_183 = arith.constant 1.000000e+00 : f32
    %582 = vector.broadcast %cst_183 : f32 to vector<8x128xf32>
    %583 = arith.addf %582, %581 : vector<8x128xf32>
    %584 = arith.divf %582, %583 : vector<8x128xf32>
    %585 = vector.extract_strided_slice %579 {offsets = [0, 64], sizes = [8, 32], strides = [1, 1]} : vector<8x128xf32> to vector<8x32xf32>
    %586 = math.tanh %585 : vector<8x32xf32>
    %587 = vector.extract_strided_slice %584 {offsets = [0, 0], sizes = [8, 32], strides = [1, 1]} : vector<8x128xf32> to vector<8x32xf32>
    %588 = vector.extract_strided_slice %584 {offsets = [0, 32], sizes = [8, 32], strides = [1, 1]} : vector<8x128xf32> to vector<8x32xf32>
    %589 = vector.extract_strided_slice %584 {offsets = [0, 96], sizes = [8, 32], strides = [1, 1]} : vector<8x128xf32> to vector<8x32xf32>
    %590 = arith.mulf %588, %560 : vector<8x32xf32>
    %591 = arith.mulf %587, %586 : vector<8x32xf32>
    %592 = arith.addf %590, %591 : vector<8x32xf32>
    %593 = math.tanh %592 : vector<8x32xf32>
    %594 = arith.mulf %589, %593 : vector<8x32xf32>
    %c8_i32_184 = arith.constant 8 : i32
    %595 = arith.muli %c0_i32_161, %c8_i32_184 : i32
    %596 = arith.addi %595, %c2_i32_179 : i32
    %597 = arith.sitofp %596 : i32 to f32
    %598 = vector.broadcast %597 : f32 to vector<8x1xf32>
    %599 = arith.cmpf ogt, %0, %598 : vector<8x1xf32>
    %600 = arith.extui %599 : vector<8x1xi1> to vector<8x1xi32>
    %601 = arith.sitofp %600 : vector<8x1xi32> to vector<8x1xf32>
    %602 = vector.broadcast %601 : vector<8x1xf32> to vector<8x32xf32>
    %603 = arith.mulf %602, %594 : vector<8x32xf32>
    %604 = arith.addf %572, %603 : vector<8x32xf32>
    %c3_i32_185 = arith.constant 3 : i32
    %c8_i32_186 = arith.constant 8 : i32
    %605 = arith.muli %c3_i32_185, %c8_i32_186 : i32
    %606 = tpu.assume_multiple %605, 8 : i32
    %607 = arith.index_cast %606 : i32 to index
    %c0_187 = arith.constant 0 : index
    %608 = vector.load %arg11[%607, %c0_187] : memref<64x128xf32, #tpu.memory_space<vmem>>, vector<8x128xf32>
    %609 = arith.truncf %594 : vector<8x32xf32> to vector<8x32xbf16>
    %cst_188 = arith.constant dense<0.000000e+00> : vector<8x128xf32>
    %610 = tpu.matmul %609, %495, %cst_188 {dimension_numbers = #tpu.dot_dimension_numbers<[1], [0], [0], [1], [0, 0, 1, 1], [], []>} : vector<8x32xbf16>, vector<32x128xbf16>, vector<8x128xf32> -> vector<8x128xf32>
    %611 = arith.addf %608, %610 : vector<8x128xf32>
    %612 = arith.negf %611 : vector<8x128xf32>
    %613 = math.exp %612 : vector<8x128xf32>
    %cst_189 = arith.constant 1.000000e+00 : f32
    %614 = vector.broadcast %cst_189 : f32 to vector<8x128xf32>
    %615 = arith.addf %614, %613 : vector<8x128xf32>
    %616 = arith.divf %614, %615 : vector<8x128xf32>
    %617 = vector.extract_strided_slice %611 {offsets = [0, 64], sizes = [8, 32], strides = [1, 1]} : vector<8x128xf32> to vector<8x32xf32>
    %618 = math.tanh %617 : vector<8x32xf32>
    %619 = vector.extract_strided_slice %616 {offsets = [0, 0], sizes = [8, 32], strides = [1, 1]} : vector<8x128xf32> to vector<8x32xf32>
    %620 = vector.extract_strided_slice %616 {offsets = [0, 32], sizes = [8, 32], strides = [1, 1]} : vector<8x128xf32> to vector<8x32xf32>
    %621 = vector.extract_strided_slice %616 {offsets = [0, 96], sizes = [8, 32], strides = [1, 1]} : vector<8x128xf32> to vector<8x32xf32>
    %622 = arith.mulf %620, %592 : vector<8x32xf32>
    %623 = arith.mulf %619, %618 : vector<8x32xf32>
    %624 = arith.addf %622, %623 : vector<8x32xf32>
    %625 = math.tanh %624 : vector<8x32xf32>
    %626 = arith.mulf %621, %625 : vector<8x32xf32>
    %c8_i32_190 = arith.constant 8 : i32
    %627 = arith.muli %c0_i32_161, %c8_i32_190 : i32
    %628 = arith.addi %627, %c3_i32_185 : i32
    %629 = arith.sitofp %628 : i32 to f32
    %630 = vector.broadcast %629 : f32 to vector<8x1xf32>
    %631 = arith.cmpf ogt, %0, %630 : vector<8x1xf32>
    %632 = arith.extui %631 : vector<8x1xi1> to vector<8x1xi32>
    %633 = arith.sitofp %632 : vector<8x1xi32> to vector<8x1xf32>
    %634 = vector.broadcast %633 : vector<8x1xf32> to vector<8x32xf32>
    %635 = arith.mulf %634, %626 : vector<8x32xf32>
    %636 = arith.addf %604, %635 : vector<8x32xf32>
    %c4_i32_191 = arith.constant 4 : i32
    %c8_i32_192 = arith.constant 8 : i32
    %637 = arith.muli %c4_i32_191, %c8_i32_192 : i32
    %638 = tpu.assume_multiple %637, 8 : i32
    %639 = arith.index_cast %638 : i32 to index
    %c0_193 = arith.constant 0 : index
    %640 = vector.load %arg11[%639, %c0_193] : memref<64x128xf32, #tpu.memory_space<vmem>>, vector<8x128xf32>
    %641 = arith.truncf %626 : vector<8x32xf32> to vector<8x32xbf16>
    %cst_194 = arith.constant dense<0.000000e+00> : vector<8x128xf32>
    %642 = tpu.matmul %641, %495, %cst_194 {dimension_numbers = #tpu.dot_dimension_numbers<[1], [0], [0], [1], [0, 0, 1, 1], [], []>} : vector<8x32xbf16>, vector<32x128xbf16>, vector<8x128xf32> -> vector<8x128xf32>
    %643 = arith.addf %640, %642 : vector<8x128xf32>
    %644 = arith.negf %643 : vector<8x128xf32>
    %645 = math.exp %644 : vector<8x128xf32>
    %cst_195 = arith.constant 1.000000e+00 : f32
    %646 = vector.broadcast %cst_195 : f32 to vector<8x128xf32>
    %647 = arith.addf %646, %645 : vector<8x128xf32>
    %648 = arith.divf %646, %647 : vector<8x128xf32>
    %649 = vector.extract_strided_slice %643 {offsets = [0, 64], sizes = [8, 32], strides = [1, 1]} : vector<8x128xf32> to vector<8x32xf32>
    %650 = math.tanh %649 : vector<8x32xf32>
    %651 = vector.extract_strided_slice %648 {offsets = [0, 0], sizes = [8, 32], strides = [1, 1]} : vector<8x128xf32> to vector<8x32xf32>
    %652 = vector.extract_strided_slice %648 {offsets = [0, 32], sizes = [8, 32], strides = [1, 1]} : vector<8x128xf32> to vector<8x32xf32>
    %653 = vector.extract_strided_slice %648 {offsets = [0, 96], sizes = [8, 32], strides = [1, 1]} : vector<8x128xf32> to vector<8x32xf32>
    %654 = arith.mulf %652, %624 : vector<8x32xf32>
    %655 = arith.mulf %651, %650 : vector<8x32xf32>
    %656 = arith.addf %654, %655 : vector<8x32xf32>
    %657 = math.tanh %656 : vector<8x32xf32>
    %658 = arith.mulf %653, %657 : vector<8x32xf32>
    %c8_i32_196 = arith.constant 8 : i32
    %659 = arith.muli %c0_i32_161, %c8_i32_196 : i32
    %660 = arith.addi %659, %c4_i32_191 : i32
    %661 = arith.sitofp %660 : i32 to f32
    %662 = vector.broadcast %661 : f32 to vector<8x1xf32>
    %663 = arith.cmpf ogt, %0, %662 : vector<8x1xf32>
    %664 = arith.extui %663 : vector<8x1xi1> to vector<8x1xi32>
    %665 = arith.sitofp %664 : vector<8x1xi32> to vector<8x1xf32>
    %666 = vector.broadcast %665 : vector<8x1xf32> to vector<8x32xf32>
    %667 = arith.mulf %666, %658 : vector<8x32xf32>
    %668 = arith.addf %636, %667 : vector<8x32xf32>
    %c5_i32_197 = arith.constant 5 : i32
    %c8_i32_198 = arith.constant 8 : i32
    %669 = arith.muli %c5_i32_197, %c8_i32_198 : i32
    %670 = tpu.assume_multiple %669, 8 : i32
    %671 = arith.index_cast %670 : i32 to index
    %c0_199 = arith.constant 0 : index
    %672 = vector.load %arg11[%671, %c0_199] : memref<64x128xf32, #tpu.memory_space<vmem>>, vector<8x128xf32>
    %673 = arith.truncf %658 : vector<8x32xf32> to vector<8x32xbf16>
    %cst_200 = arith.constant dense<0.000000e+00> : vector<8x128xf32>
    %674 = tpu.matmul %673, %495, %cst_200 {dimension_numbers = #tpu.dot_dimension_numbers<[1], [0], [0], [1], [0, 0, 1, 1], [], []>} : vector<8x32xbf16>, vector<32x128xbf16>, vector<8x128xf32> -> vector<8x128xf32>
    %675 = arith.addf %672, %674 : vector<8x128xf32>
    %676 = arith.negf %675 : vector<8x128xf32>
    %677 = math.exp %676 : vector<8x128xf32>
    %cst_201 = arith.constant 1.000000e+00 : f32
    %678 = vector.broadcast %cst_201 : f32 to vector<8x128xf32>
    %679 = arith.addf %678, %677 : vector<8x128xf32>
    %680 = arith.divf %678, %679 : vector<8x128xf32>
    %681 = vector.extract_strided_slice %675 {offsets = [0, 64], sizes = [8, 32], strides = [1, 1]} : vector<8x128xf32> to vector<8x32xf32>
    %682 = math.tanh %681 : vector<8x32xf32>
    %683 = vector.extract_strided_slice %680 {offsets = [0, 0], sizes = [8, 32], strides = [1, 1]} : vector<8x128xf32> to vector<8x32xf32>
    %684 = vector.extract_strided_slice %680 {offsets = [0, 32], sizes = [8, 32], strides = [1, 1]} : vector<8x128xf32> to vector<8x32xf32>
    %685 = vector.extract_strided_slice %680 {offsets = [0, 96], sizes = [8, 32], strides = [1, 1]} : vector<8x128xf32> to vector<8x32xf32>
    %686 = arith.mulf %684, %656 : vector<8x32xf32>
    %687 = arith.mulf %683, %682 : vector<8x32xf32>
    %688 = arith.addf %686, %687 : vector<8x32xf32>
    %689 = math.tanh %688 : vector<8x32xf32>
    %690 = arith.mulf %685, %689 : vector<8x32xf32>
    %c8_i32_202 = arith.constant 8 : i32
    %691 = arith.muli %c0_i32_161, %c8_i32_202 : i32
    %692 = arith.addi %691, %c5_i32_197 : i32
    %693 = arith.sitofp %692 : i32 to f32
    %694 = vector.broadcast %693 : f32 to vector<8x1xf32>
    %695 = arith.cmpf ogt, %0, %694 : vector<8x1xf32>
    %696 = arith.extui %695 : vector<8x1xi1> to vector<8x1xi32>
    %697 = arith.sitofp %696 : vector<8x1xi32> to vector<8x1xf32>
    %698 = vector.broadcast %697 : vector<8x1xf32> to vector<8x32xf32>
    %699 = arith.mulf %698, %690 : vector<8x32xf32>
    %700 = arith.addf %668, %699 : vector<8x32xf32>
    %c6_i32_203 = arith.constant 6 : i32
    %c8_i32_204 = arith.constant 8 : i32
    %701 = arith.muli %c6_i32_203, %c8_i32_204 : i32
    %702 = tpu.assume_multiple %701, 8 : i32
    %703 = arith.index_cast %702 : i32 to index
    %c0_205 = arith.constant 0 : index
    %704 = vector.load %arg11[%703, %c0_205] : memref<64x128xf32, #tpu.memory_space<vmem>>, vector<8x128xf32>
    %705 = arith.truncf %690 : vector<8x32xf32> to vector<8x32xbf16>
    %cst_206 = arith.constant dense<0.000000e+00> : vector<8x128xf32>
    %706 = tpu.matmul %705, %495, %cst_206 {dimension_numbers = #tpu.dot_dimension_numbers<[1], [0], [0], [1], [0, 0, 1, 1], [], []>} : vector<8x32xbf16>, vector<32x128xbf16>, vector<8x128xf32> -> vector<8x128xf32>
    %707 = arith.addf %704, %706 : vector<8x128xf32>
    %708 = arith.negf %707 : vector<8x128xf32>
    %709 = math.exp %708 : vector<8x128xf32>
    %cst_207 = arith.constant 1.000000e+00 : f32
    %710 = vector.broadcast %cst_207 : f32 to vector<8x128xf32>
    %711 = arith.addf %710, %709 : vector<8x128xf32>
    %712 = arith.divf %710, %711 : vector<8x128xf32>
    %713 = vector.extract_strided_slice %707 {offsets = [0, 64], sizes = [8, 32], strides = [1, 1]} : vector<8x128xf32> to vector<8x32xf32>
    %714 = math.tanh %713 : vector<8x32xf32>
    %715 = vector.extract_strided_slice %712 {offsets = [0, 0], sizes = [8, 32], strides = [1, 1]} : vector<8x128xf32> to vector<8x32xf32>
    %716 = vector.extract_strided_slice %712 {offsets = [0, 32], sizes = [8, 32], strides = [1, 1]} : vector<8x128xf32> to vector<8x32xf32>
    %717 = vector.extract_strided_slice %712 {offsets = [0, 96], sizes = [8, 32], strides = [1, 1]} : vector<8x128xf32> to vector<8x32xf32>
    %718 = arith.mulf %716, %688 : vector<8x32xf32>
    %719 = arith.mulf %715, %714 : vector<8x32xf32>
    %720 = arith.addf %718, %719 : vector<8x32xf32>
    %721 = math.tanh %720 : vector<8x32xf32>
    %722 = arith.mulf %717, %721 : vector<8x32xf32>
    %c8_i32_208 = arith.constant 8 : i32
    %723 = arith.muli %c0_i32_161, %c8_i32_208 : i32
    %724 = arith.addi %723, %c6_i32_203 : i32
    %725 = arith.sitofp %724 : i32 to f32
    %726 = vector.broadcast %725 : f32 to vector<8x1xf32>
    %727 = arith.cmpf ogt, %0, %726 : vector<8x1xf32>
    %728 = arith.extui %727 : vector<8x1xi1> to vector<8x1xi32>
    %729 = arith.sitofp %728 : vector<8x1xi32> to vector<8x1xf32>
    %730 = vector.broadcast %729 : vector<8x1xf32> to vector<8x32xf32>
    %731 = arith.mulf %730, %722 : vector<8x32xf32>
    %732 = arith.addf %700, %731 : vector<8x32xf32>
    %c7_i32_209 = arith.constant 7 : i32
    %c8_i32_210 = arith.constant 8 : i32
    %733 = arith.muli %c7_i32_209, %c8_i32_210 : i32
    %734 = tpu.assume_multiple %733, 8 : i32
    %735 = arith.index_cast %734 : i32 to index
    %c0_211 = arith.constant 0 : index
    %736 = vector.load %arg11[%735, %c0_211] : memref<64x128xf32, #tpu.memory_space<vmem>>, vector<8x128xf32>
    %737 = arith.truncf %722 : vector<8x32xf32> to vector<8x32xbf16>
    %cst_212 = arith.constant dense<0.000000e+00> : vector<8x128xf32>
    %738 = tpu.matmul %737, %495, %cst_212 {dimension_numbers = #tpu.dot_dimension_numbers<[1], [0], [0], [1], [0, 0, 1, 1], [], []>} : vector<8x32xbf16>, vector<32x128xbf16>, vector<8x128xf32> -> vector<8x128xf32>
    %739 = arith.addf %736, %738 : vector<8x128xf32>
    %740 = arith.negf %739 : vector<8x128xf32>
    %741 = math.exp %740 : vector<8x128xf32>
    %cst_213 = arith.constant 1.000000e+00 : f32
    %742 = vector.broadcast %cst_213 : f32 to vector<8x128xf32>
    %743 = arith.addf %742, %741 : vector<8x128xf32>
    %744 = arith.divf %742, %743 : vector<8x128xf32>
    %745 = vector.extract_strided_slice %739 {offsets = [0, 64], sizes = [8, 32], strides = [1, 1]} : vector<8x128xf32> to vector<8x32xf32>
    %746 = math.tanh %745 : vector<8x32xf32>
    %747 = vector.extract_strided_slice %744 {offsets = [0, 0], sizes = [8, 32], strides = [1, 1]} : vector<8x128xf32> to vector<8x32xf32>
    %748 = vector.extract_strided_slice %744 {offsets = [0, 32], sizes = [8, 32], strides = [1, 1]} : vector<8x128xf32> to vector<8x32xf32>
    %749 = vector.extract_strided_slice %744 {offsets = [0, 96], sizes = [8, 32], strides = [1, 1]} : vector<8x128xf32> to vector<8x32xf32>
    %750 = arith.mulf %748, %720 : vector<8x32xf32>
    %751 = arith.mulf %747, %746 : vector<8x32xf32>
    %752 = arith.addf %750, %751 : vector<8x32xf32>
    %753 = math.tanh %752 : vector<8x32xf32>
    %754 = arith.mulf %749, %753 : vector<8x32xf32>
    %c8_i32_214 = arith.constant 8 : i32
    %755 = arith.muli %c0_i32_161, %c8_i32_214 : i32
    %756 = arith.addi %755, %c7_i32_209 : i32
    %757 = arith.sitofp %756 : i32 to f32
    %758 = vector.broadcast %757 : f32 to vector<8x1xf32>
    %759 = arith.cmpf ogt, %0, %758 : vector<8x1xf32>
    %760 = arith.extui %759 : vector<8x1xi1> to vector<8x1xi32>
    %761 = arith.sitofp %760 : vector<8x1xi32> to vector<8x1xf32>
    %762 = vector.broadcast %761 : vector<8x1xf32> to vector<8x32xf32>
    %763 = arith.mulf %762, %754 : vector<8x32xf32>
    %764 = arith.addf %732, %763 : vector<8x32xf32>
    %c8_i32_215 = arith.constant 8 : i32
    %c1_i32_216 = arith.constant 1 : i32
    %cst_217 = arith.constant 0.000000e+00 : f32
    %765 = vector.broadcast %cst_217 : f32 to vector<8x1xf32>
    %766 = arith.cmpf ogt, %0, %765 : vector<8x1xf32>
    %cst_218 = arith.constant 1.000000e+00 : f32
    %767 = vector.broadcast %cst_218 : f32 to vector<8x1xf32>
    %768 = arith.select %766, %0, %767 : vector<8x1xi1>, vector<8x1xf32>
    %769 = vector.broadcast %768 : vector<8x1xf32> to vector<8x32xf32>
    %770 = arith.divf %764, %769 : vector<8x32xf32>
    %c0_219 = arith.constant 0 : index
    %c0_220 = arith.constant 0 : index
    %771 = vector.load %arg7[%c0_219, %c0_220] : memref<32x5xf32, #tpu.memory_space<vmem>>, vector<32x5xf32>
    %cst_221 = arith.constant dense<0.000000e+00> : vector<8x5xf32>
    %772 = tpu.matmul %770, %771, %cst_221 {dimension_numbers = #tpu.dot_dimension_numbers<[1], [0], [0], [1], [0, 0, 1, 1], [], []>} : vector<8x32xf32>, vector<32x5xf32>, vector<8x5xf32> -> vector<8x5xf32>
    %c0_222 = arith.constant 0 : index
    %c0_223 = arith.constant 0 : index
    %773 = vector.load %arg8[%c0_222, %c0_223] : memref<1x5xf32, #tpu.memory_space<vmem>>, vector<1x5xf32>
    %774 = vector.broadcast %773 : vector<1x5xf32> to vector<8x5xf32>
    %775 = arith.addf %772, %774 : vector<8x5xf32>
    %c0_224 = arith.constant 0 : index
    %c0_225 = arith.constant 0 : index
    %776 = vector.load %arg9[%c0_224, %c0_225] : memref<8x5xf32, #tpu.memory_space<vmem>>, vector<8x5xf32>
    tpu.vector_store %arg9[%c0_224, %c0_225], %775 {strides = array<i32>} : memref<8x5xf32, #tpu.memory_space<vmem>>, vector<8x5xf32>,
    return
  }
  func.func @transform_0(%arg0: i32) -> (i32, i32) {
    %c0_i32 = arith.constant 0 : i32
    %c0_i32_0 = arith.constant 0 : i32
    return %arg0, %c0_i32 : i32, i32
  }
  func.func @transform_1(%arg0: i32) -> (i32, i32) {
    %c0_i32 = arith.constant 0 : i32
    %c0_i32_0 = arith.constant 0 : i32
    return %arg0, %c0_i32 : i32, i32
  }
  func.func @transform_2(%arg0: i32) -> (i32, i32) {
    %c0_i32 = arith.constant 0 : i32
    %c0_i32_0 = arith.constant 0 : i32
    %c0_i32_1 = arith.constant 0 : i32
    return %c0_i32, %c0_i32_0 : i32, i32
  }
  func.func @transform_3(%arg0: i32) -> (i32, i32, i32) {
    %c0_i32 = arith.constant 0 : i32
    %c0_i32_0 = arith.constant 0 : i32
    %c0_i32_1 = arith.constant 0 : i32
    %c0_i32_2 = arith.constant 0 : i32
    return %c0_i32, %c0_i32_0, %c0_i32_1 : i32, i32, i32
  }
  func.func @transform_4(%arg0: i32) -> (i32, i32, i32) {
    %c0_i32 = arith.constant 0 : i32
    %c0_i32_0 = arith.constant 0 : i32
    %c0_i32_1 = arith.constant 0 : i32
    %c0_i32_2 = arith.constant 0 : i32
    return %c0_i32, %c0_i32_0, %c0_i32_1 : i32, i32, i32
  }
  func.func @transform_5(%arg0: i32) -> (i32, i32, i32) {
    %c0_i32 = arith.constant 0 : i32
    %c0_i32_0 = arith.constant 0 : i32
    %c0_i32_1 = arith.constant 0 : i32
    %c0_i32_2 = arith.constant 0 : i32
    return %c0_i32, %c0_i32_0, %c0_i32_1 : i32, i32, i32
  }
  func.func @transform_6(%arg0: i32) -> (i32, i32) {
    %c0_i32 = arith.constant 0 : i32
    %c0_i32_0 = arith.constant 0 : i32
    %c0_i32_1 = arith.constant 0 : i32
    return %c0_i32, %c0_i32_0 : i32, i32
  }
  func.func @transform_7(%arg0: i32) -> (i32, i32) {
    %c0_i32 = arith.constant 0 : i32
    %c0_i32_0 = arith.constant 0 : i32
    %c0_i32_1 = arith.constant 0 : i32
    return %c0_i32, %c0_i32_0 : i32, i32
  }
  func.func @transform_8(%arg0: i32) -> (i32, i32) {
    %c0_i32 = arith.constant 0 : i32
    %c0_i32_0 = arith.constant 0 : i32
    return %arg0, %c0_i32 : i32, i32
  }
}

</mosaic_0001>

<llo_original>
// kernel: tpu_custom_call.1
$region0: #{tpu_custom_call.1}
  #allocation0 [shape = 'u32[]', space=smem, size = 0x4, offset = 0x4, fixed_abs, tag = 'smem constant byte address 0x4 - core index']
  #allocation1 [shape = 'u32[72,128]{1,0:T(1,128)}', space=vmem, size = 0x9000, scoped, tag = 'internal scratch']
  #allocation2 [shape = 'bf16[64,32]{1,0:T(8,128)(2,1)}', space=vmem, size = 0x4000, scoped, tag = 'scratch operand']
  #allocation3 [shape = 'f32[64,128]{1,0:T(8,128)}', space=vmem, size = 0x8000, scoped, tag = 'scratch operand']
  %s0 = inlined_call_operand.vmem [shape: bf16[64,4], index: 0, kind: input, shape index: {}]
  %s1 = inlined_call_operand.vmem [shape: f32[8,1], index: 1, kind: input, shape index: {}]
  %s2 = inlined_call_operand.vmem [shape: bf16[4,128], index: 2, kind: input, shape index: {}]
  %s3 = inlined_call_operand.hbm [shape: bf16[2,32,128], index: 3, kind: input, shape index: {}]
  %s4 = inlined_call_operand.vmem [shape: bf16[3,32,128], index: 4, kind: input, shape index: {}]
  %s5 = inlined_call_operand.vmem [shape: f32[3,1,128], index: 5, kind: input, shape index: {}]
  %s6 = inlined_call_operand.vmem [shape: f32[32,5], index: 6, kind: input, shape index: {}]
  %s7 = inlined_call_operand.vmem [shape: f32[1,5], index: 7, kind: input, shape index: {}]
  %s8 = inlined_call_operand.hbm [shape: f32[8,5], index: 8, kind: output, shape index: {}]
  %s9 = sld [smem:[#allocation0]]
  $region46: #{tpu_custom_call.1} parent=0
    _
  %s11 = ssub.s32 1, %s9
  %s12 = scalar_select 0, %s11, %s9
  $region1: #{tpu_custom_call.1} parent=0
    #allocation4 [shape = 'u8[16384]{0}', space=vmem, size = 0x4000, scoped, tag = 'input window, operand 3, single buffered']
    #allocation5 [shape = 's32[1]{0}', space=sflag, size = 0x4, scoped, tag = 'scoped memory for tpu_custom_call.1']
    #allocation6 [shape = 's32[1]{0}', space=sflag, size = 0x4, scoped, tag = 'scoped memory for tpu_custom_call.1']
    #allocation7 [shape = 'u8[4096]{0}', space=vmem, size = 0x1000, scoped, tag = 'output window, operand 0, single buffered']
    %13 = vsyncpa [#allocation5], 0
    %14 = vsyncpa [#allocation6], 0
    // Predicated region
    $region2: #{tpu_custom_call.1} parent=1 // pred_check
      _
    $region3: #{tpu_custom_call.1} parent=1 // pred_check_branch
      %16 = sbr.rel (0) target = $region5
    $region4: #{tpu_custom_call.1} parent=1 // pred_region
      _
    $region5: #{tpu_custom_call.1} parent=1 // pred_fallthru
      _
    // Predicated region
    $region6: #{tpu_custom_call.1} parent=1 // pred_check
      _
    $region7: #{tpu_custom_call.1} parent=1 // pred_check_branch
      %18 = sbr.rel (0) target = $region9
    $region8: #{tpu_custom_call.1} parent=1 // pred_region
      _
    $region9: #{tpu_custom_call.1} parent=1 // pred_fallthru
      _
    // Predicated region
    $region10: #{tpu_custom_call.1} parent=1 // pred_check
      _
    $region11: #{tpu_custom_call.1} parent=1 // pred_check_branch
      %20 = sbr.rel (0) target = $region13
    $region12: #{tpu_custom_call.1} parent=1 // pred_region
      _
    $region13: #{tpu_custom_call.1} parent=1 // pred_fallthru
      _
    // Predicated region
    $region14: #{tpu_custom_call.1} parent=1 // pred_check
      _
    $region15: #{tpu_custom_call.1} parent=1 // pred_check_branch
      %22 = sbr.rel (0) target = $region17
    $region16: #{tpu_custom_call.1} parent=1 // pred_region
      %24 = vsyncadd [#allocation5], 0
      %s25 = sshll.u32 %s3, 4
      %s26 = int_to_ptr.hbm [resolvable:$true] %s25
      %s27 = sshll.u32 [#allocation4], 4
      %s28 = int_to_ptr.vmem [resolvable:$true] %s27
      %33 = dma.hbm_to_vmem [thread:$0]  %s26, 512, %s28, [#allocation5], 64, 64, 4
    $region17: #{tpu_custom_call.1} parent=1 // pred_fallthru
      _
    // Predicated region
    $region18: #{tpu_custom_call.1} parent=1 // pred_check
      _
    $region19: #{tpu_custom_call.1} parent=1 // pred_check_branch
      %35 = sbr.rel (0) target = $region21
    $region20: #{tpu_custom_call.1} parent=1 // pred_region
      _
    $region21: #{tpu_custom_call.1} parent=1 // pred_fallthru
      _
    // Predicated region
    $region22: #{tpu_custom_call.1} parent=1 // pred_check
      _
    $region23: #{tpu_custom_call.1} parent=1 // pred_check_branch
      %37 = sbr.rel (0) target = $region25
    $region24: #{tpu_custom_call.1} parent=1 // pred_region
      _
    $region25: #{tpu_custom_call.1} parent=1 // pred_fallthru
      _
    // Predicated region
    $region26: #{tpu_custom_call.1} parent=1 // pred_check
      _
    $region27: #{tpu_custom_call.1} parent=1 // pred_check_branch
      %39 = sbr.rel (0) target = $region29
    $region28: #{tpu_custom_call.1} parent=1 // pred_region
      _
    $region29: #{tpu_custom_call.1} parent=1 // pred_fallthru
      _
    // Predicated region
    $region30: #{tpu_custom_call.1} parent=1 // pred_check
      _
    $region31: #{tpu_custom_call.1} parent=1 // pred_check_branch
      %41 = sbr.rel (0) target = $region33
    $region32: #{tpu_custom_call.1} parent=1 // pred_region
      _
    $region33: #{tpu_custom_call.1} parent=1 // pred_fallthru
      _
    // Predicated region
    $region34: #{tpu_custom_call.1} parent=1 // pred_check
      _
    $region35: #{tpu_custom_call.1} parent=1 // pred_check_branch
      %43 = sbr.rel (0) target = $region37
    $region36: #{tpu_custom_call.1} parent=1 // pred_region
      %45 = dma.done [#allocation5], 512
    $region37: #{tpu_custom_call.1} parent=1 // pred_fallthru
      _
    %v47 = vld [vmem:[%s1] sm:$0xff]
    %v48 = vld [vmem:[%s4] sm:$0xf]
    %v49 = vld [vmem:[%s4 + $0x4] sm:$0xf]
    %v50 = vld [vmem:[%s4 + $0x8] sm:$0xf]
    %v51 = vld [vmem:[%s4 + $0xc] sm:$0xf]
    %v52 = vld [vmem:[%s5] sm:$0x1]
    %v53 = vld [vmem:[%s2] sm:$0x3]
    %v54 = vld [vmem:[%s0] sm:$0xf]
    %v55 = vld [vmem:[%s0 + $0x4] sm:$0xf]
    %v56 = vld [vmem:[%s0 + $0x8] sm:$0xf]
    %v57 = vld [vmem:[%s0 + $0xc] sm:$0xf]
    %v58 = vld [vmem:[%s0 + $0x10] sm:$0xf]
    %v59 = vld [vmem:[%s0 + $0x14] sm:$0xf]
    %v60 = vld [vmem:[%s0 + $0x18] sm:$0xf]
    %v61 = vld [vmem:[%s0 + $0x1c] sm:$0xf]
    %v63 = vperm.slane %v52, 0
    %v73 = vunpack.c.l.b16 %v54
    %v74 = vunpack.c.l.b16 %v55
    %v75 = vunpack.c.l.b16 %v56
    %v76 = vunpack.c.l.b16 %v57
    %v77 = vunpack.c.l.b16 %v58
    %v78 = vunpack.c.l.b16 %v59
    %v79 = vunpack.c.l.b16 %v60
    %v80 = vunpack.c.l.b16 %v61
    %v81 = vpack.c.b16 %v74, %v73
    %v82 = vpack.c.b16 %v76, %v75
    %v83 = vpack.c.b16 %v78, %v77
    %v84 = vpack.c.b16 %v80, %v79
    %vm85 = vcmask 31744
    %v87 = vsel %vm85, %v81, 0
    %v90 = vsel %vm85, %v82, 0
    %v93 = vsel %vm85, %v83, 0
    %v96 = vsel %vm85, %v84, 0
    %vm98 = vcmask 1041408
    %v100 = vsel %vm98, %v53, 0
    %102 = vmatpush.bf16.msra.mxu0 0
    %103 = vmatpush.bf16.msra.mxu0 0
    %104 = vmatpush.bf16.msra.mxu0 0
    %105 = vmatpush.bf16.msra.mxu0 0
    %106 = vmatpush.bf16.msra.mxu0 0
    %107 = vmatpush.bf16.msra.mxu0 0
    %108 = vmatpush.bf16.msra.mxu0 0
    %109 = vmatpush.bf16.msra.mxu0 %v100
    %110 = vmatmul.bf16.gmra.mxu0 %v87
    %v111 = vpop.f32.mrf.mxu0
    %v112 = vadd.f32 %v63, %v111
    %v113 = vpop.f32.mrf.mxu0
    %v114 = vadd.f32 %v63, %v113
    %115 = vmatmul.bf16.gmra.mxu0 %v90
    %v116 = vpop.f32.mrf.mxu0
    %v117 = vadd.f32 %v63, %v116
    %v118 = vpop.f32.mrf.mxu0
    %v119 = vadd.f32 %v63, %v118
    %120 = vmatmul.bf16.gmra.mxu0 %v93
    %v121 = vpop.f32.mrf.mxu0
    %v122 = vadd.f32 %v63, %v121
    %v123 = vpop.f32.mrf.mxu0
    %v124 = vadd.f32 %v63, %v123
    %125 = vmatmul.bf16.gmra.mxu0 %v96
    %v126 = vpop.f32.mrf.mxu0
    %v127 = vadd.f32 %v63, %v126
    %v128 = vpop.f32.mrf.mxu0
    %v129 = vadd.f32 %v63, %v128
    %130 = vdwg.mxu0
    %131 = vst [vmem:[#allocation3] sm:$0xff] %v112
    %132 = vst [vmem:[#allocation3 + $0x8] sm:$0xff] %v114
    %133 = vst [vmem:[#allocation3 + $0x10] sm:$0xff] %v117
    %134 = vst [vmem:[#allocation3 + $0x18] sm:$0xff] %v119
    %135 = vst [vmem:[#allocation3 + $0x20] sm:$0xff] %v122
    %136 = vst [vmem:[#allocation3 + $0x28] sm:$0xff] %v124
    %137 = vst [vmem:[#allocation3 + $0x30] sm:$0xff] %v127
    %138 = vst [vmem:[#allocation3 + $0x38] sm:$0xff] %v129
    %v139 = vld [vmem:[#allocation3] sm:$0xff]
    %v144 = vunpack.c.l.b16 %v48
    %v145 = vunpack.c.l.b16 %v49
    %v146 = vunpack.c.l.b16 %v50
    %v147 = vunpack.c.l.b16 %v51
    %v148 = vpack.c.b16 %v145, %v144
    %v149 = vpack.c.b16 %v147, %v146
    %vm152 = vcmask 261120
    %v154 = vsel %vm152, 0, 0
    %156 = vmatpush.bf16.msra.mxu0 0
    %157 = vmatpush.bf16.msra.mxu0 0
    %158 = vmatpush.bf16.msra.mxu0 0
    %159 = vmatpush.bf16.msra.mxu0 0
    %160 = vmatpush.bf16.msra.mxu0 0
    %161 = vmatpush.bf16.msra.mxu0 0
    %162 = vmatpush.bf16.msra.mxu0 %v149
    %163 = vmatpush.bf16.msra.mxu0 %v148
    %164 = vmatmul.bf16.gmra.mxu0 %v154
    %v165 = vpop.f32.mrf.mxu0
    %v166 = vadd.f32 0.0, %v165
    %v167 = vpop.f32.mrf.mxu0
    %168 = vdwg.mxu0
    %v169 = vadd.f32 %v139, %v166
    %v170 = vxor.u32 %v169, 2147483648
    %v171 = vmul.f32 %v170, 1.442695
    %v172 = vpow.pop %v171
    %v173 = vadd.f32 %v172, 1.0
    %v174 = vrcp.pop %v173
    %v175 = vmul.f32 %v173, %v174
    %v176 = vsub.f32 1.0, %v175
    %v177 = vmul.f32 %v174, %v176
    %v178 = vadd.f32 %v174, %v177
    %vm179 = vweird.f32 %v173
    %vm180 = vweird.f32 %v174
    %vm181 = vmor %vm179, %vm180
    %v182 = vsel %vm181, %v174, %v178
    %v183 = vand.u32 2147483647, %v173
    %vm184 = vcmp.eq.f32.partialorder %v183, 8.507059e+37
    %v185 = vand.u32 %v173, 2147483648
    %v186 = vor.u32 1.1754944e-38, %v185
    %v187 = vsel %vm184, %v186, %v182
    %v188 = vmul.f32 1.0, %v187
    %v189 = vtanh.pop %v169
    %v190 = vmul.f32 %v188, 0.0
    %192 = vrot.lane.b32.xlu0 %v189, 64
    %v193 = vpop.permute.xlu0 %192
    %v195 = vmul.f32 %v188, %v193
    %197 = vrot.lane.b32.xlu0 %v195, 32
    %v198 = vpop.permute.xlu0 %197
    %v200 = vadd.f32 %v190, %v198
    %v201 = vtanh.pop %v200
    %203 = vrot.lane.b32.xlu0 %v201, 64
    %v204 = vpop.permute.xlu0 %203
    %v206 = vmul.f32 %v188, %v204
    %v207 = vpack.c.bf16 %v206, %v206
    %209 = vrot.lane.b32.xlu0 %v207, 32
    %v210 = vpop.permute.xlu0 %209
    %vm212 = vcmask 257024
    %213 = vst.msk [vmem:[#allocation2] sm:$0xf] %vm212, %v210
    %s214 = scalar_lea.vmem [#allocation3], 8
    %v215 = vld [vmem:[%s214] sm:$0xff]
    %v216 = vunpack.c.l.b16 %v207
    %v217 = vpack.c.b16 %v216, %v216
    %218 = vrot.lane.b32.xlu0 %v217, 32
    %v219 = vpop.permute.xlu0 %218
    %v221 = vsel %vm152, %v219, 0
    %223 = vmatpush.bf16.msra.mxu0 0
    %224 = vmatpush.bf16.msra.mxu0 0
    %225 = vmatpush.bf16.msra.mxu0 0
    %226 = vmatpush.bf16.msra.mxu0 0
    %227 = vmatpush.bf16.msra.mxu0 0
    %228 = vmatpush.bf16.msra.mxu0 0
    %229 = vmatpush.bf16.msra.mxu0 %v149
    %230 = vmatpush.bf16.msra.mxu0 %v148
    %231 = vmatmul.bf16.gmra.mxu0 %v221
    %v232 = vpop.f32.mrf.mxu0
    %v233 = vadd.f32 0.0, %v232
    %v234 = vpop.f32.mrf.mxu0
    %235 = vdwg.mxu0
    %v236 = vadd.f32 %v215, %v233
    %v237 = vxor.u32 %v236, 2147483648
    %v238 = vmul.f32 %v237, 1.442695
    %v239 = vpow.pop %v238
    %v240 = vadd.f32 %v239, 1.0
    %v241 = vrcp.pop %v240
    %v242 = vmul.f32 %v240, %v241
    %v243 = vsub.f32 1.0, %v242
    %v244 = vmul.f32 %v241, %v243
    %v245 = vadd.f32 %v241, %v244
    %vm246 = vweird.f32 %v240
    %vm247 = vweird.f32 %v241
    %vm248 = vmor %vm246, %vm247
    %v249 = vsel %vm248, %v241, %v245
    %v250 = vand.u32 2147483647, %v240
    %vm251 = vcmp.eq.f32.partialorder %v250, 8.507059e+37
    %v252 = vand.u32 %v240, 2147483648
    %v253 = vor.u32 1.1754944e-38, %v252
    %v254 = vsel %vm251, %v253, %v249
    %v255 = vmul.f32 1.0, %v254
    %v256 = vtanh.pop %v236
    %v257 = vmul.f32 %v255, %v200
    %259 = vrot.lane.b32.xlu0 %v256, 64
    %v260 = vpop.permute.xlu0 %259
    %v262 = vmul.f32 %v255, %v260
    %264 = vrot.lane.b32.xlu0 %v262, 32
    %v265 = vpop.permute.xlu0 %264
    %v267 = vadd.f32 %v257, %v265
    %v268 = vtanh.pop %v267
    %270 = vrot.lane.b32.xlu0 %v268, 64
    %v271 = vpop.permute.xlu0 %270
    %v273 = vmul.f32 %v255, %v271
    %v274 = vpack.c.bf16 %v273, %v273
    %276 = vrot.lane.b32.xlu0 %v274, 32
    %v277 = vpop.permute.xlu0 %276
    %s279 = scalar_lea.vmem [#allocation2], 4
    %280 = vst.msk [vmem:[%s279] sm:$0xf] %vm212, %v277
    %s281 = scalar_lea.vmem [#allocation3], 16
    %v282 = vld [vmem:[%s281] sm:$0xff]
    %v283 = vunpack.c.l.b16 %v274
    %v284 = vpack.c.b16 %v283, %v283
    %285 = vrot.lane.b32.xlu0 %v284, 32
    %v286 = vpop.permute.xlu0 %285
    %v288 = vsel %vm152, %v286, 0
    %290 = vmatpush.bf16.msra.mxu0 0
    %291 = vmatpush.bf16.msra.mxu0 0
    %292 = vmatpush.bf16.msra.mxu0 0
    %293 = vmatpush.bf16.msra.mxu0 0
    %294 = vmatpush.bf16.msra.mxu0 0
    %295 = vmatpush.bf16.msra.mxu0 0
    %296 = vmatpush.bf16.msra.mxu0 %v149
    %297 = vmatpush.bf16.msra.mxu0 %v148
    %298 = vmatmul.bf16.gmra.mxu0 %v288
    %v299 = vpop.f32.mrf.mxu0
    %v300 = vadd.f32 0.0, %v299
    %v301 = vpop.f32.mrf.mxu0
    %302 = vdwg.mxu0
    %v303 = vadd.f32 %v282, %v300
    %v304 = vxor.u32 %v303, 2147483648
    %v305 = vmul.f32 %v304, 1.442695
    %v306 = vpow.pop %v305
    %v307 = vadd.f32 %v306, 1.0
    %v308 = vrcp.pop %v307
    %v309 = vmul.f32 %v307, %v308
    %v310 = vsub.f32 1.0, %v309
    %v311 = vmul.f32 %v308, %v310
    %v312 = vadd.f32 %v308, %v311
    %vm313 = vweird.f32 %v307
    %vm314 = vweird.f32 %v308
    %vm315 = vmor %vm313, %vm314
    %v316 = vsel %vm315, %v308, %v312
    %v317 = vand.u32 2147483647, %v307
    %vm318 = vcmp.eq.f32.partialorder %v317, 8.507059e+37
    %v319 = vand.u32 %v307, 2147483648
    %v320 = vor.u32 1.1754944e-38, %v319
    %v321 = vsel %vm318, %v320, %v316
    %v322 = vmul.f32 1.0, %v321
    %v323 = vtanh.pop %v303
    %v324 = vmul.f32 %v322, %v267
    %326 = vrot.lane.b32.xlu0 %v323, 64
    %v327 = vpop.permute.xlu0 %326
    %v329 = vmul.f32 %v322, %v327
    %331 = vrot.lane.b32.xlu0 %v329, 32
    %v332 = vpop.permute.xlu0 %331
    %v334 = vadd.f32 %v324, %v332
    %v335 = vtanh.pop %v334
    %337 = vrot.lane.b32.xlu0 %v335, 64
    %v338 = vpop.permute.xlu0 %337
    %v340 = vmul.f32 %v322, %v338
    %v341 = vpack.c.bf16 %v340, %v340
    %343 = vrot.lane.b32.xlu0 %v341, 32
    %v344 = vpop.permute.xlu0 %343
    %s346 = scalar_lea.vmem [#allocation2], 8
    %347 = vst.msk [vmem:[%s346] sm:$0xf] %vm212, %v344
    %s348 = scalar_lea.vmem [#allocation3], 24
    %v349 = vld [vmem:[%s348] sm:$0xff]
    %v350 = vunpack.c.l.b16 %v341
    %v351 = vpack.c.b16 %v350, %v350
    %352 = vrot.lane.b32.xlu0 %v351, 32
    %v353 = vpop.permute.xlu0 %352
    %v355 = vsel %vm152, %v353, 0
    %357 = vmatpush.bf16.msra.mxu0 0
    %358 = vmatpush.bf16.msra.mxu0 0
    %359 = vmatpush.bf16.msra.mxu0 0
    %360 = vmatpush.bf16.msra.mxu0 0
    %361 = vmatpush.bf16.msra.mxu0 0
    %362 = vmatpush.bf16.msra.mxu0 0
    %363 = vmatpush.bf16.msra.mxu0 %v149
    %364 = vmatpush.bf16.msra.mxu0 %v148
    %365 = vmatmul.bf16.gmra.mxu0 %v355
    %v366 = vpop.f32.mrf.mxu0
    %v367 = vadd.f32 0.0, %v366
    %v368 = vpop.f32.mrf.mxu0
    %369 = vdwg.mxu0
    %v370 = vadd.f32 %v349, %v367
    %v371 = vxor.u32 %v370, 2147483648
    %v372 = vmul.f32 %v371, 1.442695
    %v373 = vpow.pop %v372
    %v374 = vadd.f32 %v373, 1.0
    %v375 = vrcp.pop %v374
    %v376 = vmul.f32 %v374, %v375
    %v377 = vsub.f32 1.0, %v376
    %v378 = vmul.f32 %v375, %v377
    %v379 = vadd.f32 %v375, %v378
    %vm380 = vweird.f32 %v374
    %vm381 = vweird.f32 %v375
    %vm382 = vmor %vm380, %vm381
    %v383 = vsel %vm382, %v375, %v379
    %v384 = vand.u32 2147483647, %v374
    %vm385 = vcmp.eq.f32.partialorder %v384, 8.507059e+37
    %v386 = vand.u32 %v374, 2147483648
    %v387 = vor.u32 1.1754944e-38, %v386
    %v388 = vsel %vm385, %v387, %v383
    %v389 = vmul.f32 1.0, %v388
    %v390 = vtanh.pop %v370
    %v391 = vmul.f32 %v389, %v334
    %393 = vrot.lane.b32.xlu0 %v390, 64
    %v394 = vpop.permute.xlu0 %393
    %v396 = vmul.f32 %v389, %v394
    %398 = vrot.lane.b32.xlu0 %v396, 32
    %v399 = vpop.permute.xlu0 %398
    %v401 = vadd.f32 %v391, %v399
    %v402 = vtanh.pop %v401
    %404 = vrot.lane.b32.xlu0 %v402, 64
    %v405 = vpop.permute.xlu0 %404
    %v407 = vmul.f32 %v389, %v405
    %v408 = vpack.c.bf16 %v407, %v407
    %410 = vrot.lane.b32.xlu0 %v408, 32
    %v411 = vpop.permute.xlu0 %410
    %s413 = scalar_lea.vmem [#allocation2], 12
    %414 = vst.msk [vmem:[%s413] sm:$0xf] %vm212, %v411
    %s415 = scalar_lea.vmem [#allocation3], 32
    %v416 = vld [vmem:[%s415] sm:$0xff]
    %v417 = vunpack.c.l.b16 %v408
    %v418 = vpack.c.b16 %v417, %v417
    %419 = vrot.lane.b32.xlu0 %v418, 32
    %v420 = vpop.permute.xlu0 %419
    %v422 = vsel %vm152, %v420, 0
    %424 = vmatpush.bf16.msra.mxu0 0
    %425 = vmatpush.bf16.msra.mxu0 0
    %426 = vmatpush.bf16.msra.mxu0 0
    %427 = vmatpush.bf16.msra.mxu0 0
    %428 = vmatpush.bf16.msra.mxu0 0
    %429 = vmatpush.bf16.msra.mxu0 0
    %430 = vmatpush.bf16.msra.mxu0 %v149
    %431 = vmatpush.bf16.msra.mxu0 %v148
    %432 = vmatmul.bf16.gmra.mxu0 %v422
    %v433 = vpop.f32.mrf.mxu0
    %v434 = vadd.f32 0.0, %v433
    %v435 = vpop.f32.mrf.mxu0
    %436 = vdwg.mxu0
    %v437 = vadd.f32 %v416, %v434
    %v438 = vxor.u32 %v437, 2147483648
    %v439 = vmul.f32 %v438, 1.442695
    %v440 = vpow.pop %v439
    %v441 = vadd.f32 %v440, 1.0
    %v442 = vrcp.pop %v441
    %v443 = vmul.f32 %v441, %v442
    %v444 = vsub.f32 1.0, %v443
    %v445 = vmul.f32 %v442, %v444
    %v446 = vadd.f32 %v442, %v445
    %vm447 = vweird.f32 %v441
    %vm448 = vweird.f32 %v442
    %vm449 = vmor %vm447, %vm448
    %v450 = vsel %vm449, %v442, %v446
    %v451 = vand.u32 2147483647, %v441
    %vm452 = vcmp.eq.f32.partialorder %v451, 8.507059e+37
    %v453 = vand.u32 %v441, 2147483648
    %v454 = vor.u32 1.1754944e-38, %v453
    %v455 = vsel %vm452, %v454, %v450
    %v456 = vmul.f32 1.0, %v455
    %v457 = vtanh.pop %v437
    %v458 = vmul.f32 %v456, %v401
    %460 = vrot.lane.b32.xlu0 %v457, 64
    %v461 = vpop.permute.xlu0 %460
    %v463 = vmul.f32 %v456, %v461
    %465 = vrot.lane.b32.xlu0 %v463, 32
    %v466 = vpop.permute.xlu0 %465
    %v468 = vadd.f32 %v458, %v466
    %v469 = vtanh.pop %v468
    %471 = vrot.lane.b32.xlu0 %v469, 64
    %v472 = vpop.permute.xlu0 %471
    %v474 = vmul.f32 %v456, %v472
    %v475 = vpack.c.bf16 %v474, %v474
    %477 = vrot.lane.b32.xlu0 %v475, 32
    %v478 = vpop.permute.xlu0 %477
    %s480 = scalar_lea.vmem [#allocation2], 16
    %481 = vst.msk [vmem:[%s480] sm:$0xf] %vm212, %v478
    %s482 = scalar_lea.vmem [#allocation3], 40
    %v483 = vld [vmem:[%s482] sm:$0xff]
    %v484 = vunpack.c.l.b16 %v475
    %v485 = vpack.c.b16 %v484, %v484
    %486 = vrot.lane.b32.xlu0 %v485, 32
    %v487 = vpop.permute.xlu0 %486
    %v489 = vsel %vm152, %v487, 0
    %491 = vmatpush.bf16.msra.mxu0 0
    %492 = vmatpush.bf16.msra.mxu0 0
    %493 = vmatpush.bf16.msra.mxu0 0
    %494 = vmatpush.bf16.msra.mxu0 0
    %495 = vmatpush.bf16.msra.mxu0 0
    %496 = vmatpush.bf16.msra.mxu0 0
    %497 = vmatpush.bf16.msra.mxu0 %v149
    %498 = vmatpush.bf16.msra.mxu0 %v148
    %499 = vmatmul.bf16.gmra.mxu0 %v489
    %v500 = vpop.f32.mrf.mxu0
    %v501 = vadd.f32 0.0, %v500
    %v502 = vpop.f32.mrf.mxu0
    %503 = vdwg.mxu0
    %v504 = vadd.f32 %v483, %v501
    %v505 = vxor.u32 %v504, 2147483648
    %v506 = vmul.f32 %v505, 1.442695
    %v507 = vpow.pop %v506
    %v508 = vadd.f32 %v507, 1.0
    %v509 = vrcp.pop %v508
    %v510 = vmul.f32 %v508, %v509
    %v511 = vsub.f32 1.0, %v510
    %v512 = vmul.f32 %v509, %v511
    %v513 = vadd.f32 %v509, %v512
    %vm514 = vweird.f32 %v508
    %vm515 = vweird.f32 %v509
    %vm516 = vmor %vm514, %vm515
    %v517 = vsel %vm516, %v509, %v513
    %v518 = vand.u32 2147483647, %v508
    %vm519 = vcmp.eq.f32.partialorder %v518, 8.507059e+37
    %v520 = vand.u32 %v508, 2147483648
    %v521 = vor.u32 1.1754944e-38, %v520
    %v522 = vsel %vm519, %v521, %v517
    %v523 = vmul.f32 1.0, %v522
    %v524 = vtanh.pop %v504
    %v525 = vmul.f32 %v523, %v468
    %527 = vrot.lane.b32.xlu0 %v524, 64
    %v528 = vpop.permute.xlu0 %527
    %v530 = vmul.f32 %v523, %v528
    %532 = vrot.lane.b32.xlu0 %v530, 32
    %v533 = vpop.permute.xlu0 %532
    %v535 = vadd.f32 %v525, %v533
    %v536 = vtanh.pop %v535
    %538 = vrot.lane.b32.xlu0 %v536, 64
    %v539 = vpop.permute.xlu0 %538
    %v541 = vmul.f32 %v523, %v539
    %v542 = vpack.c.bf16 %v541, %v541
    %544 = vrot.lane.b32.xlu0 %v542, 32
    %v545 = vpop.permute.xlu0 %544
    %s547 = scalar_lea.vmem [#allocation2], 20
    %548 = vst.msk [vmem:[%s547] sm:$0xf] %vm212, %v545
    %s549 = scalar_lea.vmem [#allocation3], 48
    %v550 = vld [vmem:[%s549] sm:$0xff]
    %v551 = vunpack.c.l.b16 %v542
    %v552 = vpack.c.b16 %v551, %v551
    %553 = vrot.lane.b32.xlu0 %v552, 32
    %v554 = vpop.permute.xlu0 %553
    %v556 = vsel %vm152, %v554, 0
    %558 = vmatpush.bf16.msra.mxu0 0
    %559 = vmatpush.bf16.msra.mxu0 0
    %560 = vmatpush.bf16.msra.mxu0 0
    %561 = vmatpush.bf16.msra.mxu0 0
    %562 = vmatpush.bf16.msra.mxu0 0
    %563 = vmatpush.bf16.msra.mxu0 0
    %564 = vmatpush.bf16.msra.mxu0 %v149
    %565 = vmatpush.bf16.msra.mxu0 %v148
    %566 = vmatmul.bf16.gmra.mxu0 %v556
    %v567 = vpop.f32.mrf.mxu0
    %v568 = vadd.f32 0.0, %v567
    %v569 = vpop.f32.mrf.mxu0
    %570 = vdwg.mxu0
    %v571 = vadd.f32 %v550, %v568
    %v572 = vxor.u32 %v571, 2147483648
    %v573 = vmul.f32 %v572, 1.442695
    %v574 = vpow.pop %v573
    %v575 = vadd.f32 %v574, 1.0
    %v576 = vrcp.pop %v575
    %v577 = vmul.f32 %v575, %v576
    %v578 = vsub.f32 1.0, %v577
    %v579 = vmul.f32 %v576, %v578
    %v580 = vadd.f32 %v576, %v579
    %vm581 = vweird.f32 %v575
    %vm582 = vweird.f32 %v576
    %vm583 = vmor %vm581, %vm582
    %v584 = vsel %vm583, %v576, %v580
    %v585 = vand.u32 2147483647, %v575
    %vm586 = vcmp.eq.f32.partialorder %v585, 8.507059e+37
    %v587 = vand.u32 %v575, 2147483648
    %v588 = vor.u32 1.1754944e-38, %v587
    %v589 = vsel %vm586, %v588, %v584
    %v590 = vmul.f32 1.0, %v589
    %v591 = vtanh.pop %v571
    %v592 = vmul.f32 %v590, %v535
    %594 = vrot.lane.b32.xlu0 %v591, 64
    %v595 = vpop.permute.xlu0 %594
    %v597 = vmul.f32 %v590, %v595
    %599 = vrot.lane.b32.xlu0 %v597, 32
    %v600 = vpop.permute.xlu0 %599
    %v602 = vadd.f32 %v592, %v600
    %v603 = vtanh.pop %v602
    %605 = vrot.lane.b32.xlu0 %v603, 64
    %v606 = vpop.permute.xlu0 %605
    %v608 = vmul.f32 %v590, %v606
    %v609 = vpack.c.bf16 %v608, %v608
    %611 = vrot.lane.b32.xlu0 %v609, 32
    %v612 = vpop.permute.xlu0 %611
    %s614 = scalar_lea.vmem [#allocation2], 24
    %615 = vst.msk [vmem:[%s614] sm:$0xf] %vm212, %v612
    %s616 = scalar_lea.vmem [#allocation3], 56
    %v617 = vld [vmem:[%s616] sm:$0xff]
    %v618 = vunpack.c.l.b16 %v609
    %v619 = vpack.c.b16 %v618, %v618
    %620 = vrot.lane.b32.xlu0 %v619, 32
    %v621 = vpop.permute.xlu0 %620
    %v623 = vsel %vm152, %v621, 0
    %625 = vmatpush.bf16.msra.mxu0 0
    %626 = vmatpush.bf16.msra.mxu0 0
    %627 = vmatpush.bf16.msra.mxu0 0
    %628 = vmatpush.bf16.msra.mxu0 0
    %629 = vmatpush.bf16.msra.mxu0 0
    %630 = vmatpush.bf16.msra.mxu0 0
    %631 = vmatpush.bf16.msra.mxu0 %v149
    %632 = vmatpush.bf16.msra.mxu0 %v148
    %633 = vmatmul.bf16.gmra.mxu0 %v623
    %v634 = vpop.f32.mrf.mxu0
    %v635 = vadd.f32 0.0, %v634
    %v636 = vpop.f32.mrf.mxu0
    %637 = vdwg.mxu0
    %v638 = vadd.f32 %v617, %v635
    %v639 = vxor.u32 %v638, 2147483648
    %v640 = vmul.f32 %v639, 1.442695
    %v641 = vpow.pop %v640
    %v642 = vadd.f32 %v641, 1.0
    %v643 = vrcp.pop %v642
    %v644 = vmul.f32 %v642, %v643
    %v645 = vsub.f32 1.0, %v644
    %v646 = vmul.f32 %v643, %v645
    %v647 = vadd.f32 %v643, %v646
    %vm648 = vweird.f32 %v642
    %vm649 = vweird.f32 %v643
    %vm650 = vmor %vm648, %vm649
    %v651 = vsel %vm650, %v643, %v647
    %v652 = vand.u32 2147483647, %v642
    %vm653 = vcmp.eq.f32.partialorder %v652, 8.507059e+37
    %v654 = vand.u32 %v642, 2147483648
    %v655 = vor.u32 1.1754944e-38, %v654
    %v656 = vsel %vm653, %v655, %v651
    %v657 = vmul.f32 1.0, %v656
    %v658 = vtanh.pop %v638
    %v659 = vmul.f32 %v657, %v602
    %661 = vrot.lane.b32.xlu0 %v658, 64
    %v662 = vpop.permute.xlu0 %661
    %v664 = vmul.f32 %v657, %v662
    %666 = vrot.lane.b32.xlu0 %v664, 32
    %v667 = vpop.permute.xlu0 %666
    %v669 = vadd.f32 %v659, %v667
    %v670 = vtanh.pop %v669
    %672 = vrot.lane.b32.xlu0 %v670, 64
    %v673 = vpop.permute.xlu0 %672
    %v675 = vmul.f32 %v657, %v673
    %v676 = vpack.c.bf16 %v675, %v675
    %678 = vrot.lane.b32.xlu0 %v676, 32
    %v679 = vpop.permute.xlu0 %678
    %s681 = scalar_lea.vmem [#allocation2], 28
    %682 = vst.msk [vmem:[%s681] sm:$0xf] %vm212, %v679
    %s683 = scalar_lea.vmem %s4, 16
    %v684 = vld [vmem:[%s683] sm:$0xf]
    %v685 = vld [vmem:[%s683 + $0x4] sm:$0xf]
    %v686 = vld [vmem:[%s683 + $0x8] sm:$0xf]
    %v687 = vld [vmem:[%s683 + $0xc] sm:$0xf]
    %s688 = scalar_lea.vmem %s5, 1
    %v689 = vld [vmem:[%s688] sm:$0x1]
    %v690 = vld [vmem:[#allocation4] sm:$0xf]
    %v691 = vld [vmem:[#allocation4 + $0x4] sm:$0xf]
    %v692 = vld [vmem:[#allocation4 + $0x8] sm:$0xf]
    %v693 = vld [vmem:[#allocation4 + $0xc] sm:$0xf]
    %v694 = vld [vmem:[#allocation2] sm:$0xf]
    %v695 = vld [vmem:[#allocation2 + $0x4] sm:$0xf]
    %v696 = vld [vmem:[#allocation2 + $0x8] sm:$0xf]
    %v697 = vld [vmem:[#allocation2 + $0xc] sm:$0xf]
    %v698 = vld [vmem:[#allocation2 + $0x10] sm:$0xf]
    %v699 = vld [vmem:[#allocation2 + $0x14] sm:$0xf]
    %v700 = vld [vmem:[#allocation2 + $0x18] sm:$0xf]
    %v701 = vld [vmem:[#allocation2 + $0x1c] sm:$0xf]
    %v703 = vperm.slane %v689, 0
    %v713 = vunpack.c.l.b16 %v694
    %v714 = vunpack.c.l.b16 %v695
    %v715 = vunpack.c.l.b16 %v696
    %v716 = vunpack.c.l.b16 %v697
    %v717 = vunpack.c.l.b16 %v698
    %v718 = vunpack.c.l.b16 %v699
    %v719 = vunpack.c.l.b16 %v700
    %v720 = vunpack.c.l.b16 %v701
    %v721 = vpack.c.b16 %v714, %v713
    %v722 = vpack.c.b16 %v716, %v715
    %v723 = vpack.c.b16 %v718, %v717
    %v724 = vpack.c.b16 %v720, %v719
    %v729 = vunpack.c.l.b16 %v690
    %v730 = vunpack.c.l.b16 %v691
    %v731 = vunpack.c.l.b16 %v692
    %v732 = vunpack.c.l.b16 %v693
    %v733 = vpack.c.b16 %v730, %v729
    %v734 = vpack.c.b16 %v732, %v731
    %v738 = vsel %vm152, %v721, 0
    %v741 = vsel %vm152, %v722, 0
    %v744 = vsel %vm152, %v723, 0
    %v747 = vsel %vm152, %v724, 0
    %749 = vmatpush.bf16.msra.mxu0 0
    %750 = vmatpush.bf16.msra.mxu0 0
    %751 = vmatpush.bf16.msra.mxu0 0
    %752 = vmatpush.bf16.msra.mxu0 0
    %753 = vmatpush.bf16.msra.mxu0 0
    %754 = vmatpush.bf16.msra.mxu0 0
    %755 = vmatpush.bf16.msra.mxu0 %v734
    %756 = vmatpush.bf16.msra.mxu0 %v733
    %757 = vmatmul.bf16.gmra.mxu0 %v738
    %v758 = vpop.f32.mrf.mxu0
    %v759 = vadd.f32 %v703, %v758
    %v760 = vpop.f32.mrf.mxu0
    %v761 = vadd.f32 %v703, %v760
    %762 = vmatmul.bf16.gmra.mxu0 %v741
    %v763 = vpop.f32.mrf.mxu0
    %v764 = vadd.f32 %v703, %v763
    %v765 = vpop.f32.mrf.mxu0
    %v766 = vadd.f32 %v703, %v765
    %767 = vmatmul.bf16.gmra.mxu0 %v744
    %v768 = vpop.f32.mrf.mxu0
    %v769 = vadd.f32 %v703, %v768
    %v770 = vpop.f32.mrf.mxu0
    %v771 = vadd.f32 %v703, %v770
    %772 = vmatmul.bf16.gmra.mxu0 %v747
    %v773 = vpop.f32.mrf.mxu0
    %v774 = vadd.f32 %v703, %v773
    %v775 = vpop.f32.mrf.mxu0
    %v776 = vadd.f32 %v703, %v775
    %777 = vdwg.mxu0
    %778 = vst [vmem:[#allocation3] sm:$0xff] %v759
    %779 = vst [vmem:[#allocation3 + $0x8] sm:$0xff] %v761
    %780 = vst [vmem:[#allocation3 + $0x10] sm:$0xff] %v764
    %781 = vst [vmem:[#allocation3 + $0x18] sm:$0xff] %v766
    %782 = vst [vmem:[#allocation3 + $0x20] sm:$0xff] %v769
    %783 = vst [vmem:[#allocation3 + $0x28] sm:$0xff] %v771
    %784 = vst [vmem:[#allocation3 + $0x30] sm:$0xff] %v774
    %785 = vst [vmem:[#allocation3 + $0x38] sm:$0xff] %v776
    %v786 = vld [vmem:[#allocation3] sm:$0xff]
    %v791 = vunpack.c.l.b16 %v684
    %v792 = vunpack.c.l.b16 %v685
    %v793 = vunpack.c.l.b16 %v686
    %v794 = vunpack.c.l.b16 %v687
    %v795 = vpack.c.b16 %v792, %v791
    %v796 = vpack.c.b16 %v794, %v793
    %799 = vmatpush.bf16.msra.mxu0 0
    %800 = vmatpush.bf16.msra.mxu0 0
    %801 = vmatpush.bf16.msra.mxu0 0
    %802 = vmatpush.bf16.msra.mxu0 0
    %803 = vmatpush.bf16.msra.mxu0 0
    %804 = vmatpush.bf16.msra.mxu0 0
    %805 = vmatpush.bf16.msra.mxu0 %v796
    %806 = vmatpush.bf16.msra.mxu0 %v795
    %807 = vmatmul.bf16.gmra.mxu0 %v154
    %v808 = vpop.f32.mrf.mxu0
    %v809 = vadd.f32 0.0, %v808
    %v810 = vpop.f32.mrf.mxu0
    %811 = vdwg.mxu0
    %v812 = vadd.f32 %v786, %v809
    %v813 = vxor.u32 %v812, 2147483648
    %v814 = vmul.f32 %v813, 1.442695
    %v815 = vpow.pop %v814
    %v816 = vadd.f32 %v815, 1.0
    %v817 = vrcp.pop %v816
    %v818 = vmul.f32 %v816, %v817
    %v819 = vsub.f32 1.0, %v818
    %v820 = vmul.f32 %v817, %v819
    %v821 = vadd.f32 %v817, %v820
    %vm822 = vweird.f32 %v816
    %vm823 = vweird.f32 %v817
    %vm824 = vmor %vm822, %vm823
    %v825 = vsel %vm824, %v817, %v821
    %v826 = vand.u32 2147483647, %v816
    %vm827 = vcmp.eq.f32.partialorder %v826, 8.507059e+37
    %v828 = vand.u32 %v816, 2147483648
    %v829 = vor.u32 1.1754944e-38, %v828
    %v830 = vsel %vm827, %v829, %v825
    %v831 = vmul.f32 1.0, %v830
    %v832 = vtanh.pop %v812
    %v833 = vmul.f32 %v831, 0.0
    %835 = vrot.lane.b32.xlu0 %v832, 64
    %v836 = vpop.permute.xlu0 %835
    %v838 = vmul.f32 %v831, %v836
    %840 = vrot.lane.b32.xlu0 %v838, 32
    %v841 = vpop.permute.xlu0 %840
    %v843 = vadd.f32 %v833, %v841
    %v844 = vtanh.pop %v843
    %846 = vrot.lane.b32.xlu0 %v844, 64
    %v847 = vpop.permute.xlu0 %846
    %v849 = vmul.f32 %v831, %v847
    %v850 = vpack.c.bf16 %v849, %v849
    %852 = vrot.lane.b32.xlu0 %v850, 32
    %v853 = vpop.permute.xlu0 %852
    %855 = vst.msk [vmem:[#allocation2] sm:$0xf] %vm212, %v853
    %v856 = vld [vmem:[%s214] sm:$0xff]
    %v857 = vunpack.c.l.b16 %v850
    %v858 = vpack.c.b16 %v857, %v857
    %859 = vrot.lane.b32.xlu0 %v858, 32
    %v860 = vpop.permute.xlu0 %859
    %v862 = vsel %vm152, %v860, 0
    %864 = vmatpush.bf16.msra.mxu0 0
    %865 = vmatpush.bf16.msra.mxu0 0
    %866 = vmatpush.bf16.msra.mxu0 0
    %867 = vmatpush.bf16.msra.mxu0 0
    %868 = vmatpush.bf16.msra.mxu0 0
    %869 = vmatpush.bf16.msra.mxu0 0
    %870 = vmatpush.bf16.msra.mxu0 %v796
    %871 = vmatpush.bf16.msra.mxu0 %v795
    %872 = vmatmul.bf16.gmra.mxu0 %v862
    %v873 = vpop.f32.mrf.mxu0
    %v874 = vadd.f32 0.0, %v873
    %v875 = vpop.f32.mrf.mxu0
    %876 = vdwg.mxu0
    %v877 = vadd.f32 %v856, %v874
    %v878 = vxor.u32 %v877, 2147483648
    %v879 = vmul.f32 %v878, 1.442695
    %v880 = vpow.pop %v879
    %v881 = vadd.f32 %v880, 1.0
    %v882 = vrcp.pop %v881
    %v883 = vmul.f32 %v881, %v882
    %v884 = vsub.f32 1.0, %v883
    %v885 = vmul.f32 %v882, %v884
    %v886 = vadd.f32 %v882, %v885
    %vm887 = vweird.f32 %v881
    %vm888 = vweird.f32 %v882
    %vm889 = vmor %vm887, %vm888
    %v890 = vsel %vm889, %v882, %v886
    %v891 = vand.u32 2147483647, %v881
    %vm892 = vcmp.eq.f32.partialorder %v891, 8.507059e+37
    %v893 = vand.u32 %v881, 2147483648
    %v894 = vor.u32 1.1754944e-38, %v893
    %v895 = vsel %vm892, %v894, %v890
    %v896 = vmul.f32 1.0, %v895
    %v897 = vtanh.pop %v877
    %v898 = vmul.f32 %v896, %v843
    %900 = vrot.lane.b32.xlu0 %v897, 64
    %v901 = vpop.permute.xlu0 %900
    %v903 = vmul.f32 %v896, %v901
    %905 = vrot.lane.b32.xlu0 %v903, 32
    %v906 = vpop.permute.xlu0 %905
    %v908 = vadd.f32 %v898, %v906
    %v909 = vtanh.pop %v908
    %911 = vrot.lane.b32.xlu0 %v909, 64
    %v912 = vpop.permute.xlu0 %911
    %v914 = vmul.f32 %v896, %v912
    %v915 = vpack.c.bf16 %v914, %v914
    %917 = vrot.lane.b32.xlu0 %v915, 32
    %v918 = vpop.permute.xlu0 %917
    %920 = vst.msk [vmem:[%s279] sm:$0xf] %vm212, %v918
    %v921 = vld [vmem:[%s281] sm:$0xff]
    %v922 = vunpack.c.l.b16 %v915
    %v923 = vpack.c.b16 %v922, %v922
    %924 = vrot.lane.b32.xlu0 %v923, 32
    %v925 = vpop.permute.xlu0 %924
    %v927 = vsel %vm152, %v925, 0
    %929 = vmatpush.bf16.msra.mxu0 0
    %930 = vmatpush.bf16.msra.mxu0 0
    %931 = vmatpush.bf16.msra.mxu0 0
    %932 = vmatpush.bf16.msra.mxu0 0
    %933 = vmatpush.bf16.msra.mxu0 0
    %934 = vmatpush.bf16.msra.mxu0 0
    %935 = vmatpush.bf16.msra.mxu0 %v796
    %936 = vmatpush.bf16.msra.mxu0 %v795
    %937 = vmatmul.bf16.gmra.mxu0 %v927
    %v938 = vpop.f32.mrf.mxu0
    %v939 = vadd.f32 0.0, %v938
    %v940 = vpop.f32.mrf.mxu0
    %941 = vdwg.mxu0
    %v942 = vadd.f32 %v921, %v939
    %v943 = vxor.u32 %v942, 2147483648
    %v944 = vmul.f32 %v943, 1.442695
    %v945 = vpow.pop %v944
    %v946 = vadd.f32 %v945, 1.0
    %v947 = vrcp.pop %v946
    %v948 = vmul.f32 %v946, %v947
    %v949 = vsub.f32 1.0, %v948
    %v950 = vmul.f32 %v947, %v949
    %v951 = vadd.f32 %v947, %v950
    %vm952 = vweird.f32 %v946
    %vm953 = vweird.f32 %v947
    %vm954 = vmor %vm952, %vm953
    %v955 = vsel %vm954, %v947, %v951
    %v956 = vand.u32 2147483647, %v946
    %vm957 = vcmp.eq.f32.partialorder %v956, 8.507059e+37
    %v958 = vand.u32 %v946, 2147483648
    %v959 = vor.u32 1.1754944e-38, %v958
    %v960 = vsel %vm957, %v959, %v955
    %v961 = vmul.f32 1.0, %v960
    %v962 = vtanh.pop %v942
    %v963 = vmul.f32 %v961, %v908
    %965 = vrot.lane.b32.xlu0 %v962, 64
    %v966 = vpop.permute.xlu0 %965
    %v968 = vmul.f32 %v961, %v966
    %970 = vrot.lane.b32.xlu0 %v968, 32
    %v971 = vpop.permute.xlu0 %970
    %v973 = vadd.f32 %v963, %v971
    %v974 = vtanh.pop %v973
    %976 = vrot.lane.b32.xlu0 %v974, 64
    %v977 = vpop.permute.xlu0 %976
    %v979 = vmul.f32 %v961, %v977
    %v980 = vpack.c.bf16 %v979, %v979
    %982 = vrot.lane.b32.xlu0 %v980, 32
    %v983 = vpop.permute.xlu0 %982
    %985 = vst.msk [vmem:[%s346] sm:$0xf] %vm212, %v983
    %v986 = vld [vmem:[%s348] sm:$0xff]
    %v987 = vunpack.c.l.b16 %v980
    %v988 = vpack.c.b16 %v987, %v987
    %989 = vrot.lane.b32.xlu0 %v988, 32
    %v990 = vpop.permute.xlu0 %989
    %v992 = vsel %vm152, %v990, 0
    %994 = vmatpush.bf16.msra.mxu0 0
    %995 = vmatpush.bf16.msra.mxu0 0
    %996 = vmatpush.bf16.msra.mxu0 0
    %997 = vmatpush.bf16.msra.mxu0 0
    %998 = vmatpush.bf16.msra.mxu0 0
    %999 = vmatpush.bf16.msra.mxu0 0
    %1000 = vmatpush.bf16.msra.mxu0 %v796
    %1001 = vmatpush.bf16.msra.mxu0 %v795
    %1002 = vmatmul.bf16.gmra.mxu0 %v992
    %v1003 = vpop.f32.mrf.mxu0
    %v1004 = vadd.f32 0.0, %v1003
    %v1005 = vpop.f32.mrf.mxu0
    %1006 = vdwg.mxu0
    %v1007 = vadd.f32 %v986, %v1004
    %v1008 = vxor.u32 %v1007, 2147483648
    %v1009 = vmul.f32 %v1008, 1.442695
    %v1010 = vpow.pop %v1009
    %v1011 = vadd.f32 %v1010, 1.0
    %v1012 = vrcp.pop %v1011
    %v1013 = vmul.f32 %v1011, %v1012
    %v1014 = vsub.f32 1.0, %v1013
    %v1015 = vmul.f32 %v1012, %v1014
    %v1016 = vadd.f32 %v1012, %v1015
    %vm1017 = vweird.f32 %v1011
    %vm1018 = vweird.f32 %v1012
    %vm1019 = vmor %vm1017, %vm1018
    %v1020 = vsel %vm1019, %v1012, %v1016
    %v1021 = vand.u32 2147483647, %v1011
    %vm1022 = vcmp.eq.f32.partialorder %v1021, 8.507059e+37
    %v1023 = vand.u32 %v1011, 2147483648
    %v1024 = vor.u32 1.1754944e-38, %v1023
    %v1025 = vsel %vm1022, %v1024, %v1020
    %v1026 = vmul.f32 1.0, %v1025
    %v1027 = vtanh.pop %v1007
    %v1028 = vmul.f32 %v1026, %v973
    %1030 = vrot.lane.b32.xlu0 %v1027, 64
    %v1031 = vpop.permute.xlu0 %1030
    %v1033 = vmul.f32 %v1026, %v1031
    %1035 = vrot.lane.b32.xlu0 %v1033, 32
    %v1036 = vpop.permute.xlu0 %1035
    %v1038 = vadd.f32 %v1028, %v1036
    %v1039 = vtanh.pop %v1038
    %1041 = vrot.lane.b32.xlu0 %v1039, 64
    %v1042 = vpop.permute.xlu0 %1041
    %v1044 = vmul.f32 %v1026, %v1042
    %v1045 = vpack.c.bf16 %v1044, %v1044
    %1047 = vrot.lane.b32.xlu0 %v1045, 32
    %v1048 = vpop.permute.xlu0 %1047
    %1050 = vst.msk [vmem:[%s413] sm:$0xf] %vm212, %v1048
    %v1051 = vld [vmem:[%s415] sm:$0xff]
    %v1052 = vunpack.c.l.b16 %v1045
    %v1053 = vpack.c.b16 %v1052, %v1052
    %1054 = vrot.lane.b32.xlu0 %v1053, 32
    %v1055 = vpop.permute.xlu0 %1054
    %v1057 = vsel %vm152, %v1055, 0
    %1059 = vmatpush.bf16.msra.mxu0 0
    %1060 = vmatpush.bf16.msra.mxu0 0
    %1061 = vmatpush.bf16.msra.mxu0 0
    %1062 = vmatpush.bf16.msra.mxu0 0
    %1063 = vmatpush.bf16.msra.mxu0 0
    %1064 = vmatpush.bf16.msra.mxu0 0
    %1065 = vmatpush.bf16.msra.mxu0 %v796
    %1066 = vmatpush.bf16.msra.mxu0 %v795
    %1067 = vmatmul.bf16.gmra.mxu0 %v1057
    %v1068 = vpop.f32.mrf.mxu0
    %v1069 = vadd.f32 0.0, %v1068
    %v1070 = vpop.f32.mrf.mxu0
    %1071 = vdwg.mxu0
    %v1072 = vadd.f32 %v1051, %v1069
    %v1073 = vxor.u32 %v1072, 2147483648
    %v1074 = vmul.f32 %v1073, 1.442695
    %v1075 = vpow.pop %v1074
    %v1076 = vadd.f32 %v1075, 1.0
    %v1077 = vrcp.pop %v1076
    %v1078 = vmul.f32 %v1076, %v1077
    %v1079 = vsub.f32 1.0, %v1078
    %v1080 = vmul.f32 %v1077, %v1079
    %v1081 = vadd.f32 %v1077, %v1080
    %vm1082 = vweird.f32 %v1076
    %vm1083 = vweird.f32 %v1077
    %vm1084 = vmor %vm1082, %vm1083
    %v1085 = vsel %vm1084, %v1077, %v1081
    %v1086 = vand.u32 2147483647, %v1076
    %vm1087 = vcmp.eq.f32.partialorder %v1086, 8.507059e+37
    %v1088 = vand.u32 %v1076, 2147483648
    %v1089 = vor.u32 1.1754944e-38, %v1088
    %v1090 = vsel %vm1087, %v1089, %v1085
    %v1091 = vmul.f32 1.0, %v1090
    %v1092 = vtanh.pop %v1072
    %v1093 = vmul.f32 %v1091, %v1038
    %1095 = vrot.lane.b32.xlu0 %v1092, 64
    %v1096 = vpop.permute.xlu0 %1095
    %v1098 = vmul.f32 %v1091, %v1096
    %1100 = vrot.lane.b32.xlu0 %v1098, 32
    %v1101 = vpop.permute.xlu0 %1100
    %v1103 = vadd.f32 %v1093, %v1101
    %v1104 = vtanh.pop %v1103
    %1106 = vrot.lane.b32.xlu0 %v1104, 64
    %v1107 = vpop.permute.xlu0 %1106
    %v1109 = vmul.f32 %v1091, %v1107
    %v1110 = vpack.c.bf16 %v1109, %v1109
    %1112 = vrot.lane.b32.xlu0 %v1110, 32
    %v1113 = vpop.permute.xlu0 %1112
    %1115 = vst.msk [vmem:[%s480] sm:$0xf] %vm212, %v1113
    %v1116 = vld [vmem:[%s482] sm:$0xff]
    %v1117 = vunpack.c.l.b16 %v1110
    %v1118 = vpack.c.b16 %v1117, %v1117
    %1119 = vrot.lane.b32.xlu0 %v1118, 32
    %v1120 = vpop.permute.xlu0 %1119
    %v1122 = vsel %vm152, %v1120, 0
    %1124 = vmatpush.bf16.msra.mxu0 0
    %1125 = vmatpush.bf16.msra.mxu0 0
    %1126 = vmatpush.bf16.msra.mxu0 0
    %1127 = vmatpush.bf16.msra.mxu0 0
    %1128 = vmatpush.bf16.msra.mxu0 0
    %1129 = vmatpush.bf16.msra.mxu0 0
    %1130 = vmatpush.bf16.msra.mxu0 %v796
    %1131 = vmatpush.bf16.msra.mxu0 %v795
    %1132 = vmatmul.bf16.gmra.mxu0 %v1122
    %v1133 = vpop.f32.mrf.mxu0
    %v1134 = vadd.f32 0.0, %v1133
    %v1135 = vpop.f32.mrf.mxu0
    %1136 = vdwg.mxu0
    %v1137 = vadd.f32 %v1116, %v1134
    %v1138 = vxor.u32 %v1137, 2147483648
    %v1139 = vmul.f32 %v1138, 1.442695
    %v1140 = vpow.pop %v1139
    %v1141 = vadd.f32 %v1140, 1.0
    %v1142 = vrcp.pop %v1141
    %v1143 = vmul.f32 %v1141, %v1142
    %v1144 = vsub.f32 1.0, %v1143
    %v1145 = vmul.f32 %v1142, %v1144
    %v1146 = vadd.f32 %v1142, %v1145
    %vm1147 = vweird.f32 %v1141
    %vm1148 = vweird.f32 %v1142
    %vm1149 = vmor %vm1147, %vm1148
    %v1150 = vsel %vm1149, %v1142, %v1146
    %v1151 = vand.u32 2147483647, %v1141
    %vm1152 = vcmp.eq.f32.partialorder %v1151, 8.507059e+37
    %v1153 = vand.u32 %v1141, 2147483648
    %v1154 = vor.u32 1.1754944e-38, %v1153
    %v1155 = vsel %vm1152, %v1154, %v1150
    %v1156 = vmul.f32 1.0, %v1155
    %v1157 = vtanh.pop %v1137
    %v1158 = vmul.f32 %v1156, %v1103
    %1160 = vrot.lane.b32.xlu0 %v1157, 64
    %v1161 = vpop.permute.xlu0 %1160
    %v1163 = vmul.f32 %v1156, %v1161
    %1165 = vrot.lane.b32.xlu0 %v1163, 32
    %v1166 = vpop.permute.xlu0 %1165
    %v1168 = vadd.f32 %v1158, %v1166
    %v1169 = vtanh.pop %v1168
    %1171 = vrot.lane.b32.xlu0 %v1169, 64
    %v1172 = vpop.permute.xlu0 %1171
    %v1174 = vmul.f32 %v1156, %v1172
    %v1175 = vpack.c.bf16 %v1174, %v1174
    %1177 = vrot.lane.b32.xlu0 %v1175, 32
    %v1178 = vpop.permute.xlu0 %1177
    %1180 = vst.msk [vmem:[%s547] sm:$0xf] %vm212, %v1178
    %v1181 = vld [vmem:[%s549] sm:$0xff]
    %v1182 = vunpack.c.l.b16 %v1175
    %v1183 = vpack.c.b16 %v1182, %v1182
    %1184 = vrot.lane.b32.xlu0 %v1183, 32
    %v1185 = vpop.permute.xlu0 %1184
    %v1187 = vsel %vm152, %v1185, 0
    %1189 = vmatpush.bf16.msra.mxu0 0
    %1190 = vmatpush.bf16.msra.mxu0 0
    %1191 = vmatpush.bf16.msra.mxu0 0
    %1192 = vmatpush.bf16.msra.mxu0 0
    %1193 = vmatpush.bf16.msra.mxu0 0
    %1194 = vmatpush.bf16.msra.mxu0 0
    %1195 = vmatpush.bf16.msra.mxu0 %v796
    %1196 = vmatpush.bf16.msra.mxu0 %v795
    %1197 = vmatmul.bf16.gmra.mxu0 %v1187
    %v1198 = vpop.f32.mrf.mxu0
    %v1199 = vadd.f32 0.0, %v1198
    %v1200 = vpop.f32.mrf.mxu0
    %1201 = vdwg.mxu0
    %v1202 = vadd.f32 %v1181, %v1199
    %v1203 = vxor.u32 %v1202, 2147483648
    %v1204 = vmul.f32 %v1203, 1.442695
    %v1205 = vpow.pop %v1204
    %v1206 = vadd.f32 %v1205, 1.0
    %v1207 = vrcp.pop %v1206
    %v1208 = vmul.f32 %v1206, %v1207
    %v1209 = vsub.f32 1.0, %v1208
    %v1210 = vmul.f32 %v1207, %v1209
    %v1211 = vadd.f32 %v1207, %v1210
    %vm1212 = vweird.f32 %v1206
    %vm1213 = vweird.f32 %v1207
    %vm1214 = vmor %vm1212, %vm1213
    %v1215 = vsel %vm1214, %v1207, %v1211
    %v1216 = vand.u32 2147483647, %v1206
    %vm1217 = vcmp.eq.f32.partialorder %v1216, 8.507059e+37
    %v1218 = vand.u32 %v1206, 2147483648
    %v1219 = vor.u32 1.1754944e-38, %v1218
    %v1220 = vsel %vm1217, %v1219, %v1215
    %v1221 = vmul.f32 1.0, %v1220
    %v1222 = vtanh.pop %v1202
    %v1223 = vmul.f32 %v1221, %v1168
    %1225 = vrot.lane.b32.xlu0 %v1222, 64
    %v1226 = vpop.permute.xlu0 %1225
    %v1228 = vmul.f32 %v1221, %v1226
    %1230 = vrot.lane.b32.xlu0 %v1228, 32
    %v1231 = vpop.permute.xlu0 %1230
    %v1233 = vadd.f32 %v1223, %v1231
    %v1234 = vtanh.pop %v1233
    %1236 = vrot.lane.b32.xlu0 %v1234, 64
    %v1237 = vpop.permute.xlu0 %1236
    %v1239 = vmul.f32 %v1221, %v1237
    %v1240 = vpack.c.bf16 %v1239, %v1239
    %1242 = vrot.lane.b32.xlu0 %v1240, 32
    %v1243 = vpop.permute.xlu0 %1242
    %1245 = vst.msk [vmem:[%s614] sm:$0xf] %vm212, %v1243
    %v1246 = vld [vmem:[%s616] sm:$0xff]
    %v1247 = vunpack.c.l.b16 %v1240
    %v1248 = vpack.c.b16 %v1247, %v1247
    %1249 = vrot.lane.b32.xlu0 %v1248, 32
    %v1250 = vpop.permute.xlu0 %1249
    %v1252 = vsel %vm152, %v1250, 0
    %1254 = vmatpush.bf16.msra.mxu0 0
    %1255 = vmatpush.bf16.msra.mxu0 0
    %1256 = vmatpush.bf16.msra.mxu0 0
    %1257 = vmatpush.bf16.msra.mxu0 0
    %1258 = vmatpush.bf16.msra.mxu0 0
    %1259 = vmatpush.bf16.msra.mxu0 0
    %1260 = vmatpush.bf16.msra.mxu0 %v796
    %1261 = vmatpush.bf16.msra.mxu0 %v795
    %1262 = vmatmul.bf16.gmra.mxu0 %v1252
    %v1263 = vpop.f32.mrf.mxu0
    %v1264 = vadd.f32 0.0, %v1263
    %v1265 = vpop.f32.mrf.mxu0
    %1266 = vdwg.mxu0
    %v1267 = vadd.f32 %v1246, %v1264
    %v1268 = vxor.u32 %v1267, 2147483648
    %v1269 = vmul.f32 %v1268, 1.442695
    %v1270 = vpow.pop %v1269
    %v1271 = vadd.f32 %v1270, 1.0
    %v1272 = vrcp.pop %v1271
    %v1273 = vmul.f32 %v1271, %v1272
    %v1274 = vsub.f32 1.0, %v1273
    %v1275 = vmul.f32 %v1272, %v1274
    %v1276 = vadd.f32 %v1272, %v1275
    %vm1277 = vweird.f32 %v1271
    %vm1278 = vweird.f32 %v1272
    %vm1279 = vmor %vm1277, %vm1278
    %v1280 = vsel %vm1279, %v1272, %v1276
    %v1281 = vand.u32 2147483647, %v1271
    %vm1282 = vcmp.eq.f32.partialorder %v1281, 8.507059e+37
    %v1283 = vand.u32 %v1271, 2147483648
    %v1284 = vor.u32 1.1754944e-38, %v1283
    %v1285 = vsel %vm1282, %v1284, %v1280
    %v1286 = vmul.f32 1.0, %v1285
    %v1287 = vtanh.pop %v1267
    %v1288 = vmul.f32 %v1286, %v1233
    %1290 = vrot.lane.b32.xlu0 %v1287, 64
    %v1291 = vpop.permute.xlu0 %1290
    %v1293 = vmul.f32 %v1286, %v1291
    %1295 = vrot.lane.b32.xlu0 %v1293, 32
    %v1296 = vpop.permute.xlu0 %1295
    %v1298 = vadd.f32 %v1288, %v1296
    %v1299 = vtanh.pop %v1298
    %1301 = vrot.lane.b32.xlu0 %v1299, 64
    %v1302 = vpop.permute.xlu0 %1301
    %v1304 = vmul.f32 %v1286, %v1302
    %v1305 = vpack.c.bf16 %v1304, %v1304
    %1307 = vrot.lane.b32.xlu0 %v1305, 32
    %v1308 = vpop.permute.xlu0 %1307
    %1310 = vst.msk [vmem:[%s681] sm:$0xf] %vm212, %v1308
    %s1311 = scalar_lea.vmem %s4, 32
    %v1312 = vld [vmem:[%s1311] sm:$0xf]
    %v1313 = vld [vmem:[%s1311 + $0x4] sm:$0xf]
    %v1314 = vld [vmem:[%s1311 + $0x8] sm:$0xf]
    %v1315 = vld [vmem:[%s1311 + $0xc] sm:$0xf]
    %s1316 = scalar_lea.vmem %s5, 2
    %v1317 = vld [vmem:[%s1316] sm:$0x1]
    %s1318 = scalar_lea.vmem [#allocation4], 16
    %v1319 = vld [vmem:[%s1318] sm:$0xf]
    %v1320 = vld [vmem:[%s1318 + $0x4] sm:$0xf]
    %v1321 = vld [vmem:[%s1318 + $0x8] sm:$0xf]
    %v1322 = vld [vmem:[%s1318 + $0xc] sm:$0xf]
    %v1323 = vld [vmem:[#allocation2] sm:$0xf]
    %v1324 = vld [vmem:[#allocation2 + $0x4] sm:$0xf]
    %v1325 = vld [vmem:[#allocation2 + $0x8] sm:$0xf]
    %v1326 = vld [vmem:[#allocation2 + $0xc] sm:$0xf]
    %v1327 = vld [vmem:[#allocation2 + $0x10] sm:$0xf]
    %v1328 = vld [vmem:[#allocation2 + $0x14] sm:$0xf]
    %v1329 = vld [vmem:[#allocation2 + $0x18] sm:$0xf]
    %v1330 = vld [vmem:[#allocation2 + $0x1c] sm:$0xf]
    %v1332 = vperm.slane %v1317, 0
    %v1342 = vunpack.c.l.b16 %v1323
    %v1343 = vunpack.c.l.b16 %v1324
    %v1344 = vunpack.c.l.b16 %v1325
    %v1345 = vunpack.c.l.b16 %v1326
    %v1346 = vunpack.c.l.b16 %v1327
    %v1347 = vunpack.c.l.b16 %v1328
    %v1348 = vunpack.c.l.b16 %v1329
    %v1349 = vunpack.c.l.b16 %v1330
    %v1350 = vpack.c.b16 %v1343, %v1342
    %v1351 = vpack.c.b16 %v1345, %v1344
    %v1352 = vpack.c.b16 %v1347, %v1346
    %v1353 = vpack.c.b16 %v1349, %v1348
    %v1358 = vunpack.c.l.b16 %v1319
    %v1359 = vunpack.c.l.b16 %v1320
    %v1360 = vunpack.c.l.b16 %v1321
    %v1361 = vunpack.c.l.b16 %v1322
    %v1362 = vpack.c.b16 %v1359, %v1358
    %v1363 = vpack.c.b16 %v1361, %v1360
    %v1367 = vsel %vm152, %v1350, 0
    %v1370 = vsel %vm152, %v1351, 0
    %v1373 = vsel %vm152, %v1352, 0
    %v1376 = vsel %vm152, %v1353, 0
    %1378 = vmatpush.bf16.msra.mxu0 0
    %1379 = vmatpush.bf16.msra.mxu0 0
    %1380 = vmatpush.bf16.msra.mxu0 0
    %1381 = vmatpush.bf16.msra.mxu0 0
    %1382 = vmatpush.bf16.msra.mxu0 0
    %1383 = vmatpush.bf16.msra.mxu0 0
    %1384 = vmatpush.bf16.msra.mxu0 %v1363
    %1385 = vmatpush.bf16.msra.mxu0 %v1362
    %1386 = vmatmul.bf16.gmra.mxu0 %v1367
    %v1387 = vpop.f32.mrf.mxu0
    %v1388 = vadd.f32 %v1332, %v1387
    %v1389 = vpop.f32.mrf.mxu0
    %v1390 = vadd.f32 %v1332, %v1389
    %1391 = vmatmul.bf16.gmra.mxu0 %v1370
    %v1392 = vpop.f32.mrf.mxu0
    %v1393 = vadd.f32 %v1332, %v1392
    %v1394 = vpop.f32.mrf.mxu0
    %v1395 = vadd.f32 %v1332, %v1394
    %1396 = vmatmul.bf16.gmra.mxu0 %v1373
    %v1397 = vpop.f32.mrf.mxu0
    %v1398 = vadd.f32 %v1332, %v1397
    %v1399 = vpop.f32.mrf.mxu0
    %v1400 = vadd.f32 %v1332, %v1399
    %1401 = vmatmul.bf16.gmra.mxu0 %v1376
    %v1402 = vpop.f32.mrf.mxu0
    %v1403 = vadd.f32 %v1332, %v1402
    %v1404 = vpop.f32.mrf.mxu0
    %v1405 = vadd.f32 %v1332, %v1404
    %1406 = vdwg.mxu0
    %1407 = vst [vmem:[#allocation3] sm:$0xff] %v1388
    %1408 = vst [vmem:[#allocation3 + $0x8] sm:$0xff] %v1390
    %1409 = vst [vmem:[#allocation3 + $0x10] sm:$0xff] %v1393
    %1410 = vst [vmem:[#allocation3 + $0x18] sm:$0xff] %v1395
    %1411 = vst [vmem:[#allocation3 + $0x20] sm:$0xff] %v1398
    %1412 = vst [vmem:[#allocation3 + $0x28] sm:$0xff] %v1400
    %1413 = vst [vmem:[#allocation3 + $0x30] sm:$0xff] %v1403
    %1414 = vst [vmem:[#allocation3 + $0x38] sm:$0xff] %v1405
    %v1415 = vld [vmem:[#allocation3] sm:$0xff]
    %v1420 = vunpack.c.l.b16 %v1312
    %v1421 = vunpack.c.l.b16 %v1313
    %v1422 = vunpack.c.l.b16 %v1314
    %v1423 = vunpack.c.l.b16 %v1315
    %v1424 = vpack.c.b16 %v1421, %v1420
    %v1425 = vpack.c.b16 %v1423, %v1422
    %1428 = vmatpush.bf16.msra.mxu0 0
    %1429 = vmatpush.bf16.msra.mxu0 0
    %1430 = vmatpush.bf16.msra.mxu0 0
    %1431 = vmatpush.bf16.msra.mxu0 0
    %1432 = vmatpush.bf16.msra.mxu0 0
    %1433 = vmatpush.bf16.msra.mxu0 0
    %1434 = vmatpush.bf16.msra.mxu0 %v1425
    %1435 = vmatpush.bf16.msra.mxu0 %v1424
    %1436 = vmatmul.bf16.gmra.mxu0 %v154
    %v1437 = vpop.f32.mrf.mxu0
    %v1438 = vadd.f32 0.0, %v1437
    %v1439 = vpop.f32.mrf.mxu0
    %1440 = vdwg.mxu0
    %v1441 = vadd.f32 %v1415, %v1438
    %v1442 = vxor.u32 %v1441, 2147483648
    %v1443 = vmul.f32 %v1442, 1.442695
    %v1444 = vpow.pop %v1443
    %v1445 = vadd.f32 %v1444, 1.0
    %v1446 = vrcp.pop %v1445
    %v1447 = vmul.f32 %v1445, %v1446
    %v1448 = vsub.f32 1.0, %v1447
    %v1449 = vmul.f32 %v1446, %v1448
    %v1450 = vadd.f32 %v1446, %v1449
    %vm1451 = vweird.f32 %v1445
    %vm1452 = vweird.f32 %v1446
    %vm1453 = vmor %vm1451, %vm1452
    %v1454 = vsel %vm1453, %v1446, %v1450
    %v1455 = vand.u32 2147483647, %v1445
    %vm1456 = vcmp.eq.f32.partialorder %v1455, 8.507059e+37
    %v1457 = vand.u32 %v1445, 2147483648
    %v1458 = vor.u32 1.1754944e-38, %v1457
    %v1459 = vsel %vm1456, %v1458, %v1454
    %v1460 = vmul.f32 1.0, %v1459
    %v1461 = vtanh.pop %v1441
    %v1462 = vmul.f32 %v1460, 0.0
    %1464 = vrot.lane.b32.xlu0 %v1461, 64
    %v1465 = vpop.permute.xlu0 %1464
    %v1467 = vmul.f32 %v1460, %v1465
    %1469 = vrot.lane.b32.xlu0 %v1467, 32
    %v1470 = vpop.permute.xlu0 %1469
    %v1472 = vadd.f32 %v1462, %v1470
    %v1473 = vtanh.pop %v1472
    %1475 = vrot.lane.b32.xlu0 %v1473, 64
    %v1476 = vpop.permute.xlu0 %1475
    %v1478 = vmul.f32 %v1460, %v1476
    %vm1479 = vcmp.gt.f32.partialorder %v47, 0.0
    %v1480 = vsel %vm1479, 1, 0
    %v1481 = vcvt.s32.f32 %v1480
    %1483 = vset.pattern.permute.xlu0 0
    %1484 = vperm.xlu0 %1483, %v1481
    %v1485 = vpop.permute.xlu0 %1484
    %v1487 = vmul.f32 %v1485, %v1478
    %v1488 = vadd.f32 %v1487, 0.0
    %v1489 = vld [vmem:[%s214] sm:$0xff]
    %v1490 = vpack.c.bf16 %v1478, %v1478
    %1492 = vrot.lane.b32.xlu0 %v1490, 32
    %v1493 = vpop.permute.xlu0 %1492
    %v1495 = vsel %vm152, %v1493, 0
    %1497 = vmatpush.bf16.msra.mxu0 0
    %1498 = vmatpush.bf16.msra.mxu0 0
    %1499 = vmatpush.bf16.msra.mxu0 0
    %1500 = vmatpush.bf16.msra.mxu0 0
    %1501 = vmatpush.bf16.msra.mxu0 0
    %1502 = vmatpush.bf16.msra.mxu0 0
    %1503 = vmatpush.bf16.msra.mxu0 %v1425
    %1504 = vmatpush.bf16.msra.mxu0 %v1424
    %1505 = vmatmul.bf16.gmra.mxu0 %v1495
    %v1506 = vpop.f32.mrf.mxu0
    %v1507 = vadd.f32 0.0, %v1506
    %v1508 = vpop.f32.mrf.mxu0
    %1509 = vdwg.mxu0
    %v1510 = vadd.f32 %v1489, %v1507
    %v1511 = vxor.u32 %v1510, 2147483648
    %v1512 = vmul.f32 %v1511, 1.442695
    %v1513 = vpow.pop %v1512
    %v1514 = vadd.f32 %v1513, 1.0
    %v1515 = vrcp.pop %v1514
    %v1516 = vmul.f32 %v1514, %v1515
    %v1517 = vsub.f32 1.0, %v1516
    %v1518 = vmul.f32 %v1515, %v1517
    %v1519 = vadd.f32 %v1515, %v1518
    %vm1520 = vweird.f32 %v1514
    %vm1521 = vweird.f32 %v1515
    %vm1522 = vmor %vm1520, %vm1521
    %v1523 = vsel %vm1522, %v1515, %v1519
    %v1524 = vand.u32 2147483647, %v1514
    %vm1525 = vcmp.eq.f32.partialorder %v1524, 8.507059e+37
    %v1526 = vand.u32 %v1514, 2147483648
    %v1527 = vor.u32 1.1754944e-38, %v1526
    %v1528 = vsel %vm1525, %v1527, %v1523
    %v1529 = vmul.f32 1.0, %v1528
    %v1530 = vtanh.pop %v1510
    %v1531 = vmul.f32 %v1529, %v1472
    %1533 = vrot.lane.b32.xlu0 %v1530, 64
    %v1534 = vpop.permute.xlu0 %1533
    %v1536 = vmul.f32 %v1529, %v1534
    %1538 = vrot.lane.b32.xlu0 %v1536, 32
    %v1539 = vpop.permute.xlu0 %1538
    %v1541 = vadd.f32 %v1531, %v1539
    %v1542 = vtanh.pop %v1541
    %1544 = vrot.lane.b32.xlu0 %v1542, 64
    %v1545 = vpop.permute.xlu0 %1544
    %v1547 = vmul.f32 %v1529, %v1545
    %vm1548 = vcmp.gt.f32.partialorder %v47, 1.0
    %v1549 = vsel %vm1548, 1, 0
    %v1550 = vcvt.s32.f32 %v1549
    %1552 = vset.pattern.permute.xlu0 0
    %1553 = vperm.xlu0 %1552, %v1550
    %v1554 = vpop.permute.xlu0 %1553
    %v1556 = vmul.f32 %v1554, %v1547
    %v1557 = vadd.f32 %v1488, %v1556
    %v1558 = vld [vmem:[%s281] sm:$0xff]
    %v1559 = vpack.c.bf16 %v1547, %v1547
    %1561 = vrot.lane.b32.xlu0 %v1559, 32
    %v1562 = vpop.permute.xlu0 %1561
    %v1564 = vsel %vm152, %v1562, 0
    %1566 = vmatpush.bf16.msra.mxu0 0
    %1567 = vmatpush.bf16.msra.mxu0 0
    %1568 = vmatpush.bf16.msra.mxu0 0
    %1569 = vmatpush.bf16.msra.mxu0 0
    %1570 = vmatpush.bf16.msra.mxu0 0
    %1571 = vmatpush.bf16.msra.mxu0 0
    %1572 = vmatpush.bf16.msra.mxu0 %v1425
    %1573 = vmatpush.bf16.msra.mxu0 %v1424
    %1574 = vmatmul.bf16.gmra.mxu0 %v1564
    %v1575 = vpop.f32.mrf.mxu0
    %v1576 = vadd.f32 0.0, %v1575
    %v1577 = vpop.f32.mrf.mxu0
    %1578 = vdwg.mxu0
    %v1579 = vadd.f32 %v1558, %v1576
    %v1580 = vxor.u32 %v1579, 2147483648
    %v1581 = vmul.f32 %v1580, 1.442695
    %v1582 = vpow.pop %v1581
    %v1583 = vadd.f32 %v1582, 1.0
    %v1584 = vrcp.pop %v1583
    %v1585 = vmul.f32 %v1583, %v1584
    %v1586 = vsub.f32 1.0, %v1585
    %v1587 = vmul.f32 %v1584, %v1586
    %v1588 = vadd.f32 %v1584, %v1587
    %vm1589 = vweird.f32 %v1583
    %vm1590 = vweird.f32 %v1584
    %vm1591 = vmor %vm1589, %vm1590
    %v1592 = vsel %vm1591, %v1584, %v1588
    %v1593 = vand.u32 2147483647, %v1583
    %vm1594 = vcmp.eq.f32.partialorder %v1593, 8.507059e+37
    %v1595 = vand.u32 %v1583, 2147483648
    %v1596 = vor.u32 1.1754944e-38, %v1595
    %v1597 = vsel %vm1594, %v1596, %v1592
    %v1598 = vmul.f32 1.0, %v1597
    %v1599 = vtanh.pop %v1579
    %v1600 = vmul.f32 %v1598, %v1541
    %1602 = vrot.lane.b32.xlu0 %v1599, 64
    %v1603 = vpop.permute.xlu0 %1602
    %v1605 = vmul.f32 %v1598, %v1603
    %1607 = vrot.lane.b32.xlu0 %v1605, 32
    %v1608 = vpop.permute.xlu0 %1607
    %v1610 = vadd.f32 %v1600, %v1608
    %v1611 = vtanh.pop %v1610
    %1613 = vrot.lane.b32.xlu0 %v1611, 64
    %v1614 = vpop.permute.xlu0 %1613
    %v1616 = vmul.f32 %v1598, %v1614
    %vm1617 = vcmp.gt.f32.partialorder %v47, 2.0
    %v1618 = vsel %vm1617, 1, 0
    %v1619 = vcvt.s32.f32 %v1618
    %1621 = vset.pattern.permute.xlu0 0
    %1622 = vperm.xlu0 %1621, %v1619
    %v1623 = vpop.permute.xlu0 %1622
    %v1625 = vmul.f32 %v1623, %v1616
    %v1626 = vadd.f32 %v1557, %v1625
    %v1627 = vld [vmem:[%s348] sm:$0xff]
    %v1628 = vpack.c.bf16 %v1616, %v1616
    %1630 = vrot.lane.b32.xlu0 %v1628, 32
    %v1631 = vpop.permute.xlu0 %1630
    %v1633 = vsel %vm152, %v1631, 0
    %1635 = vmatpush.bf16.msra.mxu0 0
    %1636 = vmatpush.bf16.msra.mxu0 0
    %1637 = vmatpush.bf16.msra.mxu0 0
    %1638 = vmatpush.bf16.msra.mxu0 0
    %1639 = vmatpush.bf16.msra.mxu0 0
    %1640 = vmatpush.bf16.msra.mxu0 0
    %1641 = vmatpush.bf16.msra.mxu0 %v1425
    %1642 = vmatpush.bf16.msra.mxu0 %v1424
    %1643 = vmatmul.bf16.gmra.mxu0 %v1633
    %v1644 = vpop.f32.mrf.mxu0
    %v1645 = vadd.f32 0.0, %v1644
    %v1646 = vpop.f32.mrf.mxu0
    %1647 = vdwg.mxu0
    %v1648 = vadd.f32 %v1627, %v1645
    %v1649 = vxor.u32 %v1648, 2147483648
    %v1650 = vmul.f32 %v1649, 1.442695
    %v1651 = vpow.pop %v1650
    %v1652 = vadd.f32 %v1651, 1.0
    %v1653 = vrcp.pop %v1652
    %v1654 = vmul.f32 %v1652, %v1653
    %v1655 = vsub.f32 1.0, %v1654
    %v1656 = vmul.f32 %v1653, %v1655
    %v1657 = vadd.f32 %v1653, %v1656
    %vm1658 = vweird.f32 %v1652
    %vm1659 = vweird.f32 %v1653
    %vm1660 = vmor %vm1658, %vm1659
    %v1661 = vsel %vm1660, %v1653, %v1657
    %v1662 = vand.u32 2147483647, %v1652
    %vm1663 = vcmp.eq.f32.partialorder %v1662, 8.507059e+37
    %v1664 = vand.u32 %v1652, 2147483648
    %v1665 = vor.u32 1.1754944e-38, %v1664
    %v1666 = vsel %vm1663, %v1665, %v1661
    %v1667 = vmul.f32 1.0, %v1666
    %v1668 = vtanh.pop %v1648
    %v1669 = vmul.f32 %v1667, %v1610
    %1671 = vrot.lane.b32.xlu0 %v1668, 64
    %v1672 = vpop.permute.xlu0 %1671
    %v1674 = vmul.f32 %v1667, %v1672
    %1676 = vrot.lane.b32.xlu0 %v1674, 32
    %v1677 = vpop.permute.xlu0 %1676
    %v1679 = vadd.f32 %v1669, %v1677
    %v1680 = vtanh.pop %v1679
    %1682 = vrot.lane.b32.xlu0 %v1680, 64
    %v1683 = vpop.permute.xlu0 %1682
    %v1685 = vmul.f32 %v1667, %v1683
    %vm1686 = vcmp.gt.f32.partialorder %v47, 3.0
    %v1687 = vsel %vm1686, 1, 0
    %v1688 = vcvt.s32.f32 %v1687
    %1690 = vset.pattern.permute.xlu0 0
    %1691 = vperm.xlu0 %1690, %v1688
    %v1692 = vpop.permute.xlu0 %1691
    %v1694 = vmul.f32 %v1692, %v1685
    %v1695 = vadd.f32 %v1626, %v1694
    %v1696 = vld [vmem:[%s415] sm:$0xff]
    %v1697 = vpack.c.bf16 %v1685, %v1685
    %1699 = vrot.lane.b32.xlu0 %v1697, 32
    %v1700 = vpop.permute.xlu0 %1699
    %v1702 = vsel %vm152, %v1700, 0
    %1704 = vmatpush.bf16.msra.mxu0 0
    %1705 = vmatpush.bf16.msra.mxu0 0
    %1706 = vmatpush.bf16.msra.mxu0 0
    %1707 = vmatpush.bf16.msra.mxu0 0
    %1708 = vmatpush.bf16.msra.mxu0 0
    %1709 = vmatpush.bf16.msra.mxu0 0
    %1710 = vmatpush.bf16.msra.mxu0 %v1425
    %1711 = vmatpush.bf16.msra.mxu0 %v1424
    %1712 = vmatmul.bf16.gmra.mxu0 %v1702
    %v1713 = vpop.f32.mrf.mxu0
    %v1714 = vadd.f32 0.0, %v1713
    %v1715 = vpop.f32.mrf.mxu0
    %1716 = vdwg.mxu0
    %v1717 = vadd.f32 %v1696, %v1714
    %v1718 = vxor.u32 %v1717, 2147483648
    %v1719 = vmul.f32 %v1718, 1.442695
    %v1720 = vpow.pop %v1719
    %v1721 = vadd.f32 %v1720, 1.0
    %v1722 = vrcp.pop %v1721
    %v1723 = vmul.f32 %v1721, %v1722
    %v1724 = vsub.f32 1.0, %v1723
    %v1725 = vmul.f32 %v1722, %v1724
    %v1726 = vadd.f32 %v1722, %v1725
    %vm1727 = vweird.f32 %v1721
    %vm1728 = vweird.f32 %v1722
    %vm1729 = vmor %vm1727, %vm1728
    %v1730 = vsel %vm1729, %v1722, %v1726
    %v1731 = vand.u32 2147483647, %v1721
    %vm1732 = vcmp.eq.f32.partialorder %v1731, 8.507059e+37
    %v1733 = vand.u32 %v1721, 2147483648
    %v1734 = vor.u32 1.1754944e-38, %v1733
    %v1735 = vsel %vm1732, %v1734, %v1730
    %v1736 = vmul.f32 1.0, %v1735
    %v1737 = vtanh.pop %v1717
    %v1738 = vmul.f32 %v1736, %v1679
    %1740 = vrot.lane.b32.xlu0 %v1737, 64
    %v1741 = vpop.permute.xlu0 %1740
    %v1743 = vmul.f32 %v1736, %v1741
    %1745 = vrot.lane.b32.xlu0 %v1743, 32
    %v1746 = vpop.permute.xlu0 %1745
    %v1748 = vadd.f32 %v1738, %v1746
    %v1749 = vtanh.pop %v1748
    %1751 = vrot.lane.b32.xlu0 %v1749, 64
    %v1752 = vpop.permute.xlu0 %1751
    %v1754 = vmul.f32 %v1736, %v1752
    %vm1755 = vcmp.gt.f32.partialorder %v47, 4.0
    %v1756 = vsel %vm1755, 1, 0
    %v1757 = vcvt.s32.f32 %v1756
    %1759 = vset.pattern.permute.xlu0 0
    %1760 = vperm.xlu0 %1759, %v1757
    %v1761 = vpop.permute.xlu0 %1760
    %v1763 = vmul.f32 %v1761, %v1754
    %v1764 = vadd.f32 %v1695, %v1763
    %v1765 = vld [vmem:[%s482] sm:$0xff]
    %v1766 = vpack.c.bf16 %v1754, %v1754
    %1768 = vrot.lane.b32.xlu0 %v1766, 32
    %v1769 = vpop.permute.xlu0 %1768
    %v1771 = vsel %vm152, %v1769, 0
    %1773 = vmatpush.bf16.msra.mxu0 0
    %1774 = vmatpush.bf16.msra.mxu0 0
    %1775 = vmatpush.bf16.msra.mxu0 0
    %1776 = vmatpush.bf16.msra.mxu0 0
    %1777 = vmatpush.bf16.msra.mxu0 0
    %1778 = vmatpush.bf16.msra.mxu0 0
    %1779 = vmatpush.bf16.msra.mxu0 %v1425
    %1780 = vmatpush.bf16.msra.mxu0 %v1424
    %1781 = vmatmul.bf16.gmra.mxu0 %v1771
    %v1782 = vpop.f32.mrf.mxu0
    %v1783 = vadd.f32 0.0, %v1782
    %v1784 = vpop.f32.mrf.mxu0
    %1785 = vdwg.mxu0
    %v1786 = vadd.f32 %v1765, %v1783
    %v1787 = vxor.u32 %v1786, 2147483648
    %v1788 = vmul.f32 %v1787, 1.442695
    %v1789 = vpow.pop %v1788
    %v1790 = vadd.f32 %v1789, 1.0
    %v1791 = vrcp.pop %v1790
    %v1792 = vmul.f32 %v1790, %v1791
    %v1793 = vsub.f32 1.0, %v1792
    %v1794 = vmul.f32 %v1791, %v1793
    %v1795 = vadd.f32 %v1791, %v1794
    %vm1796 = vweird.f32 %v1790
    %vm1797 = vweird.f32 %v1791
    %vm1798 = vmor %vm1796, %vm1797
    %v1799 = vsel %vm1798, %v1791, %v1795
    %v1800 = vand.u32 2147483647, %v1790
    %vm1801 = vcmp.eq.f32.partialorder %v1800, 8.507059e+37
    %v1802 = vand.u32 %v1790, 2147483648
    %v1803 = vor.u32 1.1754944e-38, %v1802
    %v1804 = vsel %vm1801, %v1803, %v1799
    %v1805 = vmul.f32 1.0, %v1804
    %v1806 = vtanh.pop %v1786
    %v1807 = vmul.f32 %v1805, %v1748
    %1809 = vrot.lane.b32.xlu0 %v1806, 64
    %v1810 = vpop.permute.xlu0 %1809
    %v1812 = vmul.f32 %v1805, %v1810
    %1814 = vrot.lane.b32.xlu0 %v1812, 32
    %v1815 = vpop.permute.xlu0 %1814
    %v1817 = vadd.f32 %v1807, %v1815
    %v1818 = vtanh.pop %v1817
    %1820 = vrot.lane.b32.xlu0 %v1818, 64
    %v1821 = vpop.permute.xlu0 %1820
    %v1823 = vmul.f32 %v1805, %v1821
    %vm1824 = vcmp.gt.f32.partialorder %v47, 5.0
    %v1825 = vsel %vm1824, 1, 0
    %v1826 = vcvt.s32.f32 %v1825
    %1828 = vset.pattern.permute.xlu0 0
    %1829 = vperm.xlu0 %1828, %v1826
    %v1830 = vpop.permute.xlu0 %1829
    %v1832 = vmul.f32 %v1830, %v1823
    %v1833 = vadd.f32 %v1764, %v1832
    %v1834 = vld [vmem:[%s549] sm:$0xff]
    %v1835 = vpack.c.bf16 %v1823, %v1823
    %1837 = vrot.lane.b32.xlu0 %v1835, 32
    %v1838 = vpop.permute.xlu0 %1837
    %v1840 = vsel %vm152, %v1838, 0
    %1842 = vmatpush.bf16.msra.mxu0 0
    %1843 = vmatpush.bf16.msra.mxu0 0
    %1844 = vmatpush.bf16.msra.mxu0 0
    %1845 = vmatpush.bf16.msra.mxu0 0
    %1846 = vmatpush.bf16.msra.mxu0 0
    %1847 = vmatpush.bf16.msra.mxu0 0
    %1848 = vmatpush.bf16.msra.mxu0 %v1425
    %1849 = vmatpush.bf16.msra.mxu0 %v1424
    %1850 = vmatmul.bf16.gmra.mxu0 %v1840
    %v1851 = vpop.f32.mrf.mxu0
    %v1852 = vadd.f32 0.0, %v1851
    %v1853 = vpop.f32.mrf.mxu0
    %1854 = vdwg.mxu0
    %v1855 = vadd.f32 %v1834, %v1852
    %v1856 = vxor.u32 %v1855, 2147483648
    %v1857 = vmul.f32 %v1856, 1.442695
    %v1858 = vpow.pop %v1857
    %v1859 = vadd.f32 %v1858, 1.0
    %v1860 = vrcp.pop %v1859
    %v1861 = vmul.f32 %v1859, %v1860
    %v1862 = vsub.f32 1.0, %v1861
    %v1863 = vmul.f32 %v1860, %v1862
    %v1864 = vadd.f32 %v1860, %v1863
    %vm1865 = vweird.f32 %v1859
    %vm1866 = vweird.f32 %v1860
    %vm1867 = vmor %vm1865, %vm1866
    %v1868 = vsel %vm1867, %v1860, %v1864
    %v1869 = vand.u32 2147483647, %v1859
    %vm1870 = vcmp.eq.f32.partialorder %v1869, 8.507059e+37
    %v1871 = vand.u32 %v1859, 2147483648
    %v1872 = vor.u32 1.1754944e-38, %v1871
    %v1873 = vsel %vm1870, %v1872, %v1868
    %v1874 = vmul.f32 1.0, %v1873
    %v1875 = vtanh.pop %v1855
    %v1876 = vmul.f32 %v1874, %v1817
    %1878 = vrot.lane.b32.xlu0 %v1875, 64
    %v1879 = vpop.permute.xlu0 %1878
    %v1881 = vmul.f32 %v1874, %v1879
    %1883 = vrot.lane.b32.xlu0 %v1881, 32
    %v1884 = vpop.permute.xlu0 %1883
    %v1886 = vadd.f32 %v1876, %v1884
    %v1887 = vtanh.pop %v1886
    %1889 = vrot.lane.b32.xlu0 %v1887, 64
    %v1890 = vpop.permute.xlu0 %1889
    %v1892 = vmul.f32 %v1874, %v1890
    %vm1893 = vcmp.gt.f32.partialorder %v47, 6.0
    %v1894 = vsel %vm1893, 1, 0
    %v1895 = vcvt.s32.f32 %v1894
    %1897 = vset.pattern.permute.xlu0 0
    %1898 = vperm.xlu0 %1897, %v1895
    %v1899 = vpop.permute.xlu0 %1898
    %v1901 = vmul.f32 %v1899, %v1892
    %v1902 = vadd.f32 %v1833, %v1901
    %v1903 = vld [vmem:[%s616] sm:$0xff]
    %v1904 = vpack.c.bf16 %v1892, %v1892
    %1906 = vrot.lane.b32.xlu0 %v1904, 32
    %v1907 = vpop.permute.xlu0 %1906
    %v1909 = vsel %vm152, %v1907, 0
    %1911 = vmatpush.bf16.msra.mxu0 0
    %1912 = vmatpush.bf16.msra.mxu0 0
    %1913 = vmatpush.bf16.msra.mxu0 0
    %1914 = vmatpush.bf16.msra.mxu0 0
    %1915 = vmatpush.bf16.msra.mxu0 0
    %1916 = vmatpush.bf16.msra.mxu0 0
    %1917 = vmatpush.bf16.msra.mxu0 %v1425
    %1918 = vmatpush.bf16.msra.mxu0 %v1424
    %1919 = vmatmul.bf16.gmra.mxu0 %v1909
    %v1920 = vpop.f32.mrf.mxu0
    %v1921 = vadd.f32 0.0, %v1920
    %v1922 = vpop.f32.mrf.mxu0
    %1923 = vdwg.mxu0
    %v1924 = vadd.f32 %v1903, %v1921
    %v1925 = vxor.u32 %v1924, 2147483648
    %v1926 = vmul.f32 %v1925, 1.442695
    %v1927 = vpow.pop %v1926
    %v1928 = vadd.f32 %v1927, 1.0
    %v1929 = vrcp.pop %v1928
    %v1930 = vmul.f32 %v1928, %v1929
    %v1931 = vsub.f32 1.0, %v1930
    %v1932 = vmul.f32 %v1929, %v1931
    %v1933 = vadd.f32 %v1929, %v1932
    %vm1934 = vweird.f32 %v1928
    %vm1935 = vweird.f32 %v1929
    %vm1936 = vmor %vm1934, %vm1935
    %v1937 = vsel %vm1936, %v1929, %v1933
    %v1938 = vand.u32 2147483647, %v1928
    %vm1939 = vcmp.eq.f32.partialorder %v1938, 8.507059e+37
    %v1940 = vand.u32 %v1928, 2147483648
    %v1941 = vor.u32 1.1754944e-38, %v1940
    %v1942 = vsel %vm1939, %v1941, %v1937
    %v1943 = vmul.f32 1.0, %v1942
    %v1944 = vtanh.pop %v1924
    %v1945 = vmul.f32 %v1943, %v1886
    %1947 = vrot.lane.b32.xlu0 %v1944, 64
    %v1948 = vpop.permute.xlu0 %1947
    %v1950 = vmul.f32 %v1943, %v1948
    %1952 = vrot.lane.b32.xlu0 %v1950, 32
    %v1953 = vpop.permute.xlu0 %1952
    %v1955 = vadd.f32 %v1945, %v1953
    %v1956 = vtanh.pop %v1955
    %1958 = vrot.lane.b32.xlu0 %v1956, 64
    %v1959 = vpop.permute.xlu0 %1958
    %v1961 = vmul.f32 %v1943, %v1959
    %vm1962 = vcmp.gt.f32.partialorder %v47, 7.0
    %v1963 = vsel %vm1962, 1, 0
    %v1964 = vcvt.s32.f32 %v1963
    %1966 = vset.pattern.permute.xlu0 0
    %1967 = vperm.xlu0 %1966, %v1964
    %v1968 = vpop.permute.xlu0 %1967
    %v1970 = vmul.f32 %v1968, %v1961
    %v1971 = vadd.f32 %v1902, %v1970
    %v1972 = vsel %vm1479, %v47, 1.0
    %1974 = vset.pattern.permute.xlu0 0
    %1975 = vperm.xlu0 %1974, %v1972
    %v1976 = vpop.permute.xlu0 %1975
    %v1978 = vrcp.pop %v1976
    %v1979 = vmul.f32 %v1976, %v1978
    %v1980 = vsub.f32 1.0, %v1979
    %v1981 = vmul.f32 %v1978, %v1980
    %v1982 = vadd.f32 %v1978, %v1981
    %vm1983 = vweird.f32 %v1976
    %vm1984 = vweird.f32 %v1978
    %vm1985 = vmor %vm1983, %vm1984
    %v1986 = vsel %vm1985, %v1978, %v1982
    %v1987 = vand.u32 2147483647, %v1976
    %vm1988 = vcmp.eq.f32.partialorder %v1987, 8.507059e+37
    %v1989 = vand.u32 %v1976, 2147483648
    %v1990 = vor.u32 1.1754944e-38, %v1989
    %v1991 = vsel %vm1988, %v1990, %v1986
    %v1992 = vmul.f32 %v1971, %v1991
    %v1993 = vld [vmem:[%s6] sm:$0xff]
    %v1994 = vld [vmem:[%s6 + $0x8] sm:$0xff]
    %v1995 = vld [vmem:[%s6 + $0x10] sm:$0xff]
    %v1996 = vld [vmem:[%s6 + $0x18] sm:$0xff]
    %v1997 = vld [vmem:[%s7] sm:$0x1]
    %v1999 = vperm.slane %v1997, 0
    %2002 = vrot.lane.b32.xlu0 %v1992, 32
    %v2003 = vpop.permute.xlu0 %2002
    %v2004 = vsel %vm152, %v2003, 0
    %2006 = vmatpush.msra.mxu0 0.0
    %2007 = vmatpush.msra.mxu0 0.0
    %2008 = vmatpush.msra.mxu0 0.0
    %2009 = vmatpush.msra.mxu0 0.0
    %2010 = vmatpush.msra.mxu0 0.0
    %2011 = vmatpush.msra.mxu0 0.0
    %2012 = vmatpush.msra.mxu0 0.0
    %2013 = vmatpush.msra.mxu0 0.0
    %2014 = vmatpush.msra.mxu0 0.0
    %2015 = vmatpush.msra.mxu0 0.0
    %2016 = vmatpush.msra.mxu0 0.0
    %2017 = vmatpush.msra.mxu0 0.0
    %2018 = vmatpush.msra.mxu0 %v1996
    %2019 = vmatpush.msra.mxu0 %v1995
    %2020 = vmatpush.msra.mxu0 %v1994
    %2021 = vmatpush.msra.mxu0 %v1993
    %2022 = vmatmul.f32.gmra.mxu0 %v2004
    %v2023 = vpop.f32.mrf.mxu0
    %v2024 = vadd.f32 %v1999, %v2023
    %2025 = vdwg.mxu0
    %vm2026 = vcmask 39936
    %2027 = vst.msk [vmem:[#allocation7] sm:$0xff] %vm2026, %v2024
    // Predicated region
    $region38: #{tpu_custom_call.1} parent=1 // pred_check
      _
    $region39: #{tpu_custom_call.1} parent=1 // pred_check_branch
      %2029 = sbr.rel (0) target = $region41
    $region40: #{tpu_custom_call.1} parent=1 // pred_region
      %2031 = vsyncadd [#allocation6], 0
      %s2033 = sshll.u32 [#allocation7], 4
      %s2034 = int_to_ptr.vmem [resolvable:$true] %s2033
      %s2035 = sshll.u32 %s8, 4
      %s2036 = int_to_ptr.hbm [resolvable:$true] %s2035
      %2038 = dma.vmem_to_hbm [thread:$0]  %s2034, 128, %s2036, [#allocation6]
    $region41: #{tpu_custom_call.1} parent=1 // pred_fallthru
      _
    // Predicated region
    $region42: #{tpu_custom_call.1} parent=1 // pred_check
      _
    $region43: #{tpu_custom_call.1} parent=1 // pred_check_branch
      %2040 = sbr.rel (0) target = $region45
    $region44: #{tpu_custom_call.1} parent=1 // pred_region
      %2042 = dma.done [#allocation6], 128
    $region45: #{tpu_custom_call.1} parent=1 // pred_fallthru
      _
    %2043 = vsyncpa [#allocation5], 1
    %2044 = vsyncpa [#allocation6], 1

</llo_original>
